<compile_context>
chip_gen: v5e
topology: v5e:2x2
jax: 0.10.0
libtpu: 0.0.40
codegen_flags: <defaults>
</compile_context>

<pallas_src>
import math

import jax
import jax.numpy as jnp
from jax import lax
from jax.experimental import pallas as pl
from jax.experimental.pallas import tpu as pltpu


def _sigmoid_via_tanh(z):
    # sigmoid(z) == 0.5 * tanh(0.5 * z) + 0.5  (single EUP tanh, no divide)
    return 0.5 * jnp.tanh(0.5 * z) + 0.5


def _make_lstm_mlp_kernel(num_layers, T, Bp, H):
    """Full LSTM stack + ReLU-MLP head; all operands resident in VMEM.

    Sequence tensors use a flat time-major layout (T*Bp, feat) with row index
    n = t*Bp + b; Bp is a multiple of 8 so per-step row slices are
    sublane-aligned.
    """

    def kernel(*refs):
        # refs = x, (wih, whh, b) * L, w1, b1, w2, b2, out,
        #        seq, ig_i, ig_f, ig_g, ig_o
        x_ref = refs[0]
        idx = 1
        layer_refs = []
        for _ in range(num_layers):
            layer_refs.append((refs[idx], refs[idx + 1], refs[idx + 2]))
            idx += 3
        w1_ref, b1_ref, w2_ref, b2_ref = refs[idx:idx + 4]
        out_ref = refs[idx + 4]
        seq_ref = refs[idx + 5]                 # (T*Bp, H) current layer output
        ig_refs = refs[idx + 6:idx + 10]        # 4 x (T*Bp, H) input-gate preacts

        for layer, (wih_ref, whh_ref, b_ref) in enumerate(layer_refs):
            # ---- hoisted input projection: batched matmul per gate ----------
            x_flat = x_ref[...] if layer == 0 else seq_ref[...]   # (T*Bp, in)
            for g in range(4):
                ig_refs[g][...] = (
                    jnp.dot(x_flat, wih_ref[g],
                            preferred_element_type=jnp.float32) + b_ref[g])

            # recurrent weights loaded once per layer (per gate -> no slicing)
            w_i = whh_ref[0]
            w_f = whh_ref[1]
            w_g = whh_ref[2]
            w_o = whh_ref[3]

            def step(t, carry, w_i=w_i, w_f=w_f, w_g=w_g, w_o=w_o):
                h, c = carry
                row = pl.multiple_of(t * Bp, Bp)
                zi = ig_refs[0][pl.ds(row, Bp), :] + jnp.dot(
                    h, w_i, preferred_element_type=jnp.float32)
                zf = ig_refs[1][pl.ds(row, Bp), :] + jnp.dot(
                    h, w_f, preferred_element_type=jnp.float32)
                zg = ig_refs[2][pl.ds(row, Bp), :] + jnp.dot(
                    h, w_g, preferred_element_type=jnp.float32)
                zo = ig_refs[3][pl.ds(row, Bp), :] + jnp.dot(
                    h, w_o, preferred_element_type=jnp.float32)
                i_g = _sigmoid_via_tanh(zi)
                f_g = _sigmoid_via_tanh(zf)
                g_g = jnp.tanh(zg)
                o_g = _sigmoid_via_tanh(zo)
                c_new = f_g * c + i_g * g_g
                h_new = o_g * jnp.tanh(c_new)
                seq_ref[pl.ds(row, Bp), :] = h_new
                return h_new, c_new

            h0 = jnp.zeros((Bp, H), jnp.float32)
            c0 = jnp.zeros((Bp, H), jnp.float32)
            lax.fori_loop(0, T, step, (h0, c0), unroll=True)

        # ---- MLP head: two batched matmuls over the flattened sequence ------
        h_all = jnp.maximum(seq_ref[...], 0.0)                      # (T*Bp, H)
        y1 = jnp.dot(h_all, w1_ref[...],
                     preferred_element_type=jnp.float32) + b1_ref[...]
        y1 = jnp.maximum(y1, 0.0)                                   # (T*Bp, H2)
        # (1, H2) contracted with (T*Bp, H2) on dim 1 -> (1, T*Bp): lane-dense.
        y2 = lax.dot_general(w2_ref[...], y1, (((1,), (1,)), ((), ())),
                             preferred_element_type=jnp.float32)
        out_ref[...] = y2 + b2_ref[...]

    return kernel


def rnn_forward(x, lstm_params, mlp_params):
    """x: (B, T, input_size) -> (B, T), matching the torch module's output."""
    B, T, I = x.shape
    H = lstm_params[0][1].shape[1]           # w_hh: (4H, H)
    num_layers = len(lstm_params)
    Bp = max(8, ((B + 7) // 8) * 8)          # sublane-aligned padded batch

    # time-major, batch-padded, flattened: row n = t*Bp + b
    x_pad = jnp.zeros((Bp, T, I), jnp.float32).at[:B].set(x.astype(jnp.float32))
    x_flat = jnp.transpose(x_pad, (1, 0, 2)).reshape(T * Bp, I)

    inputs = [x_flat]
    for (w_ih, w_hh, b_ih, b_hh) in lstm_params:
        in_dim = w_ih.shape[1]
        # (4H, in) -> (4, in, H): per-gate, pre-transposed; gate order [i,f,g,o]
        inputs.append(jnp.transpose(w_ih.reshape(4, H, in_dim), (0, 2, 1))
                      .astype(jnp.float32))
        inputs.append(jnp.transpose(w_hh.reshape(4, H, H), (0, 2, 1))
                      .astype(jnp.float32))
        inputs.append((b_ih + b_hh).reshape(4, 1, H).astype(jnp.float32))
    w1, b1, w2, b2 = mlp_params
    inputs += [w1.T.astype(jnp.float32),          # (H, H2)
               b1[None, :].astype(jnp.float32),   # (1, H2)
               w2.astype(jnp.float32),            # (1, H2)  (torch layout)
               b2.reshape(1, 1).astype(jnp.float32)]

    vmem_spec = pl.BlockSpec(memory_space=pltpu.MemorySpace.VMEM)
    kernel = _make_lstm_mlp_kernel(num_layers, T, Bp, H)

    out_row = pl.pallas_call(
        kernel,
        out_shape=jax.ShapeDtypeStruct((1, T * Bp), jnp.float32),
        in_specs=[vmem_spec] * len(inputs),
        out_specs=vmem_spec,
        scratch_shapes=[pltpu.VMEM((T * Bp, H), jnp.float32)] * 5,  # seq + 4 gate preacts
        compiler_params=pltpu.CompilerParams(
            vmem_limit_bytes=32 * 1024 * 1024),
    )(*inputs)

    # out_row[0, t*Bp + b] == torch outs[b, t, 0]; view(-1, T) -> (B, T)
    return jnp.transpose(out_row.reshape(T, Bp)[:, :B], (1, 0))


def make_params(key, input_size, hidden_size, num_layers):
    """Deterministic init mimicking PyTorch's U(-1/sqrt(fan), 1/sqrt(fan))."""
    H = hidden_size
    H2 = H // 2
    keys = jax.random.split(key, num_layers * 4 + 4)
    ki = 0
    k_lstm = 1.0 / math.sqrt(H)
    lstm = []
    for layer in range(num_layers):
        in_dim = input_size if layer == 0 else H
        w_ih = jax.random.uniform(keys[ki], (4 * H, in_dim), jnp.float32, -k_lstm, k_lstm); ki += 1
        w_hh = jax.random.uniform(keys[ki], (4 * H, H), jnp.float32, -k_lstm, k_lstm); ki += 1
        b_ih = jax.random.uniform(keys[ki], (4 * H,), jnp.float32, -k_lstm, k_lstm); ki += 1
        b_hh = jax.random.uniform(keys[ki], (4 * H,), jnp.float32, -k_lstm, k_lstm); ki += 1
        lstm.append((w_ih, w_hh, b_ih, b_hh))
    k1 = 1.0 / math.sqrt(H)
    w1 = jax.random.uniform(keys[ki], (H2, H), jnp.float32, -k1, k1); ki += 1
    b1 = jax.random.uniform(keys[ki], (H2,), jnp.float32, -k1, k1); ki += 1
    k2 = 1.0 / math.sqrt(H2)
    w2 = jax.random.uniform(keys[ki], (1, H2), jnp.float32, -k2, k2); ki += 1
    b2 = jax.random.uniform(keys[ki], (1,), jnp.float32, -k2, k2); ki += 1
    return lstm, (w1, b1, w2, b2)


def rnn_reference(x, lstm_params, mlp_params):
    """Pure-JAX reference replicating torch LSTM + MLP semantics."""
    B, T, _ = x.shape
    h_seq = x.astype(jnp.float32)
    for (w_ih, w_hh, b_ih, b_hh) in lstm_params:
        H = w_hh.shape[1]
        h = jnp.zeros((B, H), jnp.float32)
        c = jnp.zeros((B, H), jnp.float32)
        outs = []
        for t in range(T):
            g = h_seq[:, t, :] @ w_ih.T + h @ w_hh.T + b_ih + b_hh
            i = jax.nn.sigmoid(g[:, :H])
            f = jax.nn.sigmoid(g[:, H:2 * H])
            gg = jnp.tanh(g[:, 2 * H:3 * H])
            o = jax.nn.sigmoid(g[:, 3 * H:])
            c = f * c + i * gg
            h = o * jnp.tanh(c)
            outs.append(h)
        h_seq = jnp.stack(outs, axis=1)
    w1, b1, w2, b2 = mlp_params
    y1 = jnp.maximum(h_seq, 0.0) @ w1.T + b1
    y2 = jnp.maximum(y1, 0.0) @ w2.T + b2
    return y2.reshape(-1, T)


if __name__ == "__main__":
    B, T, INPUT, HIDDEN, LAYERS = 2, 8, 16, 32, 2
    key = jax.random.PRNGKey(0)
    kx, kp = jax.random.split(key)
    x = jax.random.normal(kx, (B, T, INPUT), jnp.float32)
    lstm_params, mlp_params = make_params(kp, INPUT, HIDDEN, LAYERS)

    out = rnn_forward(x, lstm_params, mlp_params)
    jax.block_until_ready(out)

    ref = rnn_reference(x, lstm_params, mlp_params)
    assert out.shape == (B, T), out.shape
    assert jnp.allclose(out, ref, atol=1e-3, rtol=1e-3), float(jnp.max(jnp.abs(out - ref)))
    print("KERNEL_OK")
</pallas_src>

<mosaic_0001>
module attributes {stable_mosaic.version = 11 : i64} {
  func.func @kernel(%arg0: memref<64x16xf32, #tpu.memory_space<vmem>>, %arg1: memref<4x16x32xf32, #tpu.memory_space<vmem>>, %arg2: memref<4x32x32xf32, #tpu.memory_space<vmem>>, %arg3: memref<4x1x32xf32, #tpu.memory_space<vmem>>, %arg4: memref<4x32x32xf32, #tpu.memory_space<vmem>>, %arg5: memref<4x32x32xf32, #tpu.memory_space<vmem>>, %arg6: memref<4x1x32xf32, #tpu.memory_space<vmem>>, %arg7: memref<32x16xf32, #tpu.memory_space<vmem>>, %arg8: memref<1x16xf32, #tpu.memory_space<vmem>>, %arg9: memref<1x16xf32, #tpu.memory_space<vmem>>, %arg10: memref<1x1xf32, #tpu.memory_space<vmem>>, %arg11: memref<1x64xf32, #tpu.memory_space<vmem>>, %arg12: memref<64x32xf32, #tpu.memory_space<vmem>>, %arg13: memref<64x32xf32, #tpu.memory_space<vmem>>, %arg14: memref<64x32xf32, #tpu.memory_space<vmem>>, %arg15: memref<64x32xf32, #tpu.memory_space<vmem>>, %arg16: memref<64x32xf32, #tpu.memory_space<vmem>>) attributes {dimension_semantics = [], scalar_prefetch = 0 : i64, scratch_operands = 5 : i64, tpu.core_type = #tpu.core_type<tc>} {
    %c0 = arith.constant 0 : index
    %c0_0 = arith.constant 0 : index
    %0 = vector.load %arg0[%c0, %c0_0] : memref<64x16xf32, #tpu.memory_space<vmem>>, vector<64x16xf32>
    %c0_1 = arith.constant 0 : index
    %c0_2 = arith.constant 0 : index
    %c0_3 = arith.constant 0 : index
    %1 = vector.load %arg1[%c0_1, %c0_2, %c0_3] : memref<4x16x32xf32, #tpu.memory_space<vmem>>, vector<1x16x32xf32>
    %2 = vector.shape_cast %1 : vector<1x16x32xf32> to vector<16x32xf32>
    %cst = arith.constant dense<0.000000e+00> : vector<64x32xf32>
    %3 = tpu.matmul %0, %2, %cst {dimension_numbers = #tpu.dot_dimension_numbers<[1], [0], [0], [1], [0, 0, 1, 1], [], []>} : vector<64x16xf32>, vector<16x32xf32>, vector<64x32xf32> -> vector<64x32xf32>
    %c0_4 = arith.constant 0 : index
    %c0_5 = arith.constant 0 : index
    %c0_6 = arith.constant 0 : index
    %4 = vector.load %arg3[%c0_4, %c0_5, %c0_6] : memref<4x1x32xf32, #tpu.memory_space<vmem>>, vector<1x1x32xf32>
    %5 = vector.shape_cast %4 : vector<1x1x32xf32> to vector<1x32xf32>
    %6 = vector.broadcast %5 : vector<1x32xf32> to vector<64x32xf32>
    %7 = arith.addf %3, %6 : vector<64x32xf32>
    %c0_7 = arith.constant 0 : index
    %c0_8 = arith.constant 0 : index
    %8 = vector.load %arg13[%c0_7, %c0_8] : memref<64x32xf32, #tpu.memory_space<vmem>>, vector<64x32xf32>
    tpu.vector_store %arg13[%c0_7, %c0_8], %7 {strides = array<i32>} : memref<64x32xf32, #tpu.memory_space<vmem>>, vector<64x32xf32>,
    %c1 = arith.constant 1 : index
    %c0_9 = arith.constant 0 : index
    %c0_10 = arith.constant 0 : index
    %9 = vector.load %arg1[%c1, %c0_9, %c0_10] : memref<4x16x32xf32, #tpu.memory_space<vmem>>, vector<1x16x32xf32>
    %10 = vector.shape_cast %9 : vector<1x16x32xf32> to vector<16x32xf32>
    %cst_11 = arith.constant dense<0.000000e+00> : vector<64x32xf32>
    %11 = tpu.matmul %0, %10, %cst_11 {dimension_numbers = #tpu.dot_dimension_numbers<[1], [0], [0], [1], [0, 0, 1, 1], [], []>} : vector<64x16xf32>, vector<16x32xf32>, vector<64x32xf32> -> vector<64x32xf32>
    %c1_12 = arith.constant 1 : index
    %c0_13 = arith.constant 0 : index
    %c0_14 = arith.constant 0 : index
    %12 = vector.load %arg3[%c1_12, %c0_13, %c0_14] : memref<4x1x32xf32, #tpu.memory_space<vmem>>, vector<1x1x32xf32>
    %13 = vector.shape_cast %12 : vector<1x1x32xf32> to vector<1x32xf32>
    %14 = vector.broadcast %13 : vector<1x32xf32> to vector<64x32xf32>
    %15 = arith.addf %11, %14 : vector<64x32xf32>
    %c0_15 = arith.constant 0 : index
    %c0_16 = arith.constant 0 : index
    %16 = vector.load %arg14[%c0_15, %c0_16] : memref<64x32xf32, #tpu.memory_space<vmem>>, vector<64x32xf32>
    tpu.vector_store %arg14[%c0_15, %c0_16], %15 {strides = array<i32>} : memref<64x32xf32, #tpu.memory_space<vmem>>, vector<64x32xf32>,
    %c2 = arith.constant 2 : index
    %c0_17 = arith.constant 0 : index
    %c0_18 = arith.constant 0 : index
    %17 = vector.load %arg1[%c2, %c0_17, %c0_18] : memref<4x16x32xf32, #tpu.memory_space<vmem>>, vector<1x16x32xf32>
    %18 = vector.shape_cast %17 : vector<1x16x32xf32> to vector<16x32xf32>
    %cst_19 = arith.constant dense<0.000000e+00> : vector<64x32xf32>
    %19 = tpu.matmul %0, %18, %cst_19 {dimension_numbers = #tpu.dot_dimension_numbers<[1], [0], [0], [1], [0, 0, 1, 1], [], []>} : vector<64x16xf32>, vector<16x32xf32>, vector<64x32xf32> -> vector<64x32xf32>
    %c2_20 = arith.constant 2 : index
    %c0_21 = arith.constant 0 : index
    %c0_22 = arith.constant 0 : index
    %20 = vector.load %arg3[%c2_20, %c0_21, %c0_22] : memref<4x1x32xf32, #tpu.memory_space<vmem>>, vector<1x1x32xf32>
    %21 = vector.shape_cast %20 : vector<1x1x32xf32> to vector<1x32xf32>
    %22 = vector.broadcast %21 : vector<1x32xf32> to vector<64x32xf32>
    %23 = arith.addf %19, %22 : vector<64x32xf32>
    %c0_23 = arith.constant 0 : index
    %c0_24 = arith.constant 0 : index
    %24 = vector.load %arg15[%c0_23, %c0_24] : memref<64x32xf32, #tpu.memory_space<vmem>>, vector<64x32xf32>
    tpu.vector_store %arg15[%c0_23, %c0_24], %23 {strides = array<i32>} : memref<64x32xf32, #tpu.memory_space<vmem>>, vector<64x32xf32>,
    %c3 = arith.constant 3 : index
    %c0_25 = arith.constant 0 : index
    %c0_26 = arith.constant 0 : index
    %25 = vector.load %arg1[%c3, %c0_25, %c0_26] : memref<4x16x32xf32, #tpu.memory_space<vmem>>, vector<1x16x32xf32>
    %26 = vector.shape_cast %25 : vector<1x16x32xf32> to vector<16x32xf32>
    %cst_27 = arith.constant dense<0.000000e+00> : vector<64x32xf32>
    %27 = tpu.matmul %0, %26, %cst_27 {dimension_numbers = #tpu.dot_dimension_numbers<[1], [0], [0], [1], [0, 0, 1, 1], [], []>} : vector<64x16xf32>, vector<16x32xf32>, vector<64x32xf32> -> vector<64x32xf32>
    %c3_28 = arith.constant 3 : index
    %c0_29 = arith.constant 0 : index
    %c0_30 = arith.constant 0 : index
    %28 = vector.load %arg3[%c3_28, %c0_29, %c0_30] : memref<4x1x32xf32, #tpu.memory_space<vmem>>, vector<1x1x32xf32>
    %29 = vector.shape_cast %28 : vector<1x1x32xf32> to vector<1x32xf32>
    %30 = vector.broadcast %29 : vector<1x32xf32> to vector<64x32xf32>
    %31 = arith.addf %27, %30 : vector<64x32xf32>
    %c0_31 = arith.constant 0 : index
    %c0_32 = arith.constant 0 : index
    %32 = vector.load %arg16[%c0_31, %c0_32] : memref<64x32xf32, #tpu.memory_space<vmem>>, vector<64x32xf32>
    tpu.vector_store %arg16[%c0_31, %c0_32], %31 {strides = array<i32>} : memref<64x32xf32, #tpu.memory_space<vmem>>, vector<64x32xf32>,
    %c0_33 = arith.constant 0 : index
    %c0_34 = arith.constant 0 : index
    %c0_35 = arith.constant 0 : index
    %33 = vector.load %arg2[%c0_33, %c0_34, %c0_35] : memref<4x32x32xf32, #tpu.memory_space<vmem>>, vector<1x32x32xf32>
    %34 = vector.shape_cast %33 : vector<1x32x32xf32> to vector<32x32xf32>
    %c1_36 = arith.constant 1 : index
    %c0_37 = arith.constant 0 : index
    %c0_38 = arith.constant 0 : index
    %35 = vector.load %arg2[%c1_36, %c0_37, %c0_38] : memref<4x32x32xf32, #tpu.memory_space<vmem>>, vector<1x32x32xf32>
    %36 = vector.shape_cast %35 : vector<1x32x32xf32> to vector<32x32xf32>
    %c2_39 = arith.constant 2 : index
    %c0_40 = arith.constant 0 : index
    %c0_41 = arith.constant 0 : index
    %37 = vector.load %arg2[%c2_39, %c0_40, %c0_41] : memref<4x32x32xf32, #tpu.memory_space<vmem>>, vector<1x32x32xf32>
    %38 = vector.shape_cast %37 : vector<1x32x32xf32> to vector<32x32xf32>
    %c3_42 = arith.constant 3 : index
    %c0_43 = arith.constant 0 : index
    %c0_44 = arith.constant 0 : index
    %39 = vector.load %arg2[%c3_42, %c0_43, %c0_44] : memref<4x32x32xf32, #tpu.memory_space<vmem>>, vector<1x32x32xf32>
    %40 = vector.shape_cast %39 : vector<1x32x32xf32> to vector<32x32xf32>
    %cst_45 = arith.constant 0.000000e+00 : f32
    %41 = vector.broadcast %cst_45 : f32 to vector<8x32xf32>
    %cst_46 = arith.constant 0.000000e+00 : f32
    %42 = vector.broadcast %cst_46 : f32 to vector<8x32xf32>
    %c0_i32 = arith.constant 0 : i32
    %c8_i32 = arith.constant 8 : i32
    %43 = arith.muli %c0_i32, %c8_i32 : i32
    %44 = tpu.assume_multiple %43, 8 : i32
    %45 = arith.index_cast %44 : i32 to index
    %c0_47 = arith.constant 0 : index
    %46 = vector.load %arg13[%45, %c0_47] : memref<64x32xf32, #tpu.memory_space<vmem>>, vector<8x32xf32>
    %cst_48 = arith.constant dense<0.000000e+00> : vector<8x32xf32>
    %47 = tpu.matmul %41, %34, %cst_48 {dimension_numbers = #tpu.dot_dimension_numbers<[1], [0], [0], [1], [0, 0, 1, 1], [], []>} : vector<8x32xf32>, vector<32x32xf32>, vector<8x32xf32> -> vector<8x32xf32>
    %48 = arith.addf %46, %47 : vector<8x32xf32>
    %49 = arith.index_cast %44 : i32 to index
    %c0_49 = arith.constant 0 : index
    %50 = vector.load %arg14[%49, %c0_49] : memref<64x32xf32, #tpu.memory_space<vmem>>, vector<8x32xf32>
    %cst_50 = arith.constant dense<0.000000e+00> : vector<8x32xf32>
    %51 = tpu.matmul %41, %36, %cst_50 {dimension_numbers = #tpu.dot_dimension_numbers<[1], [0], [0], [1], [0, 0, 1, 1], [], []>} : vector<8x32xf32>, vector<32x32xf32>, vector<8x32xf32> -> vector<8x32xf32>
    %52 = arith.addf %50, %51 : vector<8x32xf32>
    %53 = arith.index_cast %44 : i32 to index
    %c0_51 = arith.constant 0 : index
    %54 = vector.load %arg15[%53, %c0_51] : memref<64x32xf32, #tpu.memory_space<vmem>>, vector<8x32xf32>
    %cst_52 = arith.constant dense<0.000000e+00> : vector<8x32xf32>
    %55 = tpu.matmul %41, %38, %cst_52 {dimension_numbers = #tpu.dot_dimension_numbers<[1], [0], [0], [1], [0, 0, 1, 1], [], []>} : vector<8x32xf32>, vector<32x32xf32>, vector<8x32xf32> -> vector<8x32xf32>
    %56 = arith.addf %54, %55 : vector<8x32xf32>
    %57 = arith.index_cast %44 : i32 to index
    %c0_53 = arith.constant 0 : index
    %58 = vector.load %arg16[%57, %c0_53] : memref<64x32xf32, #tpu.memory_space<vmem>>, vector<8x32xf32>
    %cst_54 = arith.constant dense<0.000000e+00> : vector<8x32xf32>
    %59 = tpu.matmul %41, %40, %cst_54 {dimension_numbers = #tpu.dot_dimension_numbers<[1], [0], [0], [1], [0, 0, 1, 1], [], []>} : vector<8x32xf32>, vector<32x32xf32>, vector<8x32xf32> -> vector<8x32xf32>
    %60 = arith.addf %58, %59 : vector<8x32xf32>
    %cst_55 = arith.constant 5.000000e-01 : f32
    %61 = vector.broadcast %cst_55 : f32 to vector<8x32xf32>
    %62 = arith.mulf %61, %48 : vector<8x32xf32>
    %63 = math.tanh %62 : vector<8x32xf32>
    %cst_56 = arith.constant 5.000000e-01 : f32
    %64 = vector.broadcast %cst_56 : f32 to vector<8x32xf32>
    %65 = arith.mulf %64, %63 : vector<8x32xf32>
    %cst_57 = arith.constant 5.000000e-01 : f32
    %66 = vector.broadcast %cst_57 : f32 to vector<8x32xf32>
    %67 = arith.addf %65, %66 : vector<8x32xf32>
    %cst_58 = arith.constant 5.000000e-01 : f32
    %68 = vector.broadcast %cst_58 : f32 to vector<8x32xf32>
    %69 = arith.mulf %68, %52 : vector<8x32xf32>
    %70 = math.tanh %69 : vector<8x32xf32>
    %cst_59 = arith.constant 5.000000e-01 : f32
    %71 = vector.broadcast %cst_59 : f32 to vector<8x32xf32>
    %72 = arith.mulf %71, %70 : vector<8x32xf32>
    %cst_60 = arith.constant 5.000000e-01 : f32
    %73 = vector.broadcast %cst_60 : f32 to vector<8x32xf32>
    %74 = arith.addf %72, %73 : vector<8x32xf32>
    %75 = math.tanh %56 : vector<8x32xf32>
    %cst_61 = arith.constant 5.000000e-01 : f32
    %76 = vector.broadcast %cst_61 : f32 to vector<8x32xf32>
    %77 = arith.mulf %76, %60 : vector<8x32xf32>
    %78 = math.tanh %77 : vector<8x32xf32>
    %cst_62 = arith.constant 5.000000e-01 : f32
    %79 = vector.broadcast %cst_62 : f32 to vector<8x32xf32>
    %80 = arith.mulf %79, %78 : vector<8x32xf32>
    %cst_63 = arith.constant 5.000000e-01 : f32
    %81 = vector.broadcast %cst_63 : f32 to vector<8x32xf32>
    %82 = arith.addf %80, %81 : vector<8x32xf32>
    %83 = arith.mulf %74, %42 : vector<8x32xf32>
    %84 = arith.mulf %67, %75 : vector<8x32xf32>
    %85 = arith.addf %83, %84 : vector<8x32xf32>
    %86 = math.tanh %85 : vector<8x32xf32>
    %87 = arith.mulf %82, %86 : vector<8x32xf32>
    %88 = arith.index_cast %44 : i32 to index
    %c0_64 = arith.constant 0 : index
    %89 = vector.load %arg12[%88, %c0_64] : memref<64x32xf32, #tpu.memory_space<vmem>>, vector<8x32xf32>
    tpu.vector_store %arg12[%88, %c0_64], %87 {strides = array<i32>} : memref<64x32xf32, #tpu.memory_space<vmem>>, vector<8x32xf32>,
    %c1_i32 = arith.constant 1 : i32
    %c8_i32_65 = arith.constant 8 : i32
    %90 = arith.muli %c1_i32, %c8_i32_65 : i32
    %91 = tpu.assume_multiple %90, 8 : i32
    %92 = arith.index_cast %91 : i32 to index
    %c0_66 = arith.constant 0 : index
    %93 = vector.load %arg13[%92, %c0_66] : memref<64x32xf32, #tpu.memory_space<vmem>>, vector<8x32xf32>
    %cst_67 = arith.constant dense<0.000000e+00> : vector<8x32xf32>
    %94 = tpu.matmul %87, %34, %cst_67 {dimension_numbers = #tpu.dot_dimension_numbers<[1], [0], [0], [1], [0, 0, 1, 1], [], []>} : vector<8x32xf32>, vector<32x32xf32>, vector<8x32xf32> -> vector<8x32xf32>
    %95 = arith.addf %93, %94 : vector<8x32xf32>
    %96 = arith.index_cast %91 : i32 to index
    %c0_68 = arith.constant 0 : index
    %97 = vector.load %arg14[%96, %c0_68] : memref<64x32xf32, #tpu.memory_space<vmem>>, vector<8x32xf32>
    %cst_69 = arith.constant dense<0.000000e+00> : vector<8x32xf32>
    %98 = tpu.matmul %87, %36, %cst_69 {dimension_numbers = #tpu.dot_dimension_numbers<[1], [0], [0], [1], [0, 0, 1, 1], [], []>} : vector<8x32xf32>, vector<32x32xf32>, vector<8x32xf32> -> vector<8x32xf32>
    %99 = arith.addf %97, %98 : vector<8x32xf32>
    %100 = arith.index_cast %91 : i32 to index
    %c0_70 = arith.constant 0 : index
    %101 = vector.load %arg15[%100, %c0_70] : memref<64x32xf32, #tpu.memory_space<vmem>>, vector<8x32xf32>
    %cst_71 = arith.constant dense<0.000000e+00> : vector<8x32xf32>
    %102 = tpu.matmul %87, %38, %cst_71 {dimension_numbers = #tpu.dot_dimension_numbers<[1], [0], [0], [1], [0, 0, 1, 1], [], []>} : vector<8x32xf32>, vector<32x32xf32>, vector<8x32xf32> -> vector<8x32xf32>
    %103 = arith.addf %101, %102 : vector<8x32xf32>
    %104 = arith.index_cast %91 : i32 to index
    %c0_72 = arith.constant 0 : index
    %105 = vector.load %arg16[%104, %c0_72] : memref<64x32xf32, #tpu.memory_space<vmem>>, vector<8x32xf32>
    %cst_73 = arith.constant dense<0.000000e+00> : vector<8x32xf32>
    %106 = tpu.matmul %87, %40, %cst_73 {dimension_numbers = #tpu.dot_dimension_numbers<[1], [0], [0], [1], [0, 0, 1, 1], [], []>} : vector<8x32xf32>, vector<32x32xf32>, vector<8x32xf32> -> vector<8x32xf32>
    %107 = arith.addf %105, %106 : vector<8x32xf32>
    %cst_74 = arith.constant 5.000000e-01 : f32
    %108 = vector.broadcast %cst_74 : f32 to vector<8x32xf32>
    %109 = arith.mulf %108, %95 : vector<8x32xf32>
    %110 = math.tanh %109 : vector<8x32xf32>
    %cst_75 = arith.constant 5.000000e-01 : f32
    %111 = vector.broadcast %cst_75 : f32 to vector<8x32xf32>
    %112 = arith.mulf %111, %110 : vector<8x32xf32>
    %cst_76 = arith.constant 5.000000e-01 : f32
    %113 = vector.broadcast %cst_76 : f32 to vector<8x32xf32>
    %114 = arith.addf %112, %113 : vector<8x32xf32>
    %cst_77 = arith.constant 5.000000e-01 : f32
    %115 = vector.broadcast %cst_77 : f32 to vector<8x32xf32>
    %116 = arith.mulf %115, %99 : vector<8x32xf32>
    %117 = math.tanh %116 : vector<8x32xf32>
    %cst_78 = arith.constant 5.000000e-01 : f32
    %118 = vector.broadcast %cst_78 : f32 to vector<8x32xf32>
    %119 = arith.mulf %118, %117 : vector<8x32xf32>
    %cst_79 = arith.constant 5.000000e-01 : f32
    %120 = vector.broadcast %cst_79 : f32 to vector<8x32xf32>
    %121 = arith.addf %119, %120 : vector<8x32xf32>
    %122 = math.tanh %103 : vector<8x32xf32>
    %cst_80 = arith.constant 5.000000e-01 : f32
    %123 = vector.broadcast %cst_80 : f32 to vector<8x32xf32>
    %124 = arith.mulf %123, %107 : vector<8x32xf32>
    %125 = math.tanh %124 : vector<8x32xf32>
    %cst_81 = arith.constant 5.000000e-01 : f32
    %126 = vector.broadcast %cst_81 : f32 to vector<8x32xf32>
    %127 = arith.mulf %126, %125 : vector<8x32xf32>
    %cst_82 = arith.constant 5.000000e-01 : f32
    %128 = vector.broadcast %cst_82 : f32 to vector<8x32xf32>
    %129 = arith.addf %127, %128 : vector<8x32xf32>
    %130 = arith.mulf %121, %85 : vector<8x32xf32>
    %131 = arith.mulf %114, %122 : vector<8x32xf32>
    %132 = arith.addf %130, %131 : vector<8x32xf32>
    %133 = math.tanh %132 : vector<8x32xf32>
    %134 = arith.mulf %129, %133 : vector<8x32xf32>
    %135 = arith.index_cast %91 : i32 to index
    %c0_83 = arith.constant 0 : index
    %136 = vector.load %arg12[%135, %c0_83] : memref<64x32xf32, #tpu.memory_space<vmem>>, vector<8x32xf32>
    tpu.vector_store %arg12[%135, %c0_83], %134 {strides = array<i32>} : memref<64x32xf32, #tpu.memory_space<vmem>>, vector<8x32xf32>,
    %c2_i32 = arith.constant 2 : i32
    %c8_i32_84 = arith.constant 8 : i32
    %137 = arith.muli %c2_i32, %c8_i32_84 : i32
    %138 = tpu.assume_multiple %137, 8 : i32
    %139 = arith.index_cast %138 : i32 to index
    %c0_85 = arith.constant 0 : index
    %140 = vector.load %arg13[%139, %c0_85] : memref<64x32xf32, #tpu.memory_space<vmem>>, vector<8x32xf32>
    %cst_86 = arith.constant dense<0.000000e+00> : vector<8x32xf32>
    %141 = tpu.matmul %134, %34, %cst_86 {dimension_numbers = #tpu.dot_dimension_numbers<[1], [0], [0], [1], [0, 0, 1, 1], [], []>} : vector<8x32xf32>, vector<32x32xf32>, vector<8x32xf32> -> vector<8x32xf32>
    %142 = arith.addf %140, %141 : vector<8x32xf32>
    %143 = arith.index_cast %138 : i32 to index
    %c0_87 = arith.constant 0 : index
    %144 = vector.load %arg14[%143, %c0_87] : memref<64x32xf32, #tpu.memory_space<vmem>>, vector<8x32xf32>
    %cst_88 = arith.constant dense<0.000000e+00> : vector<8x32xf32>
    %145 = tpu.matmul %134, %36, %cst_88 {dimension_numbers = #tpu.dot_dimension_numbers<[1], [0], [0], [1], [0, 0, 1, 1], [], []>} : vector<8x32xf32>, vector<32x32xf32>, vector<8x32xf32> -> vector<8x32xf32>
    %146 = arith.addf %144, %145 : vector<8x32xf32>
    %147 = arith.index_cast %138 : i32 to index
    %c0_89 = arith.constant 0 : index
    %148 = vector.load %arg15[%147, %c0_89] : memref<64x32xf32, #tpu.memory_space<vmem>>, vector<8x32xf32>
    %cst_90 = arith.constant dense<0.000000e+00> : vector<8x32xf32>
    %149 = tpu.matmul %134, %38, %cst_90 {dimension_numbers = #tpu.dot_dimension_numbers<[1], [0], [0], [1], [0, 0, 1, 1], [], []>} : vector<8x32xf32>, vector<32x32xf32>, vector<8x32xf32> -> vector<8x32xf32>
    %150 = arith.addf %148, %149 : vector<8x32xf32>
    %151 = arith.index_cast %138 : i32 to index
    %c0_91 = arith.constant 0 : index
    %152 = vector.load %arg16[%151, %c0_91] : memref<64x32xf32, #tpu.memory_space<vmem>>, vector<8x32xf32>
    %cst_92 = arith.constant dense<0.000000e+00> : vector<8x32xf32>
    %153 = tpu.matmul %134, %40, %cst_92 {dimension_numbers = #tpu.dot_dimension_numbers<[1], [0], [0], [1], [0, 0, 1, 1], [], []>} : vector<8x32xf32>, vector<32x32xf32>, vector<8x32xf32> -> vector<8x32xf32>
    %154 = arith.addf %152, %153 : vector<8x32xf32>
    %cst_93 = arith.constant 5.000000e-01 : f32
    %155 = vector.broadcast %cst_93 : f32 to vector<8x32xf32>
    %156 = arith.mulf %155, %142 : vector<8x32xf32>
    %157 = math.tanh %156 : vector<8x32xf32>
    %cst_94 = arith.constant 5.000000e-01 : f32
    %158 = vector.broadcast %cst_94 : f32 to vector<8x32xf32>
    %159 = arith.mulf %158, %157 : vector<8x32xf32>
    %cst_95 = arith.constant 5.000000e-01 : f32
    %160 = vector.broadcast %cst_95 : f32 to vector<8x32xf32>
    %161 = arith.addf %159, %160 : vector<8x32xf32>
    %cst_96 = arith.constant 5.000000e-01 : f32
    %162 = vector.broadcast %cst_96 : f32 to vector<8x32xf32>
    %163 = arith.mulf %162, %146 : vector<8x32xf32>
    %164 = math.tanh %163 : vector<8x32xf32>
    %cst_97 = arith.constant 5.000000e-01 : f32
    %165 = vector.broadcast %cst_97 : f32 to vector<8x32xf32>
    %166 = arith.mulf %165, %164 : vector<8x32xf32>
    %cst_98 = arith.constant 5.000000e-01 : f32
    %167 = vector.broadcast %cst_98 : f32 to vector<8x32xf32>
    %168 = arith.addf %166, %167 : vector<8x32xf32>
    %169 = math.tanh %150 : vector<8x32xf32>
    %cst_99 = arith.constant 5.000000e-01 : f32
    %170 = vector.broadcast %cst_99 : f32 to vector<8x32xf32>
    %171 = arith.mulf %170, %154 : vector<8x32xf32>
    %172 = math.tanh %171 : vector<8x32xf32>
    %cst_100 = arith.constant 5.000000e-01 : f32
    %173 = vector.broadcast %cst_100 : f32 to vector<8x32xf32>
    %174 = arith.mulf %173, %172 : vector<8x32xf32>
    %cst_101 = arith.constant 5.000000e-01 : f32
    %175 = vector.broadcast %cst_101 : f32 to vector<8x32xf32>
    %176 = arith.addf %174, %175 : vector<8x32xf32>
    %177 = arith.mulf %168, %132 : vector<8x32xf32>
    %178 = arith.mulf %161, %169 : vector<8x32xf32>
    %179 = arith.addf %177, %178 : vector<8x32xf32>
    %180 = math.tanh %179 : vector<8x32xf32>
    %181 = arith.mulf %176, %180 : vector<8x32xf32>
    %182 = arith.index_cast %138 : i32 to index
    %c0_102 = arith.constant 0 : index
    %183 = vector.load %arg12[%182, %c0_102] : memref<64x32xf32, #tpu.memory_space<vmem>>, vector<8x32xf32>
    tpu.vector_store %arg12[%182, %c0_102], %181 {strides = array<i32>} : memref<64x32xf32, #tpu.memory_space<vmem>>, vector<8x32xf32>,
    %c3_i32 = arith.constant 3 : i32
    %c8_i32_103 = arith.constant 8 : i32
    %184 = arith.muli %c3_i32, %c8_i32_103 : i32
    %185 = tpu.assume_multiple %184, 8 : i32
    %186 = arith.index_cast %185 : i32 to index
    %c0_104 = arith.constant 0 : index
    %187 = vector.load %arg13[%186, %c0_104] : memref<64x32xf32, #tpu.memory_space<vmem>>, vector<8x32xf32>
    %cst_105 = arith.constant dense<0.000000e+00> : vector<8x32xf32>
    %188 = tpu.matmul %181, %34, %cst_105 {dimension_numbers = #tpu.dot_dimension_numbers<[1], [0], [0], [1], [0, 0, 1, 1], [], []>} : vector<8x32xf32>, vector<32x32xf32>, vector<8x32xf32> -> vector<8x32xf32>
    %189 = arith.addf %187, %188 : vector<8x32xf32>
    %190 = arith.index_cast %185 : i32 to index
    %c0_106 = arith.constant 0 : index
    %191 = vector.load %arg14[%190, %c0_106] : memref<64x32xf32, #tpu.memory_space<vmem>>, vector<8x32xf32>
    %cst_107 = arith.constant dense<0.000000e+00> : vector<8x32xf32>
    %192 = tpu.matmul %181, %36, %cst_107 {dimension_numbers = #tpu.dot_dimension_numbers<[1], [0], [0], [1], [0, 0, 1, 1], [], []>} : vector<8x32xf32>, vector<32x32xf32>, vector<8x32xf32> -> vector<8x32xf32>
    %193 = arith.addf %191, %192 : vector<8x32xf32>
    %194 = arith.index_cast %185 : i32 to index
    %c0_108 = arith.constant 0 : index
    %195 = vector.load %arg15[%194, %c0_108] : memref<64x32xf32, #tpu.memory_space<vmem>>, vector<8x32xf32>
    %cst_109 = arith.constant dense<0.000000e+00> : vector<8x32xf32>
    %196 = tpu.matmul %181, %38, %cst_109 {dimension_numbers = #tpu.dot_dimension_numbers<[1], [0], [0], [1], [0, 0, 1, 1], [], []>} : vector<8x32xf32>, vector<32x32xf32>, vector<8x32xf32> -> vector<8x32xf32>
    %197 = arith.addf %195, %196 : vector<8x32xf32>
    %198 = arith.index_cast %185 : i32 to index
    %c0_110 = arith.constant 0 : index
    %199 = vector.load %arg16[%198, %c0_110] : memref<64x32xf32, #tpu.memory_space<vmem>>, vector<8x32xf32>
    %cst_111 = arith.constant dense<0.000000e+00> : vector<8x32xf32>
    %200 = tpu.matmul %181, %40, %cst_111 {dimension_numbers = #tpu.dot_dimension_numbers<[1], [0], [0], [1], [0, 0, 1, 1], [], []>} : vector<8x32xf32>, vector<32x32xf32>, vector<8x32xf32> -> vector<8x32xf32>
    %201 = arith.addf %199, %200 : vector<8x32xf32>
    %cst_112 = arith.constant 5.000000e-01 : f32
    %202 = vector.broadcast %cst_112 : f32 to vector<8x32xf32>
    %203 = arith.mulf %202, %189 : vector<8x32xf32>
    %204 = math.tanh %203 : vector<8x32xf32>
    %cst_113 = arith.constant 5.000000e-01 : f32
    %205 = vector.broadcast %cst_113 : f32 to vector<8x32xf32>
    %206 = arith.mulf %205, %204 : vector<8x32xf32>
    %cst_114 = arith.constant 5.000000e-01 : f32
    %207 = vector.broadcast %cst_114 : f32 to vector<8x32xf32>
    %208 = arith.addf %206, %207 : vector<8x32xf32>
    %cst_115 = arith.constant 5.000000e-01 : f32
    %209 = vector.broadcast %cst_115 : f32 to vector<8x32xf32>
    %210 = arith.mulf %209, %193 : vector<8x32xf32>
    %211 = math.tanh %210 : vector<8x32xf32>
    %cst_116 = arith.constant 5.000000e-01 : f32
    %212 = vector.broadcast %cst_116 : f32 to vector<8x32xf32>
    %213 = arith.mulf %212, %211 : vector<8x32xf32>
    %cst_117 = arith.constant 5.000000e-01 : f32
    %214 = vector.broadcast %cst_117 : f32 to vector<8x32xf32>
    %215 = arith.addf %213, %214 : vector<8x32xf32>
    %216 = math.tanh %197 : vector<8x32xf32>
    %cst_118 = arith.constant 5.000000e-01 : f32
    %217 = vector.broadcast %cst_118 : f32 to vector<8x32xf32>
    %218 = arith.mulf %217, %201 : vector<8x32xf32>
    %219 = math.tanh %218 : vector<8x32xf32>
    %cst_119 = arith.constant 5.000000e-01 : f32
    %220 = vector.broadcast %cst_119 : f32 to vector<8x32xf32>
    %221 = arith.mulf %220, %219 : vector<8x32xf32>
    %cst_120 = arith.constant 5.000000e-01 : f32
    %222 = vector.broadcast %cst_120 : f32 to vector<8x32xf32>
    %223 = arith.addf %221, %222 : vector<8x32xf32>
    %224 = arith.mulf %215, %179 : vector<8x32xf32>
    %225 = arith.mulf %208, %216 : vector<8x32xf32>
    %226 = arith.addf %224, %225 : vector<8x32xf32>
    %227 = math.tanh %226 : vector<8x32xf32>
    %228 = arith.mulf %223, %227 : vector<8x32xf32>
    %229 = arith.index_cast %185 : i32 to index
    %c0_121 = arith.constant 0 : index
    %230 = vector.load %arg12[%229, %c0_121] : memref<64x32xf32, #tpu.memory_space<vmem>>, vector<8x32xf32>
    tpu.vector_store %arg12[%229, %c0_121], %228 {strides = array<i32>} : memref<64x32xf32, #tpu.memory_space<vmem>>, vector<8x32xf32>,
    %c4_i32 = arith.constant 4 : i32
    %c8_i32_122 = arith.constant 8 : i32
    %231 = arith.muli %c4_i32, %c8_i32_122 : i32
    %232 = tpu.assume_multiple %231, 8 : i32
    %233 = arith.index_cast %232 : i32 to index
    %c0_123 = arith.constant 0 : index
    %234 = vector.load %arg13[%233, %c0_123] : memref<64x32xf32, #tpu.memory_space<vmem>>, vector<8x32xf32>
    %cst_124 = arith.constant dense<0.000000e+00> : vector<8x32xf32>
    %235 = tpu.matmul %228, %34, %cst_124 {dimension_numbers = #tpu.dot_dimension_numbers<[1], [0], [0], [1], [0, 0, 1, 1], [], []>} : vector<8x32xf32>, vector<32x32xf32>, vector<8x32xf32> -> vector<8x32xf32>
    %236 = arith.addf %234, %235 : vector<8x32xf32>
    %237 = arith.index_cast %232 : i32 to index
    %c0_125 = arith.constant 0 : index
    %238 = vector.load %arg14[%237, %c0_125] : memref<64x32xf32, #tpu.memory_space<vmem>>, vector<8x32xf32>
    %cst_126 = arith.constant dense<0.000000e+00> : vector<8x32xf32>
    %239 = tpu.matmul %228, %36, %cst_126 {dimension_numbers = #tpu.dot_dimension_numbers<[1], [0], [0], [1], [0, 0, 1, 1], [], []>} : vector<8x32xf32>, vector<32x32xf32>, vector<8x32xf32> -> vector<8x32xf32>
    %240 = arith.addf %238, %239 : vector<8x32xf32>
    %241 = arith.index_cast %232 : i32 to index
    %c0_127 = arith.constant 0 : index
    %242 = vector.load %arg15[%241, %c0_127] : memref<64x32xf32, #tpu.memory_space<vmem>>, vector<8x32xf32>
    %cst_128 = arith.constant dense<0.000000e+00> : vector<8x32xf32>
    %243 = tpu.matmul %228, %38, %cst_128 {dimension_numbers = #tpu.dot_dimension_numbers<[1], [0], [0], [1], [0, 0, 1, 1], [], []>} : vector<8x32xf32>, vector<32x32xf32>, vector<8x32xf32> -> vector<8x32xf32>
    %244 = arith.addf %242, %243 : vector<8x32xf32>
    %245 = arith.index_cast %232 : i32 to index
    %c0_129 = arith.constant 0 : index
    %246 = vector.load %arg16[%245, %c0_129] : memref<64x32xf32, #tpu.memory_space<vmem>>, vector<8x32xf32>
    %cst_130 = arith.constant dense<0.000000e+00> : vector<8x32xf32>
    %247 = tpu.matmul %228, %40, %cst_130 {dimension_numbers = #tpu.dot_dimension_numbers<[1], [0], [0], [1], [0, 0, 1, 1], [], []>} : vector<8x32xf32>, vector<32x32xf32>, vector<8x32xf32> -> vector<8x32xf32>
    %248 = arith.addf %246, %247 : vector<8x32xf32>
    %cst_131 = arith.constant 5.000000e-01 : f32
    %249 = vector.broadcast %cst_131 : f32 to vector<8x32xf32>
    %250 = arith.mulf %249, %236 : vector<8x32xf32>
    %251 = math.tanh %250 : vector<8x32xf32>
    %cst_132 = arith.constant 5.000000e-01 : f32
    %252 = vector.broadcast %cst_132 : f32 to vector<8x32xf32>
    %253 = arith.mulf %252, %251 : vector<8x32xf32>
    %cst_133 = arith.constant 5.000000e-01 : f32
    %254 = vector.broadcast %cst_133 : f32 to vector<8x32xf32>
    %255 = arith.addf %253, %254 : vector<8x32xf32>
    %cst_134 = arith.constant 5.000000e-01 : f32
    %256 = vector.broadcast %cst_134 : f32 to vector<8x32xf32>
    %257 = arith.mulf %256, %240 : vector<8x32xf32>
    %258 = math.tanh %257 : vector<8x32xf32>
    %cst_135 = arith.constant 5.000000e-01 : f32
    %259 = vector.broadcast %cst_135 : f32 to vector<8x32xf32>
    %260 = arith.mulf %259, %258 : vector<8x32xf32>
    %cst_136 = arith.constant 5.000000e-01 : f32
    %261 = vector.broadcast %cst_136 : f32 to vector<8x32xf32>
    %262 = arith.addf %260, %261 : vector<8x32xf32>
    %263 = math.tanh %244 : vector<8x32xf32>
    %cst_137 = arith.constant 5.000000e-01 : f32
    %264 = vector.broadcast %cst_137 : f32 to vector<8x32xf32>
    %265 = arith.mulf %264, %248 : vector<8x32xf32>
    %266 = math.tanh %265 : vector<8x32xf32>
    %cst_138 = arith.constant 5.000000e-01 : f32
    %267 = vector.broadcast %cst_138 : f32 to vector<8x32xf32>
    %268 = arith.mulf %267, %266 : vector<8x32xf32>
    %cst_139 = arith.constant 5.000000e-01 : f32
    %269 = vector.broadcast %cst_139 : f32 to vector<8x32xf32>
    %270 = arith.addf %268, %269 : vector<8x32xf32>
    %271 = arith.mulf %262, %226 : vector<8x32xf32>
    %272 = arith.mulf %255, %263 : vector<8x32xf32>
    %273 = arith.addf %271, %272 : vector<8x32xf32>
    %274 = math.tanh %273 : vector<8x32xf32>
    %275 = arith.mulf %270, %274 : vector<8x32xf32>
    %276 = arith.index_cast %232 : i32 to index
    %c0_140 = arith.constant 0 : index
    %277 = vector.load %arg12[%276, %c0_140] : memref<64x32xf32, #tpu.memory_space<vmem>>, vector<8x32xf32>
    tpu.vector_store %arg12[%276, %c0_140], %275 {strides = array<i32>} : memref<64x32xf32, #tpu.memory_space<vmem>>, vector<8x32xf32>,
    %c5_i32 = arith.constant 5 : i32
    %c8_i32_141 = arith.constant 8 : i32
    %278 = arith.muli %c5_i32, %c8_i32_141 : i32
    %279 = tpu.assume_multiple %278, 8 : i32
    %280 = arith.index_cast %279 : i32 to index
    %c0_142 = arith.constant 0 : index
    %281 = vector.load %arg13[%280, %c0_142] : memref<64x32xf32, #tpu.memory_space<vmem>>, vector<8x32xf32>
    %cst_143 = arith.constant dense<0.000000e+00> : vector<8x32xf32>
    %282 = tpu.matmul %275, %34, %cst_143 {dimension_numbers = #tpu.dot_dimension_numbers<[1], [0], [0], [1], [0, 0, 1, 1], [], []>} : vector<8x32xf32>, vector<32x32xf32>, vector<8x32xf32> -> vector<8x32xf32>
    %283 = arith.addf %281, %282 : vector<8x32xf32>
    %284 = arith.index_cast %279 : i32 to index
    %c0_144 = arith.constant 0 : index
    %285 = vector.load %arg14[%284, %c0_144] : memref<64x32xf32, #tpu.memory_space<vmem>>, vector<8x32xf32>
    %cst_145 = arith.constant dense<0.000000e+00> : vector<8x32xf32>
    %286 = tpu.matmul %275, %36, %cst_145 {dimension_numbers = #tpu.dot_dimension_numbers<[1], [0], [0], [1], [0, 0, 1, 1], [], []>} : vector<8x32xf32>, vector<32x32xf32>, vector<8x32xf32> -> vector<8x32xf32>
    %287 = arith.addf %285, %286 : vector<8x32xf32>
    %288 = arith.index_cast %279 : i32 to index
    %c0_146 = arith.constant 0 : index
    %289 = vector.load %arg15[%288, %c0_146] : memref<64x32xf32, #tpu.memory_space<vmem>>, vector<8x32xf32>
    %cst_147 = arith.constant dense<0.000000e+00> : vector<8x32xf32>
    %290 = tpu.matmul %275, %38, %cst_147 {dimension_numbers = #tpu.dot_dimension_numbers<[1], [0], [0], [1], [0, 0, 1, 1], [], []>} : vector<8x32xf32>, vector<32x32xf32>, vector<8x32xf32> -> vector<8x32xf32>
    %291 = arith.addf %289, %290 : vector<8x32xf32>
    %292 = arith.index_cast %279 : i32 to index
    %c0_148 = arith.constant 0 : index
    %293 = vector.load %arg16[%292, %c0_148] : memref<64x32xf32, #tpu.memory_space<vmem>>, vector<8x32xf32>
    %cst_149 = arith.constant dense<0.000000e+00> : vector<8x32xf32>
    %294 = tpu.matmul %275, %40, %cst_149 {dimension_numbers = #tpu.dot_dimension_numbers<[1], [0], [0], [1], [0, 0, 1, 1], [], []>} : vector<8x32xf32>, vector<32x32xf32>, vector<8x32xf32> -> vector<8x32xf32>
    %295 = arith.addf %293, %294 : vector<8x32xf32>
    %cst_150 = arith.constant 5.000000e-01 : f32
    %296 = vector.broadcast %cst_150 : f32 to vector<8x32xf32>
    %297 = arith.mulf %296, %283 : vector<8x32xf32>
    %298 = math.tanh %297 : vector<8x32xf32>
    %cst_151 = arith.constant 5.000000e-01 : f32
    %299 = vector.broadcast %cst_151 : f32 to vector<8x32xf32>
    %300 = arith.mulf %299, %298 : vector<8x32xf32>
    %cst_152 = arith.constant 5.000000e-01 : f32
    %301 = vector.broadcast %cst_152 : f32 to vector<8x32xf32>
    %302 = arith.addf %300, %301 : vector<8x32xf32>
    %cst_153 = arith.constant 5.000000e-01 : f32
    %303 = vector.broadcast %cst_153 : f32 to vector<8x32xf32>
    %304 = arith.mulf %303, %287 : vector<8x32xf32>
    %305 = math.tanh %304 : vector<8x32xf32>
    %cst_154 = arith.constant 5.000000e-01 : f32
    %306 = vector.broadcast %cst_154 : f32 to vector<8x32xf32>
    %307 = arith.mulf %306, %305 : vector<8x32xf32>
    %cst_155 = arith.constant 5.000000e-01 : f32
    %308 = vector.broadcast %cst_155 : f32 to vector<8x32xf32>
    %309 = arith.addf %307, %308 : vector<8x32xf32>
    %310 = math.tanh %291 : vector<8x32xf32>
    %cst_156 = arith.constant 5.000000e-01 : f32
    %311 = vector.broadcast %cst_156 : f32 to vector<8x32xf32>
    %312 = arith.mulf %311, %295 : vector<8x32xf32>
    %313 = math.tanh %312 : vector<8x32xf32>
    %cst_157 = arith.constant 5.000000e-01 : f32
    %314 = vector.broadcast %cst_157 : f32 to vector<8x32xf32>
    %315 = arith.mulf %314, %313 : vector<8x32xf32>
    %cst_158 = arith.constant 5.000000e-01 : f32
    %316 = vector.broadcast %cst_158 : f32 to vector<8x32xf32>
    %317 = arith.addf %315, %316 : vector<8x32xf32>
    %318 = arith.mulf %309, %273 : vector<8x32xf32>
    %319 = arith.mulf %302, %310 : vector<8x32xf32>
    %320 = arith.addf %318, %319 : vector<8x32xf32>
    %321 = math.tanh %320 : vector<8x32xf32>
    %322 = arith.mulf %317, %321 : vector<8x32xf32>
    %323 = arith.index_cast %279 : i32 to index
    %c0_159 = arith.constant 0 : index
    %324 = vector.load %arg12[%323, %c0_159] : memref<64x32xf32, #tpu.memory_space<vmem>>, vector<8x32xf32>
    tpu.vector_store %arg12[%323, %c0_159], %322 {strides = array<i32>} : memref<64x32xf32, #tpu.memory_space<vmem>>, vector<8x32xf32>,
    %c6_i32 = arith.constant 6 : i32
    %c8_i32_160 = arith.constant 8 : i32
    %325 = arith.muli %c6_i32, %c8_i32_160 : i32
    %326 = tpu.assume_multiple %325, 8 : i32
    %327 = arith.index_cast %326 : i32 to index
    %c0_161 = arith.constant 0 : index
    %328 = vector.load %arg13[%327, %c0_161] : memref<64x32xf32, #tpu.memory_space<vmem>>, vector<8x32xf32>
    %cst_162 = arith.constant dense<0.000000e+00> : vector<8x32xf32>
    %329 = tpu.matmul %322, %34, %cst_162 {dimension_numbers = #tpu.dot_dimension_numbers<[1], [0], [0], [1], [0, 0, 1, 1], [], []>} : vector<8x32xf32>, vector<32x32xf32>, vector<8x32xf32> -> vector<8x32xf32>
    %330 = arith.addf %328, %329 : vector<8x32xf32>
    %331 = arith.index_cast %326 : i32 to index
    %c0_163 = arith.constant 0 : index
    %332 = vector.load %arg14[%331, %c0_163] : memref<64x32xf32, #tpu.memory_space<vmem>>, vector<8x32xf32>
    %cst_164 = arith.constant dense<0.000000e+00> : vector<8x32xf32>
    %333 = tpu.matmul %322, %36, %cst_164 {dimension_numbers = #tpu.dot_dimension_numbers<[1], [0], [0], [1], [0, 0, 1, 1], [], []>} : vector<8x32xf32>, vector<32x32xf32>, vector<8x32xf32> -> vector<8x32xf32>
    %334 = arith.addf %332, %333 : vector<8x32xf32>
    %335 = arith.index_cast %326 : i32 to index
    %c0_165 = arith.constant 0 : index
    %336 = vector.load %arg15[%335, %c0_165] : memref<64x32xf32, #tpu.memory_space<vmem>>, vector<8x32xf32>
    %cst_166 = arith.constant dense<0.000000e+00> : vector<8x32xf32>
    %337 = tpu.matmul %322, %38, %cst_166 {dimension_numbers = #tpu.dot_dimension_numbers<[1], [0], [0], [1], [0, 0, 1, 1], [], []>} : vector<8x32xf32>, vector<32x32xf32>, vector<8x32xf32> -> vector<8x32xf32>
    %338 = arith.addf %336, %337 : vector<8x32xf32>
    %339 = arith.index_cast %326 : i32 to index
    %c0_167 = arith.constant 0 : index
    %340 = vector.load %arg16[%339, %c0_167] : memref<64x32xf32, #tpu.memory_space<vmem>>, vector<8x32xf32>
    %cst_168 = arith.constant dense<0.000000e+00> : vector<8x32xf32>
    %341 = tpu.matmul %322, %40, %cst_168 {dimension_numbers = #tpu.dot_dimension_numbers<[1], [0], [0], [1], [0, 0, 1, 1], [], []>} : vector<8x32xf32>, vector<32x32xf32>, vector<8x32xf32> -> vector<8x32xf32>
    %342 = arith.addf %340, %341 : vector<8x32xf32>
    %cst_169 = arith.constant 5.000000e-01 : f32
    %343 = vector.broadcast %cst_169 : f32 to vector<8x32xf32>
    %344 = arith.mulf %343, %330 : vector<8x32xf32>
    %345 = math.tanh %344 : vector<8x32xf32>
    %cst_170 = arith.constant 5.000000e-01 : f32
    %346 = vector.broadcast %cst_170 : f32 to vector<8x32xf32>
    %347 = arith.mulf %346, %345 : vector<8x32xf32>
    %cst_171 = arith.constant 5.000000e-01 : f32
    %348 = vector.broadcast %cst_171 : f32 to vector<8x32xf32>
    %349 = arith.addf %347, %348 : vector<8x32xf32>
    %cst_172 = arith.constant 5.000000e-01 : f32
    %350 = vector.broadcast %cst_172 : f32 to vector<8x32xf32>
    %351 = arith.mulf %350, %334 : vector<8x32xf32>
    %352 = math.tanh %351 : vector<8x32xf32>
    %cst_173 = arith.constant 5.000000e-01 : f32
    %353 = vector.broadcast %cst_173 : f32 to vector<8x32xf32>
    %354 = arith.mulf %353, %352 : vector<8x32xf32>
    %cst_174 = arith.constant 5.000000e-01 : f32
    %355 = vector.broadcast %cst_174 : f32 to vector<8x32xf32>
    %356 = arith.addf %354, %355 : vector<8x32xf32>
    %357 = math.tanh %338 : vector<8x32xf32>
    %cst_175 = arith.constant 5.000000e-01 : f32
    %358 = vector.broadcast %cst_175 : f32 to vector<8x32xf32>
    %359 = arith.mulf %358, %342 : vector<8x32xf32>
    %360 = math.tanh %359 : vector<8x32xf32>
    %cst_176 = arith.constant 5.000000e-01 : f32
    %361 = vector.broadcast %cst_176 : f32 to vector<8x32xf32>
    %362 = arith.mulf %361, %360 : vector<8x32xf32>
    %cst_177 = arith.constant 5.000000e-01 : f32
    %363 = vector.broadcast %cst_177 : f32 to vector<8x32xf32>
    %364 = arith.addf %362, %363 : vector<8x32xf32>
    %365 = arith.mulf %356, %320 : vector<8x32xf32>
    %366 = arith.mulf %349, %357 : vector<8x32xf32>
    %367 = arith.addf %365, %366 : vector<8x32xf32>
    %368 = math.tanh %367 : vector<8x32xf32>
    %369 = arith.mulf %364, %368 : vector<8x32xf32>
    %370 = arith.index_cast %326 : i32 to index
    %c0_178 = arith.constant 0 : index
    %371 = vector.load %arg12[%370, %c0_178] : memref<64x32xf32, #tpu.memory_space<vmem>>, vector<8x32xf32>
    tpu.vector_store %arg12[%370, %c0_178], %369 {strides = array<i32>} : memref<64x32xf32, #tpu.memory_space<vmem>>, vector<8x32xf32>,
    %c7_i32 = arith.constant 7 : i32
    %c8_i32_179 = arith.constant 8 : i32
    %372 = arith.muli %c7_i32, %c8_i32_179 : i32
    %373 = tpu.assume_multiple %372, 8 : i32
    %374 = arith.index_cast %373 : i32 to index
    %c0_180 = arith.constant 0 : index
    %375 = vector.load %arg13[%374, %c0_180] : memref<64x32xf32, #tpu.memory_space<vmem>>, vector<8x32xf32>
    %cst_181 = arith.constant dense<0.000000e+00> : vector<8x32xf32>
    %376 = tpu.matmul %369, %34, %cst_181 {dimension_numbers = #tpu.dot_dimension_numbers<[1], [0], [0], [1], [0, 0, 1, 1], [], []>} : vector<8x32xf32>, vector<32x32xf32>, vector<8x32xf32> -> vector<8x32xf32>
    %377 = arith.addf %375, %376 : vector<8x32xf32>
    %378 = arith.index_cast %373 : i32 to index
    %c0_182 = arith.constant 0 : index
    %379 = vector.load %arg14[%378, %c0_182] : memref<64x32xf32, #tpu.memory_space<vmem>>, vector<8x32xf32>
    %cst_183 = arith.constant dense<0.000000e+00> : vector<8x32xf32>
    %380 = tpu.matmul %369, %36, %cst_183 {dimension_numbers = #tpu.dot_dimension_numbers<[1], [0], [0], [1], [0, 0, 1, 1], [], []>} : vector<8x32xf32>, vector<32x32xf32>, vector<8x32xf32> -> vector<8x32xf32>
    %381 = arith.addf %379, %380 : vector<8x32xf32>
    %382 = arith.index_cast %373 : i32 to index
    %c0_184 = arith.constant 0 : index
    %383 = vector.load %arg15[%382, %c0_184] : memref<64x32xf32, #tpu.memory_space<vmem>>, vector<8x32xf32>
    %cst_185 = arith.constant dense<0.000000e+00> : vector<8x32xf32>
    %384 = tpu.matmul %369, %38, %cst_185 {dimension_numbers = #tpu.dot_dimension_numbers<[1], [0], [0], [1], [0, 0, 1, 1], [], []>} : vector<8x32xf32>, vector<32x32xf32>, vector<8x32xf32> -> vector<8x32xf32>
    %385 = arith.addf %383, %384 : vector<8x32xf32>
    %386 = arith.index_cast %373 : i32 to index
    %c0_186 = arith.constant 0 : index
    %387 = vector.load %arg16[%386, %c0_186] : memref<64x32xf32, #tpu.memory_space<vmem>>, vector<8x32xf32>
    %cst_187 = arith.constant dense<0.000000e+00> : vector<8x32xf32>
    %388 = tpu.matmul %369, %40, %cst_187 {dimension_numbers = #tpu.dot_dimension_numbers<[1], [0], [0], [1], [0, 0, 1, 1], [], []>} : vector<8x32xf32>, vector<32x32xf32>, vector<8x32xf32> -> vector<8x32xf32>
    %389 = arith.addf %387, %388 : vector<8x32xf32>
    %cst_188 = arith.constant 5.000000e-01 : f32
    %390 = vector.broadcast %cst_188 : f32 to vector<8x32xf32>
    %391 = arith.mulf %390, %377 : vector<8x32xf32>
    %392 = math.tanh %391 : vector<8x32xf32>
    %cst_189 = arith.constant 5.000000e-01 : f32
    %393 = vector.broadcast %cst_189 : f32 to vector<8x32xf32>
    %394 = arith.mulf %393, %392 : vector<8x32xf32>
    %cst_190 = arith.constant 5.000000e-01 : f32
    %395 = vector.broadcast %cst_190 : f32 to vector<8x32xf32>
    %396 = arith.addf %394, %395 : vector<8x32xf32>
    %cst_191 = arith.constant 5.000000e-01 : f32
    %397 = vector.broadcast %cst_191 : f32 to vector<8x32xf32>
    %398 = arith.mulf %397, %381 : vector<8x32xf32>
    %399 = math.tanh %398 : vector<8x32xf32>
    %cst_192 = arith.constant 5.000000e-01 : f32
    %400 = vector.broadcast %cst_192 : f32 to vector<8x32xf32>
    %401 = arith.mulf %400, %399 : vector<8x32xf32>
    %cst_193 = arith.constant 5.000000e-01 : f32
    %402 = vector.broadcast %cst_193 : f32 to vector<8x32xf32>
    %403 = arith.addf %401, %402 : vector<8x32xf32>
    %404 = math.tanh %385 : vector<8x32xf32>
    %cst_194 = arith.constant 5.000000e-01 : f32
    %405 = vector.broadcast %cst_194 : f32 to vector<8x32xf32>
    %406 = arith.mulf %405, %389 : vector<8x32xf32>
    %407 = math.tanh %406 : vector<8x32xf32>
    %cst_195 = arith.constant 5.000000e-01 : f32
    %408 = vector.broadcast %cst_195 : f32 to vector<8x32xf32>
    %409 = arith.mulf %408, %407 : vector<8x32xf32>
    %cst_196 = arith.constant 5.000000e-01 : f32
    %410 = vector.broadcast %cst_196 : f32 to vector<8x32xf32>
    %411 = arith.addf %409, %410 : vector<8x32xf32>
    %412 = arith.mulf %403, %367 : vector<8x32xf32>
    %413 = arith.mulf %396, %404 : vector<8x32xf32>
    %414 = arith.addf %412, %413 : vector<8x32xf32>
    %415 = math.tanh %414 : vector<8x32xf32>
    %416 = arith.mulf %411, %415 : vector<8x32xf32>
    %417 = arith.index_cast %373 : i32 to index
    %c0_197 = arith.constant 0 : index
    %418 = vector.load %arg12[%417, %c0_197] : memref<64x32xf32, #tpu.memory_space<vmem>>, vector<8x32xf32>
    tpu.vector_store %arg12[%417, %c0_197], %416 {strides = array<i32>} : memref<64x32xf32, #tpu.memory_space<vmem>>, vector<8x32xf32>,
    %c8_i32_198 = arith.constant 8 : i32
    %c0_199 = arith.constant 0 : index
    %c0_200 = arith.constant 0 : index
    %419 = vector.load %arg12[%c0_199, %c0_200] : memref<64x32xf32, #tpu.memory_space<vmem>>, vector<64x32xf32>
    %c0_201 = arith.constant 0 : index
    %c0_202 = arith.constant 0 : index
    %c0_203 = arith.constant 0 : index
    %420 = vector.load %arg4[%c0_201, %c0_202, %c0_203] : memref<4x32x32xf32, #tpu.memory_space<vmem>>, vector<1x32x32xf32>
    %421 = vector.shape_cast %420 : vector<1x32x32xf32> to vector<32x32xf32>
    %cst_204 = arith.constant dense<0.000000e+00> : vector<64x32xf32>
    %422 = tpu.matmul %419, %421, %cst_204 {dimension_numbers = #tpu.dot_dimension_numbers<[1], [0], [0], [1], [0, 0, 1, 1], [], []>} : vector<64x32xf32>, vector<32x32xf32>, vector<64x32xf32> -> vector<64x32xf32>
    %c0_205 = arith.constant 0 : index
    %c0_206 = arith.constant 0 : index
    %c0_207 = arith.constant 0 : index
    %423 = vector.load %arg6[%c0_205, %c0_206, %c0_207] : memref<4x1x32xf32, #tpu.memory_space<vmem>>, vector<1x1x32xf32>
    %424 = vector.shape_cast %423 : vector<1x1x32xf32> to vector<1x32xf32>
    %425 = vector.broadcast %424 : vector<1x32xf32> to vector<64x32xf32>
    %426 = arith.addf %422, %425 : vector<64x32xf32>
    %c0_208 = arith.constant 0 : index
    %c0_209 = arith.constant 0 : index
    %427 = vector.load %arg13[%c0_208, %c0_209] : memref<64x32xf32, #tpu.memory_space<vmem>>, vector<64x32xf32>
    tpu.vector_store %arg13[%c0_208, %c0_209], %426 {strides = array<i32>} : memref<64x32xf32, #tpu.memory_space<vmem>>, vector<64x32xf32>,
    %c1_210 = arith.constant 1 : index
    %c0_211 = arith.constant 0 : index
    %c0_212 = arith.constant 0 : index
    %428 = vector.load %arg4[%c1_210, %c0_211, %c0_212] : memref<4x32x32xf32, #tpu.memory_space<vmem>>, vector<1x32x32xf32>
    %429 = vector.shape_cast %428 : vector<1x32x32xf32> to vector<32x32xf32>
    %cst_213 = arith.constant dense<0.000000e+00> : vector<64x32xf32>
    %430 = tpu.matmul %419, %429, %cst_213 {dimension_numbers = #tpu.dot_dimension_numbers<[1], [0], [0], [1], [0, 0, 1, 1], [], []>} : vector<64x32xf32>, vector<32x32xf32>, vector<64x32xf32> -> vector<64x32xf32>
    %c1_214 = arith.constant 1 : index
    %c0_215 = arith.constant 0 : index
    %c0_216 = arith.constant 0 : index
    %431 = vector.load %arg6[%c1_214, %c0_215, %c0_216] : memref<4x1x32xf32, #tpu.memory_space<vmem>>, vector<1x1x32xf32>
    %432 = vector.shape_cast %431 : vector<1x1x32xf32> to vector<1x32xf32>
    %433 = vector.broadcast %432 : vector<1x32xf32> to vector<64x32xf32>
    %434 = arith.addf %430, %433 : vector<64x32xf32>
    %c0_217 = arith.constant 0 : index
    %c0_218 = arith.constant 0 : index
    %435 = vector.load %arg14[%c0_217, %c0_218] : memref<64x32xf32, #tpu.memory_space<vmem>>, vector<64x32xf32>
    tpu.vector_store %arg14[%c0_217, %c0_218], %434 {strides = array<i32>} : memref<64x32xf32, #tpu.memory_space<vmem>>, vector<64x32xf32>,
    %c2_219 = arith.constant 2 : index
    %c0_220 = arith.constant 0 : index
    %c0_221 = arith.constant 0 : index
    %436 = vector.load %arg4[%c2_219, %c0_220, %c0_221] : memref<4x32x32xf32, #tpu.memory_space<vmem>>, vector<1x32x32xf32>
    %437 = vector.shape_cast %436 : vector<1x32x32xf32> to vector<32x32xf32>
    %cst_222 = arith.constant dense<0.000000e+00> : vector<64x32xf32>
    %438 = tpu.matmul %419, %437, %cst_222 {dimension_numbers = #tpu.dot_dimension_numbers<[1], [0], [0], [1], [0, 0, 1, 1], [], []>} : vector<64x32xf32>, vector<32x32xf32>, vector<64x32xf32> -> vector<64x32xf32>
    %c2_223 = arith.constant 2 : index
    %c0_224 = arith.constant 0 : index
    %c0_225 = arith.constant 0 : index
    %439 = vector.load %arg6[%c2_223, %c0_224, %c0_225] : memref<4x1x32xf32, #tpu.memory_space<vmem>>, vector<1x1x32xf32>
    %440 = vector.shape_cast %439 : vector<1x1x32xf32> to vector<1x32xf32>
    %441 = vector.broadcast %440 : vector<1x32xf32> to vector<64x32xf32>
    %442 = arith.addf %438, %441 : vector<64x32xf32>
    %c0_226 = arith.constant 0 : index
    %c0_227 = arith.constant 0 : index
    %443 = vector.load %arg15[%c0_226, %c0_227] : memref<64x32xf32, #tpu.memory_space<vmem>>, vector<64x32xf32>
    tpu.vector_store %arg15[%c0_226, %c0_227], %442 {strides = array<i32>} : memref<64x32xf32, #tpu.memory_space<vmem>>, vector<64x32xf32>,
    %c3_228 = arith.constant 3 : index
    %c0_229 = arith.constant 0 : index
    %c0_230 = arith.constant 0 : index
    %444 = vector.load %arg4[%c3_228, %c0_229, %c0_230] : memref<4x32x32xf32, #tpu.memory_space<vmem>>, vector<1x32x32xf32>
    %445 = vector.shape_cast %444 : vector<1x32x32xf32> to vector<32x32xf32>
    %cst_231 = arith.constant dense<0.000000e+00> : vector<64x32xf32>
    %446 = tpu.matmul %419, %445, %cst_231 {dimension_numbers = #tpu.dot_dimension_numbers<[1], [0], [0], [1], [0, 0, 1, 1], [], []>} : vector<64x32xf32>, vector<32x32xf32>, vector<64x32xf32> -> vector<64x32xf32>
    %c3_232 = arith.constant 3 : index
    %c0_233 = arith.constant 0 : index
    %c0_234 = arith.constant 0 : index
    %447 = vector.load %arg6[%c3_232, %c0_233, %c0_234] : memref<4x1x32xf32, #tpu.memory_space<vmem>>, vector<1x1x32xf32>
    %448 = vector.shape_cast %447 : vector<1x1x32xf32> to vector<1x32xf32>
    %449 = vector.broadcast %448 : vector<1x32xf32> to vector<64x32xf32>
    %450 = arith.addf %446, %449 : vector<64x32xf32>
    %c0_235 = arith.constant 0 : index
    %c0_236 = arith.constant 0 : index
    %451 = vector.load %arg16[%c0_235, %c0_236] : memref<64x32xf32, #tpu.memory_space<vmem>>, vector<64x32xf32>
    tpu.vector_store %arg16[%c0_235, %c0_236], %450 {strides = array<i32>} : memref<64x32xf32, #tpu.memory_space<vmem>>, vector<64x32xf32>,
    %c0_237 = arith.constant 0 : index
    %c0_238 = arith.constant 0 : index
    %c0_239 = arith.constant 0 : index
    %452 = vector.load %arg5[%c0_237, %c0_238, %c0_239] : memref<4x32x32xf32, #tpu.memory_space<vmem>>, vector<1x32x32xf32>
    %453 = vector.shape_cast %452 : vector<1x32x32xf32> to vector<32x32xf32>
    %c1_240 = arith.constant 1 : index
    %c0_241 = arith.constant 0 : index
    %c0_242 = arith.constant 0 : index
    %454 = vector.load %arg5[%c1_240, %c0_241, %c0_242] : memref<4x32x32xf32, #tpu.memory_space<vmem>>, vector<1x32x32xf32>
    %455 = vector.shape_cast %454 : vector<1x32x32xf32> to vector<32x32xf32>
    %c2_243 = arith.constant 2 : index
    %c0_244 = arith.constant 0 : index
    %c0_245 = arith.constant 0 : index
    %456 = vector.load %arg5[%c2_243, %c0_244, %c0_245] : memref<4x32x32xf32, #tpu.memory_space<vmem>>, vector<1x32x32xf32>
    %457 = vector.shape_cast %456 : vector<1x32x32xf32> to vector<32x32xf32>
    %c3_246 = arith.constant 3 : index
    %c0_247 = arith.constant 0 : index
    %c0_248 = arith.constant 0 : index
    %458 = vector.load %arg5[%c3_246, %c0_247, %c0_248] : memref<4x32x32xf32, #tpu.memory_space<vmem>>, vector<1x32x32xf32>
    %459 = vector.shape_cast %458 : vector<1x32x32xf32> to vector<32x32xf32>
    %cst_249 = arith.constant 0.000000e+00 : f32
    %460 = vector.broadcast %cst_249 : f32 to vector<8x32xf32>
    %cst_250 = arith.constant 0.000000e+00 : f32
    %461 = vector.broadcast %cst_250 : f32 to vector<8x32xf32>
    %c0_i32_251 = arith.constant 0 : i32
    %c8_i32_252 = arith.constant 8 : i32
    %462 = arith.muli %c0_i32_251, %c8_i32_252 : i32
    %463 = tpu.assume_multiple %462, 8 : i32
    %464 = arith.index_cast %463 : i32 to index
    %c0_253 = arith.constant 0 : index
    %465 = vector.load %arg13[%464, %c0_253] : memref<64x32xf32, #tpu.memory_space<vmem>>, vector<8x32xf32>
    %cst_254 = arith.constant dense<0.000000e+00> : vector<8x32xf32>
    %466 = tpu.matmul %460, %453, %cst_254 {dimension_numbers = #tpu.dot_dimension_numbers<[1], [0], [0], [1], [0, 0, 1, 1], [], []>} : vector<8x32xf32>, vector<32x32xf32>, vector<8x32xf32> -> vector<8x32xf32>
    %467 = arith.addf %465, %466 : vector<8x32xf32>
    %468 = arith.index_cast %463 : i32 to index
    %c0_255 = arith.constant 0 : index
    %469 = vector.load %arg14[%468, %c0_255] : memref<64x32xf32, #tpu.memory_space<vmem>>, vector<8x32xf32>
    %cst_256 = arith.constant dense<0.000000e+00> : vector<8x32xf32>
    %470 = tpu.matmul %460, %455, %cst_256 {dimension_numbers = #tpu.dot_dimension_numbers<[1], [0], [0], [1], [0, 0, 1, 1], [], []>} : vector<8x32xf32>, vector<32x32xf32>, vector<8x32xf32> -> vector<8x32xf32>
    %471 = arith.addf %469, %470 : vector<8x32xf32>
    %472 = arith.index_cast %463 : i32 to index
    %c0_257 = arith.constant 0 : index
    %473 = vector.load %arg15[%472, %c0_257] : memref<64x32xf32, #tpu.memory_space<vmem>>, vector<8x32xf32>
    %cst_258 = arith.constant dense<0.000000e+00> : vector<8x32xf32>
    %474 = tpu.matmul %460, %457, %cst_258 {dimension_numbers = #tpu.dot_dimension_numbers<[1], [0], [0], [1], [0, 0, 1, 1], [], []>} : vector<8x32xf32>, vector<32x32xf32>, vector<8x32xf32> -> vector<8x32xf32>
    %475 = arith.addf %473, %474 : vector<8x32xf32>
    %476 = arith.index_cast %463 : i32 to index
    %c0_259 = arith.constant 0 : index
    %477 = vector.load %arg16[%476, %c0_259] : memref<64x32xf32, #tpu.memory_space<vmem>>, vector<8x32xf32>
    %cst_260 = arith.constant dense<0.000000e+00> : vector<8x32xf32>
    %478 = tpu.matmul %460, %459, %cst_260 {dimension_numbers = #tpu.dot_dimension_numbers<[1], [0], [0], [1], [0, 0, 1, 1], [], []>} : vector<8x32xf32>, vector<32x32xf32>, vector<8x32xf32> -> vector<8x32xf32>
    %479 = arith.addf %477, %478 : vector<8x32xf32>
    %cst_261 = arith.constant 5.000000e-01 : f32
    %480 = vector.broadcast %cst_261 : f32 to vector<8x32xf32>
    %481 = arith.mulf %480, %467 : vector<8x32xf32>
    %482 = math.tanh %481 : vector<8x32xf32>
    %cst_262 = arith.constant 5.000000e-01 : f32
    %483 = vector.broadcast %cst_262 : f32 to vector<8x32xf32>
    %484 = arith.mulf %483, %482 : vector<8x32xf32>
    %cst_263 = arith.constant 5.000000e-01 : f32
    %485 = vector.broadcast %cst_263 : f32 to vector<8x32xf32>
    %486 = arith.addf %484, %485 : vector<8x32xf32>
    %cst_264 = arith.constant 5.000000e-01 : f32
    %487 = vector.broadcast %cst_264 : f32 to vector<8x32xf32>
    %488 = arith.mulf %487, %471 : vector<8x32xf32>
    %489 = math.tanh %488 : vector<8x32xf32>
    %cst_265 = arith.constant 5.000000e-01 : f32
    %490 = vector.broadcast %cst_265 : f32 to vector<8x32xf32>
    %491 = arith.mulf %490, %489 : vector<8x32xf32>
    %cst_266 = arith.constant 5.000000e-01 : f32
    %492 = vector.broadcast %cst_266 : f32 to vector<8x32xf32>
    %493 = arith.addf %491, %492 : vector<8x32xf32>
    %494 = math.tanh %475 : vector<8x32xf32>
    %cst_267 = arith.constant 5.000000e-01 : f32
    %495 = vector.broadcast %cst_267 : f32 to vector<8x32xf32>
    %496 = arith.mulf %495, %479 : vector<8x32xf32>
    %497 = math.tanh %496 : vector<8x32xf32>
    %cst_268 = arith.constant 5.000000e-01 : f32
    %498 = vector.broadcast %cst_268 : f32 to vector<8x32xf32>
    %499 = arith.mulf %498, %497 : vector<8x32xf32>
    %cst_269 = arith.constant 5.000000e-01 : f32
    %500 = vector.broadcast %cst_269 : f32 to vector<8x32xf32>
    %501 = arith.addf %499, %500 : vector<8x32xf32>
    %502 = arith.mulf %493, %461 : vector<8x32xf32>
    %503 = arith.mulf %486, %494 : vector<8x32xf32>
    %504 = arith.addf %502, %503 : vector<8x32xf32>
    %505 = math.tanh %504 : vector<8x32xf32>
    %506 = arith.mulf %501, %505 : vector<8x32xf32>
    %507 = arith.index_cast %463 : i32 to index
    %c0_270 = arith.constant 0 : index
    %508 = vector.load %arg12[%507, %c0_270] : memref<64x32xf32, #tpu.memory_space<vmem>>, vector<8x32xf32>
    tpu.vector_store %arg12[%507, %c0_270], %506 {strides = array<i32>} : memref<64x32xf32, #tpu.memory_space<vmem>>, vector<8x32xf32>,
    %c1_i32_271 = arith.constant 1 : i32
    %c8_i32_272 = arith.constant 8 : i32
    %509 = arith.muli %c1_i32_271, %c8_i32_272 : i32
    %510 = tpu.assume_multiple %509, 8 : i32
    %511 = arith.index_cast %510 : i32 to index
    %c0_273 = arith.constant 0 : index
    %512 = vector.load %arg13[%511, %c0_273] : memref<64x32xf32, #tpu.memory_space<vmem>>, vector<8x32xf32>
    %cst_274 = arith.constant dense<0.000000e+00> : vector<8x32xf32>
    %513 = tpu.matmul %506, %453, %cst_274 {dimension_numbers = #tpu.dot_dimension_numbers<[1], [0], [0], [1], [0, 0, 1, 1], [], []>} : vector<8x32xf32>, vector<32x32xf32>, vector<8x32xf32> -> vector<8x32xf32>
    %514 = arith.addf %512, %513 : vector<8x32xf32>
    %515 = arith.index_cast %510 : i32 to index
    %c0_275 = arith.constant 0 : index
    %516 = vector.load %arg14[%515, %c0_275] : memref<64x32xf32, #tpu.memory_space<vmem>>, vector<8x32xf32>
    %cst_276 = arith.constant dense<0.000000e+00> : vector<8x32xf32>
    %517 = tpu.matmul %506, %455, %cst_276 {dimension_numbers = #tpu.dot_dimension_numbers<[1], [0], [0], [1], [0, 0, 1, 1], [], []>} : vector<8x32xf32>, vector<32x32xf32>, vector<8x32xf32> -> vector<8x32xf32>
    %518 = arith.addf %516, %517 : vector<8x32xf32>
    %519 = arith.index_cast %510 : i32 to index
    %c0_277 = arith.constant 0 : index
    %520 = vector.load %arg15[%519, %c0_277] : memref<64x32xf32, #tpu.memory_space<vmem>>, vector<8x32xf32>
    %cst_278 = arith.constant dense<0.000000e+00> : vector<8x32xf32>
    %521 = tpu.matmul %506, %457, %cst_278 {dimension_numbers = #tpu.dot_dimension_numbers<[1], [0], [0], [1], [0, 0, 1, 1], [], []>} : vector<8x32xf32>, vector<32x32xf32>, vector<8x32xf32> -> vector<8x32xf32>
    %522 = arith.addf %520, %521 : vector<8x32xf32>
    %523 = arith.index_cast %510 : i32 to index
    %c0_279 = arith.constant 0 : index
    %524 = vector.load %arg16[%523, %c0_279] : memref<64x32xf32, #tpu.memory_space<vmem>>, vector<8x32xf32>
    %cst_280 = arith.constant dense<0.000000e+00> : vector<8x32xf32>
    %525 = tpu.matmul %506, %459, %cst_280 {dimension_numbers = #tpu.dot_dimension_numbers<[1], [0], [0], [1], [0, 0, 1, 1], [], []>} : vector<8x32xf32>, vector<32x32xf32>, vector<8x32xf32> -> vector<8x32xf32>
    %526 = arith.addf %524, %525 : vector<8x32xf32>
    %cst_281 = arith.constant 5.000000e-01 : f32
    %527 = vector.broadcast %cst_281 : f32 to vector<8x32xf32>
    %528 = arith.mulf %527, %514 : vector<8x32xf32>
    %529 = math.tanh %528 : vector<8x32xf32>
    %cst_282 = arith.constant 5.000000e-01 : f32
    %530 = vector.broadcast %cst_282 : f32 to vector<8x32xf32>
    %531 = arith.mulf %530, %529 : vector<8x32xf32>
    %cst_283 = arith.constant 5.000000e-01 : f32
    %532 = vector.broadcast %cst_283 : f32 to vector<8x32xf32>
    %533 = arith.addf %531, %532 : vector<8x32xf32>
    %cst_284 = arith.constant 5.000000e-01 : f32
    %534 = vector.broadcast %cst_284 : f32 to vector<8x32xf32>
    %535 = arith.mulf %534, %518 : vector<8x32xf32>
    %536 = math.tanh %535 : vector<8x32xf32>
    %cst_285 = arith.constant 5.000000e-01 : f32
    %537 = vector.broadcast %cst_285 : f32 to vector<8x32xf32>
    %538 = arith.mulf %537, %536 : vector<8x32xf32>
    %cst_286 = arith.constant 5.000000e-01 : f32
    %539 = vector.broadcast %cst_286 : f32 to vector<8x32xf32>
    %540 = arith.addf %538, %539 : vector<8x32xf32>
    %541 = math.tanh %522 : vector<8x32xf32>
    %cst_287 = arith.constant 5.000000e-01 : f32
    %542 = vector.broadcast %cst_287 : f32 to vector<8x32xf32>
    %543 = arith.mulf %542, %526 : vector<8x32xf32>
    %544 = math.tanh %543 : vector<8x32xf32>
    %cst_288 = arith.constant 5.000000e-01 : f32
    %545 = vector.broadcast %cst_288 : f32 to vector<8x32xf32>
    %546 = arith.mulf %545, %544 : vector<8x32xf32>
    %cst_289 = arith.constant 5.000000e-01 : f32
    %547 = vector.broadcast %cst_289 : f32 to vector<8x32xf32>
    %548 = arith.addf %546, %547 : vector<8x32xf32>
    %549 = arith.mulf %540, %504 : vector<8x32xf32>
    %550 = arith.mulf %533, %541 : vector<8x32xf32>
    %551 = arith.addf %549, %550 : vector<8x32xf32>
    %552 = math.tanh %551 : vector<8x32xf32>
    %553 = arith.mulf %548, %552 : vector<8x32xf32>
    %554 = arith.index_cast %510 : i32 to index
    %c0_290 = arith.constant 0 : index
    %555 = vector.load %arg12[%554, %c0_290] : memref<64x32xf32, #tpu.memory_space<vmem>>, vector<8x32xf32>
    tpu.vector_store %arg12[%554, %c0_290], %553 {strides = array<i32>} : memref<64x32xf32, #tpu.memory_space<vmem>>, vector<8x32xf32>,
    %c2_i32_291 = arith.constant 2 : i32
    %c8_i32_292 = arith.constant 8 : i32
    %556 = arith.muli %c2_i32_291, %c8_i32_292 : i32
    %557 = tpu.assume_multiple %556, 8 : i32
    %558 = arith.index_cast %557 : i32 to index
    %c0_293 = arith.constant 0 : index
    %559 = vector.load %arg13[%558, %c0_293] : memref<64x32xf32, #tpu.memory_space<vmem>>, vector<8x32xf32>
    %cst_294 = arith.constant dense<0.000000e+00> : vector<8x32xf32>
    %560 = tpu.matmul %553, %453, %cst_294 {dimension_numbers = #tpu.dot_dimension_numbers<[1], [0], [0], [1], [0, 0, 1, 1], [], []>} : vector<8x32xf32>, vector<32x32xf32>, vector<8x32xf32> -> vector<8x32xf32>
    %561 = arith.addf %559, %560 : vector<8x32xf32>
    %562 = arith.index_cast %557 : i32 to index
    %c0_295 = arith.constant 0 : index
    %563 = vector.load %arg14[%562, %c0_295] : memref<64x32xf32, #tpu.memory_space<vmem>>, vector<8x32xf32>
    %cst_296 = arith.constant dense<0.000000e+00> : vector<8x32xf32>
    %564 = tpu.matmul %553, %455, %cst_296 {dimension_numbers = #tpu.dot_dimension_numbers<[1], [0], [0], [1], [0, 0, 1, 1], [], []>} : vector<8x32xf32>, vector<32x32xf32>, vector<8x32xf32> -> vector<8x32xf32>
    %565 = arith.addf %563, %564 : vector<8x32xf32>
    %566 = arith.index_cast %557 : i32 to index
    %c0_297 = arith.constant 0 : index
    %567 = vector.load %arg15[%566, %c0_297] : memref<64x32xf32, #tpu.memory_space<vmem>>, vector<8x32xf32>
    %cst_298 = arith.constant dense<0.000000e+00> : vector<8x32xf32>
    %568 = tpu.matmul %553, %457, %cst_298 {dimension_numbers = #tpu.dot_dimension_numbers<[1], [0], [0], [1], [0, 0, 1, 1], [], []>} : vector<8x32xf32>, vector<32x32xf32>, vector<8x32xf32> -> vector<8x32xf32>
    %569 = arith.addf %567, %568 : vector<8x32xf32>
    %570 = arith.index_cast %557 : i32 to index
    %c0_299 = arith.constant 0 : index
    %571 = vector.load %arg16[%570, %c0_299] : memref<64x32xf32, #tpu.memory_space<vmem>>, vector<8x32xf32>
    %cst_300 = arith.constant dense<0.000000e+00> : vector<8x32xf32>
    %572 = tpu.matmul %553, %459, %cst_300 {dimension_numbers = #tpu.dot_dimension_numbers<[1], [0], [0], [1], [0, 0, 1, 1], [], []>} : vector<8x32xf32>, vector<32x32xf32>, vector<8x32xf32> -> vector<8x32xf32>
    %573 = arith.addf %571, %572 : vector<8x32xf32>
    %cst_301 = arith.constant 5.000000e-01 : f32
    %574 = vector.broadcast %cst_301 : f32 to vector<8x32xf32>
    %575 = arith.mulf %574, %561 : vector<8x32xf32>
    %576 = math.tanh %575 : vector<8x32xf32>
    %cst_302 = arith.constant 5.000000e-01 : f32
    %577 = vector.broadcast %cst_302 : f32 to vector<8x32xf32>
    %578 = arith.mulf %577, %576 : vector<8x32xf32>
    %cst_303 = arith.constant 5.000000e-01 : f32
    %579 = vector.broadcast %cst_303 : f32 to vector<8x32xf32>
    %580 = arith.addf %578, %579 : vector<8x32xf32>
    %cst_304 = arith.constant 5.000000e-01 : f32
    %581 = vector.broadcast %cst_304 : f32 to vector<8x32xf32>
    %582 = arith.mulf %581, %565 : vector<8x32xf32>
    %583 = math.tanh %582 : vector<8x32xf32>
    %cst_305 = arith.constant 5.000000e-01 : f32
    %584 = vector.broadcast %cst_305 : f32 to vector<8x32xf32>
    %585 = arith.mulf %584, %583 : vector<8x32xf32>
    %cst_306 = arith.constant 5.000000e-01 : f32
    %586 = vector.broadcast %cst_306 : f32 to vector<8x32xf32>
    %587 = arith.addf %585, %586 : vector<8x32xf32>
    %588 = math.tanh %569 : vector<8x32xf32>
    %cst_307 = arith.constant 5.000000e-01 : f32
    %589 = vector.broadcast %cst_307 : f32 to vector<8x32xf32>
    %590 = arith.mulf %589, %573 : vector<8x32xf32>
    %591 = math.tanh %590 : vector<8x32xf32>
    %cst_308 = arith.constant 5.000000e-01 : f32
    %592 = vector.broadcast %cst_308 : f32 to vector<8x32xf32>
    %593 = arith.mulf %592, %591 : vector<8x32xf32>
    %cst_309 = arith.constant 5.000000e-01 : f32
    %594 = vector.broadcast %cst_309 : f32 to vector<8x32xf32>
    %595 = arith.addf %593, %594 : vector<8x32xf32>
    %596 = arith.mulf %587, %551 : vector<8x32xf32>
    %597 = arith.mulf %580, %588 : vector<8x32xf32>
    %598 = arith.addf %596, %597 : vector<8x32xf32>
    %599 = math.tanh %598 : vector<8x32xf32>
    %600 = arith.mulf %595, %599 : vector<8x32xf32>
    %601 = arith.index_cast %557 : i32 to index
    %c0_310 = arith.constant 0 : index
    %602 = vector.load %arg12[%601, %c0_310] : memref<64x32xf32, #tpu.memory_space<vmem>>, vector<8x32xf32>
    tpu.vector_store %arg12[%601, %c0_310], %600 {strides = array<i32>} : memref<64x32xf32, #tpu.memory_space<vmem>>, vector<8x32xf32>,
    %c3_i32_311 = arith.constant 3 : i32
    %c8_i32_312 = arith.constant 8 : i32
    %603 = arith.muli %c3_i32_311, %c8_i32_312 : i32
    %604 = tpu.assume_multiple %603, 8 : i32
    %605 = arith.index_cast %604 : i32 to index
    %c0_313 = arith.constant 0 : index
    %606 = vector.load %arg13[%605, %c0_313] : memref<64x32xf32, #tpu.memory_space<vmem>>, vector<8x32xf32>
    %cst_314 = arith.constant dense<0.000000e+00> : vector<8x32xf32>
    %607 = tpu.matmul %600, %453, %cst_314 {dimension_numbers = #tpu.dot_dimension_numbers<[1], [0], [0], [1], [0, 0, 1, 1], [], []>} : vector<8x32xf32>, vector<32x32xf32>, vector<8x32xf32> -> vector<8x32xf32>
    %608 = arith.addf %606, %607 : vector<8x32xf32>
    %609 = arith.index_cast %604 : i32 to index
    %c0_315 = arith.constant 0 : index
    %610 = vector.load %arg14[%609, %c0_315] : memref<64x32xf32, #tpu.memory_space<vmem>>, vector<8x32xf32>
    %cst_316 = arith.constant dense<0.000000e+00> : vector<8x32xf32>
    %611 = tpu.matmul %600, %455, %cst_316 {dimension_numbers = #tpu.dot_dimension_numbers<[1], [0], [0], [1], [0, 0, 1, 1], [], []>} : vector<8x32xf32>, vector<32x32xf32>, vector<8x32xf32> -> vector<8x32xf32>
    %612 = arith.addf %610, %611 : vector<8x32xf32>
    %613 = arith.index_cast %604 : i32 to index
    %c0_317 = arith.constant 0 : index
    %614 = vector.load %arg15[%613, %c0_317] : memref<64x32xf32, #tpu.memory_space<vmem>>, vector<8x32xf32>
    %cst_318 = arith.constant dense<0.000000e+00> : vector<8x32xf32>
    %615 = tpu.matmul %600, %457, %cst_318 {dimension_numbers = #tpu.dot_dimension_numbers<[1], [0], [0], [1], [0, 0, 1, 1], [], []>} : vector<8x32xf32>, vector<32x32xf32>, vector<8x32xf32> -> vector<8x32xf32>
    %616 = arith.addf %614, %615 : vector<8x32xf32>
    %617 = arith.index_cast %604 : i32 to index
    %c0_319 = arith.constant 0 : index
    %618 = vector.load %arg16[%617, %c0_319] : memref<64x32xf32, #tpu.memory_space<vmem>>, vector<8x32xf32>
    %cst_320 = arith.constant dense<0.000000e+00> : vector<8x32xf32>
    %619 = tpu.matmul %600, %459, %cst_320 {dimension_numbers = #tpu.dot_dimension_numbers<[1], [0], [0], [1], [0, 0, 1, 1], [], []>} : vector<8x32xf32>, vector<32x32xf32>, vector<8x32xf32> -> vector<8x32xf32>
    %620 = arith.addf %618, %619 : vector<8x32xf32>
    %cst_321 = arith.constant 5.000000e-01 : f32
    %621 = vector.broadcast %cst_321 : f32 to vector<8x32xf32>
    %622 = arith.mulf %621, %608 : vector<8x32xf32>
    %623 = math.tanh %622 : vector<8x32xf32>
    %cst_322 = arith.constant 5.000000e-01 : f32
    %624 = vector.broadcast %cst_322 : f32 to vector<8x32xf32>
    %625 = arith.mulf %624, %623 : vector<8x32xf32>
    %cst_323 = arith.constant 5.000000e-01 : f32
    %626 = vector.broadcast %cst_323 : f32 to vector<8x32xf32>
    %627 = arith.addf %625, %626 : vector<8x32xf32>
    %cst_324 = arith.constant 5.000000e-01 : f32
    %628 = vector.broadcast %cst_324 : f32 to vector<8x32xf32>
    %629 = arith.mulf %628, %612 : vector<8x32xf32>
    %630 = math.tanh %629 : vector<8x32xf32>
    %cst_325 = arith.constant 5.000000e-01 : f32
    %631 = vector.broadcast %cst_325 : f32 to vector<8x32xf32>
    %632 = arith.mulf %631, %630 : vector<8x32xf32>
    %cst_326 = arith.constant 5.000000e-01 : f32
    %633 = vector.broadcast %cst_326 : f32 to vector<8x32xf32>
    %634 = arith.addf %632, %633 : vector<8x32xf32>
    %635 = math.tanh %616 : vector<8x32xf32>
    %cst_327 = arith.constant 5.000000e-01 : f32
    %636 = vector.broadcast %cst_327 : f32 to vector<8x32xf32>
    %637 = arith.mulf %636, %620 : vector<8x32xf32>
    %638 = math.tanh %637 : vector<8x32xf32>
    %cst_328 = arith.constant 5.000000e-01 : f32
    %639 = vector.broadcast %cst_328 : f32 to vector<8x32xf32>
    %640 = arith.mulf %639, %638 : vector<8x32xf32>
    %cst_329 = arith.constant 5.000000e-01 : f32
    %641 = vector.broadcast %cst_329 : f32 to vector<8x32xf32>
    %642 = arith.addf %640, %641 : vector<8x32xf32>
    %643 = arith.mulf %634, %598 : vector<8x32xf32>
    %644 = arith.mulf %627, %635 : vector<8x32xf32>
    %645 = arith.addf %643, %644 : vector<8x32xf32>
    %646 = math.tanh %645 : vector<8x32xf32>
    %647 = arith.mulf %642, %646 : vector<8x32xf32>
    %648 = arith.index_cast %604 : i32 to index
    %c0_330 = arith.constant 0 : index
    %649 = vector.load %arg12[%648, %c0_330] : memref<64x32xf32, #tpu.memory_space<vmem>>, vector<8x32xf32>
    tpu.vector_store %arg12[%648, %c0_330], %647 {strides = array<i32>} : memref<64x32xf32, #tpu.memory_space<vmem>>, vector<8x32xf32>,
    %c4_i32_331 = arith.constant 4 : i32
    %c8_i32_332 = arith.constant 8 : i32
    %650 = arith.muli %c4_i32_331, %c8_i32_332 : i32
    %651 = tpu.assume_multiple %650, 8 : i32
    %652 = arith.index_cast %651 : i32 to index
    %c0_333 = arith.constant 0 : index
    %653 = vector.load %arg13[%652, %c0_333] : memref<64x32xf32, #tpu.memory_space<vmem>>, vector<8x32xf32>
    %cst_334 = arith.constant dense<0.000000e+00> : vector<8x32xf32>
    %654 = tpu.matmul %647, %453, %cst_334 {dimension_numbers = #tpu.dot_dimension_numbers<[1], [0], [0], [1], [0, 0, 1, 1], [], []>} : vector<8x32xf32>, vector<32x32xf32>, vector<8x32xf32> -> vector<8x32xf32>
    %655 = arith.addf %653, %654 : vector<8x32xf32>
    %656 = arith.index_cast %651 : i32 to index
    %c0_335 = arith.constant 0 : index
    %657 = vector.load %arg14[%656, %c0_335] : memref<64x32xf32, #tpu.memory_space<vmem>>, vector<8x32xf32>
    %cst_336 = arith.constant dense<0.000000e+00> : vector<8x32xf32>
    %658 = tpu.matmul %647, %455, %cst_336 {dimension_numbers = #tpu.dot_dimension_numbers<[1], [0], [0], [1], [0, 0, 1, 1], [], []>} : vector<8x32xf32>, vector<32x32xf32>, vector<8x32xf32> -> vector<8x32xf32>
    %659 = arith.addf %657, %658 : vector<8x32xf32>
    %660 = arith.index_cast %651 : i32 to index
    %c0_337 = arith.constant 0 : index
    %661 = vector.load %arg15[%660, %c0_337] : memref<64x32xf32, #tpu.memory_space<vmem>>, vector<8x32xf32>
    %cst_338 = arith.constant dense<0.000000e+00> : vector<8x32xf32>
    %662 = tpu.matmul %647, %457, %cst_338 {dimension_numbers = #tpu.dot_dimension_numbers<[1], [0], [0], [1], [0, 0, 1, 1], [], []>} : vector<8x32xf32>, vector<32x32xf32>, vector<8x32xf32> -> vector<8x32xf32>
    %663 = arith.addf %661, %662 : vector<8x32xf32>
    %664 = arith.index_cast %651 : i32 to index
    %c0_339 = arith.constant 0 : index
    %665 = vector.load %arg16[%664, %c0_339] : memref<64x32xf32, #tpu.memory_space<vmem>>, vector<8x32xf32>
    %cst_340 = arith.constant dense<0.000000e+00> : vector<8x32xf32>
    %666 = tpu.matmul %647, %459, %cst_340 {dimension_numbers = #tpu.dot_dimension_numbers<[1], [0], [0], [1], [0, 0, 1, 1], [], []>} : vector<8x32xf32>, vector<32x32xf32>, vector<8x32xf32> -> vector<8x32xf32>
    %667 = arith.addf %665, %666 : vector<8x32xf32>
    %cst_341 = arith.constant 5.000000e-01 : f32
    %668 = vector.broadcast %cst_341 : f32 to vector<8x32xf32>
    %669 = arith.mulf %668, %655 : vector<8x32xf32>
    %670 = math.tanh %669 : vector<8x32xf32>
    %cst_342 = arith.constant 5.000000e-01 : f32
    %671 = vector.broadcast %cst_342 : f32 to vector<8x32xf32>
    %672 = arith.mulf %671, %670 : vector<8x32xf32>
    %cst_343 = arith.constant 5.000000e-01 : f32
    %673 = vector.broadcast %cst_343 : f32 to vector<8x32xf32>
    %674 = arith.addf %672, %673 : vector<8x32xf32>
    %cst_344 = arith.constant 5.000000e-01 : f32
    %675 = vector.broadcast %cst_344 : f32 to vector<8x32xf32>
    %676 = arith.mulf %675, %659 : vector<8x32xf32>
    %677 = math.tanh %676 : vector<8x32xf32>
    %cst_345 = arith.constant 5.000000e-01 : f32
    %678 = vector.broadcast %cst_345 : f32 to vector<8x32xf32>
    %679 = arith.mulf %678, %677 : vector<8x32xf32>
    %cst_346 = arith.constant 5.000000e-01 : f32
    %680 = vector.broadcast %cst_346 : f32 to vector<8x32xf32>
    %681 = arith.addf %679, %680 : vector<8x32xf32>
    %682 = math.tanh %663 : vector<8x32xf32>
    %cst_347 = arith.constant 5.000000e-01 : f32
    %683 = vector.broadcast %cst_347 : f32 to vector<8x32xf32>
    %684 = arith.mulf %683, %667 : vector<8x32xf32>
    %685 = math.tanh %684 : vector<8x32xf32>
    %cst_348 = arith.constant 5.000000e-01 : f32
    %686 = vector.broadcast %cst_348 : f32 to vector<8x32xf32>
    %687 = arith.mulf %686, %685 : vector<8x32xf32>
    %cst_349 = arith.constant 5.000000e-01 : f32
    %688 = vector.broadcast %cst_349 : f32 to vector<8x32xf32>
    %689 = arith.addf %687, %688 : vector<8x32xf32>
    %690 = arith.mulf %681, %645 : vector<8x32xf32>
    %691 = arith.mulf %674, %682 : vector<8x32xf32>
    %692 = arith.addf %690, %691 : vector<8x32xf32>
    %693 = math.tanh %692 : vector<8x32xf32>
    %694 = arith.mulf %689, %693 : vector<8x32xf32>
    %695 = arith.index_cast %651 : i32 to index
    %c0_350 = arith.constant 0 : index
    %696 = vector.load %arg12[%695, %c0_350] : memref<64x32xf32, #tpu.memory_space<vmem>>, vector<8x32xf32>
    tpu.vector_store %arg12[%695, %c0_350], %694 {strides = array<i32>} : memref<64x32xf32, #tpu.memory_space<vmem>>, vector<8x32xf32>,
    %c5_i32_351 = arith.constant 5 : i32
    %c8_i32_352 = arith.constant 8 : i32
    %697 = arith.muli %c5_i32_351, %c8_i32_352 : i32
    %698 = tpu.assume_multiple %697, 8 : i32
    %699 = arith.index_cast %698 : i32 to index
    %c0_353 = arith.constant 0 : index
    %700 = vector.load %arg13[%699, %c0_353] : memref<64x32xf32, #tpu.memory_space<vmem>>, vector<8x32xf32>
    %cst_354 = arith.constant dense<0.000000e+00> : vector<8x32xf32>
    %701 = tpu.matmul %694, %453, %cst_354 {dimension_numbers = #tpu.dot_dimension_numbers<[1], [0], [0], [1], [0, 0, 1, 1], [], []>} : vector<8x32xf32>, vector<32x32xf32>, vector<8x32xf32> -> vector<8x32xf32>
    %702 = arith.addf %700, %701 : vector<8x32xf32>
    %703 = arith.index_cast %698 : i32 to index
    %c0_355 = arith.constant 0 : index
    %704 = vector.load %arg14[%703, %c0_355] : memref<64x32xf32, #tpu.memory_space<vmem>>, vector<8x32xf32>
    %cst_356 = arith.constant dense<0.000000e+00> : vector<8x32xf32>
    %705 = tpu.matmul %694, %455, %cst_356 {dimension_numbers = #tpu.dot_dimension_numbers<[1], [0], [0], [1], [0, 0, 1, 1], [], []>} : vector<8x32xf32>, vector<32x32xf32>, vector<8x32xf32> -> vector<8x32xf32>
    %706 = arith.addf %704, %705 : vector<8x32xf32>
    %707 = arith.index_cast %698 : i32 to index
    %c0_357 = arith.constant 0 : index
    %708 = vector.load %arg15[%707, %c0_357] : memref<64x32xf32, #tpu.memory_space<vmem>>, vector<8x32xf32>
    %cst_358 = arith.constant dense<0.000000e+00> : vector<8x32xf32>
    %709 = tpu.matmul %694, %457, %cst_358 {dimension_numbers = #tpu.dot_dimension_numbers<[1], [0], [0], [1], [0, 0, 1, 1], [], []>} : vector<8x32xf32>, vector<32x32xf32>, vector<8x32xf32> -> vector<8x32xf32>
    %710 = arith.addf %708, %709 : vector<8x32xf32>
    %711 = arith.index_cast %698 : i32 to index
    %c0_359 = arith.constant 0 : index
    %712 = vector.load %arg16[%711, %c0_359] : memref<64x32xf32, #tpu.memory_space<vmem>>, vector<8x32xf32>
    %cst_360 = arith.constant dense<0.000000e+00> : vector<8x32xf32>
    %713 = tpu.matmul %694, %459, %cst_360 {dimension_numbers = #tpu.dot_dimension_numbers<[1], [0], [0], [1], [0, 0, 1, 1], [], []>} : vector<8x32xf32>, vector<32x32xf32>, vector<8x32xf32> -> vector<8x32xf32>
    %714 = arith.addf %712, %713 : vector<8x32xf32>
    %cst_361 = arith.constant 5.000000e-01 : f32
    %715 = vector.broadcast %cst_361 : f32 to vector<8x32xf32>
    %716 = arith.mulf %715, %702 : vector<8x32xf32>
    %717 = math.tanh %716 : vector<8x32xf32>
    %cst_362 = arith.constant 5.000000e-01 : f32
    %718 = vector.broadcast %cst_362 : f32 to vector<8x32xf32>
    %719 = arith.mulf %718, %717 : vector<8x32xf32>
    %cst_363 = arith.constant 5.000000e-01 : f32
    %720 = vector.broadcast %cst_363 : f32 to vector<8x32xf32>
    %721 = arith.addf %719, %720 : vector<8x32xf32>
    %cst_364 = arith.constant 5.000000e-01 : f32
    %722 = vector.broadcast %cst_364 : f32 to vector<8x32xf32>
    %723 = arith.mulf %722, %706 : vector<8x32xf32>
    %724 = math.tanh %723 : vector<8x32xf32>
    %cst_365 = arith.constant 5.000000e-01 : f32
    %725 = vector.broadcast %cst_365 : f32 to vector<8x32xf32>
    %726 = arith.mulf %725, %724 : vector<8x32xf32>
    %cst_366 = arith.constant 5.000000e-01 : f32
    %727 = vector.broadcast %cst_366 : f32 to vector<8x32xf32>
    %728 = arith.addf %726, %727 : vector<8x32xf32>
    %729 = math.tanh %710 : vector<8x32xf32>
    %cst_367 = arith.constant 5.000000e-01 : f32
    %730 = vector.broadcast %cst_367 : f32 to vector<8x32xf32>
    %731 = arith.mulf %730, %714 : vector<8x32xf32>
    %732 = math.tanh %731 : vector<8x32xf32>
    %cst_368 = arith.constant 5.000000e-01 : f32
    %733 = vector.broadcast %cst_368 : f32 to vector<8x32xf32>
    %734 = arith.mulf %733, %732 : vector<8x32xf32>
    %cst_369 = arith.constant 5.000000e-01 : f32
    %735 = vector.broadcast %cst_369 : f32 to vector<8x32xf32>
    %736 = arith.addf %734, %735 : vector<8x32xf32>
    %737 = arith.mulf %728, %692 : vector<8x32xf32>
    %738 = arith.mulf %721, %729 : vector<8x32xf32>
    %739 = arith.addf %737, %738 : vector<8x32xf32>
    %740 = math.tanh %739 : vector<8x32xf32>
    %741 = arith.mulf %736, %740 : vector<8x32xf32>
    %742 = arith.index_cast %698 : i32 to index
    %c0_370 = arith.constant 0 : index
    %743 = vector.load %arg12[%742, %c0_370] : memref<64x32xf32, #tpu.memory_space<vmem>>, vector<8x32xf32>
    tpu.vector_store %arg12[%742, %c0_370], %741 {strides = array<i32>} : memref<64x32xf32, #tpu.memory_space<vmem>>, vector<8x32xf32>,
    %c6_i32_371 = arith.constant 6 : i32
    %c8_i32_372 = arith.constant 8 : i32
    %744 = arith.muli %c6_i32_371, %c8_i32_372 : i32
    %745 = tpu.assume_multiple %744, 8 : i32
    %746 = arith.index_cast %745 : i32 to index
    %c0_373 = arith.constant 0 : index
    %747 = vector.load %arg13[%746, %c0_373] : memref<64x32xf32, #tpu.memory_space<vmem>>, vector<8x32xf32>
    %cst_374 = arith.constant dense<0.000000e+00> : vector<8x32xf32>
    %748 = tpu.matmul %741, %453, %cst_374 {dimension_numbers = #tpu.dot_dimension_numbers<[1], [0], [0], [1], [0, 0, 1, 1], [], []>} : vector<8x32xf32>, vector<32x32xf32>, vector<8x32xf32> -> vector<8x32xf32>
    %749 = arith.addf %747, %748 : vector<8x32xf32>
    %750 = arith.index_cast %745 : i32 to index
    %c0_375 = arith.constant 0 : index
    %751 = vector.load %arg14[%750, %c0_375] : memref<64x32xf32, #tpu.memory_space<vmem>>, vector<8x32xf32>
    %cst_376 = arith.constant dense<0.000000e+00> : vector<8x32xf32>
    %752 = tpu.matmul %741, %455, %cst_376 {dimension_numbers = #tpu.dot_dimension_numbers<[1], [0], [0], [1], [0, 0, 1, 1], [], []>} : vector<8x32xf32>, vector<32x32xf32>, vector<8x32xf32> -> vector<8x32xf32>
    %753 = arith.addf %751, %752 : vector<8x32xf32>
    %754 = arith.index_cast %745 : i32 to index
    %c0_377 = arith.constant 0 : index
    %755 = vector.load %arg15[%754, %c0_377] : memref<64x32xf32, #tpu.memory_space<vmem>>, vector<8x32xf32>
    %cst_378 = arith.constant dense<0.000000e+00> : vector<8x32xf32>
    %756 = tpu.matmul %741, %457, %cst_378 {dimension_numbers = #tpu.dot_dimension_numbers<[1], [0], [0], [1], [0, 0, 1, 1], [], []>} : vector<8x32xf32>, vector<32x32xf32>, vector<8x32xf32> -> vector<8x32xf32>
    %757 = arith.addf %755, %756 : vector<8x32xf32>
    %758 = arith.index_cast %745 : i32 to index
    %c0_379 = arith.constant 0 : index
    %759 = vector.load %arg16[%758, %c0_379] : memref<64x32xf32, #tpu.memory_space<vmem>>, vector<8x32xf32>
    %cst_380 = arith.constant dense<0.000000e+00> : vector<8x32xf32>
    %760 = tpu.matmul %741, %459, %cst_380 {dimension_numbers = #tpu.dot_dimension_numbers<[1], [0], [0], [1], [0, 0, 1, 1], [], []>} : vector<8x32xf32>, vector<32x32xf32>, vector<8x32xf32> -> vector<8x32xf32>
    %761 = arith.addf %759, %760 : vector<8x32xf32>
    %cst_381 = arith.constant 5.000000e-01 : f32
    %762 = vector.broadcast %cst_381 : f32 to vector<8x32xf32>
    %763 = arith.mulf %762, %749 : vector<8x32xf32>
    %764 = math.tanh %763 : vector<8x32xf32>
    %cst_382 = arith.constant 5.000000e-01 : f32
    %765 = vector.broadcast %cst_382 : f32 to vector<8x32xf32>
    %766 = arith.mulf %765, %764 : vector<8x32xf32>
    %cst_383 = arith.constant 5.000000e-01 : f32
    %767 = vector.broadcast %cst_383 : f32 to vector<8x32xf32>
    %768 = arith.addf %766, %767 : vector<8x32xf32>
    %cst_384 = arith.constant 5.000000e-01 : f32
    %769 = vector.broadcast %cst_384 : f32 to vector<8x32xf32>
    %770 = arith.mulf %769, %753 : vector<8x32xf32>
    %771 = math.tanh %770 : vector<8x32xf32>
    %cst_385 = arith.constant 5.000000e-01 : f32
    %772 = vector.broadcast %cst_385 : f32 to vector<8x32xf32>
    %773 = arith.mulf %772, %771 : vector<8x32xf32>
    %cst_386 = arith.constant 5.000000e-01 : f32
    %774 = vector.broadcast %cst_386 : f32 to vector<8x32xf32>
    %775 = arith.addf %773, %774 : vector<8x32xf32>
    %776 = math.tanh %757 : vector<8x32xf32>
    %cst_387 = arith.constant 5.000000e-01 : f32
    %777 = vector.broadcast %cst_387 : f32 to vector<8x32xf32>
    %778 = arith.mulf %777, %761 : vector<8x32xf32>
    %779 = math.tanh %778 : vector<8x32xf32>
    %cst_388 = arith.constant 5.000000e-01 : f32
    %780 = vector.broadcast %cst_388 : f32 to vector<8x32xf32>
    %781 = arith.mulf %780, %779 : vector<8x32xf32>
    %cst_389 = arith.constant 5.000000e-01 : f32
    %782 = vector.broadcast %cst_389 : f32 to vector<8x32xf32>
    %783 = arith.addf %781, %782 : vector<8x32xf32>
    %784 = arith.mulf %775, %739 : vector<8x32xf32>
    %785 = arith.mulf %768, %776 : vector<8x32xf32>
    %786 = arith.addf %784, %785 : vector<8x32xf32>
    %787 = math.tanh %786 : vector<8x32xf32>
    %788 = arith.mulf %783, %787 : vector<8x32xf32>
    %789 = arith.index_cast %745 : i32 to index
    %c0_390 = arith.constant 0 : index
    %790 = vector.load %arg12[%789, %c0_390] : memref<64x32xf32, #tpu.memory_space<vmem>>, vector<8x32xf32>
    tpu.vector_store %arg12[%789, %c0_390], %788 {strides = array<i32>} : memref<64x32xf32, #tpu.memory_space<vmem>>, vector<8x32xf32>,
    %c7_i32_391 = arith.constant 7 : i32
    %c8_i32_392 = arith.constant 8 : i32
    %791 = arith.muli %c7_i32_391, %c8_i32_392 : i32
    %792 = tpu.assume_multiple %791, 8 : i32
    %793 = arith.index_cast %792 : i32 to index
    %c0_393 = arith.constant 0 : index
    %794 = vector.load %arg13[%793, %c0_393] : memref<64x32xf32, #tpu.memory_space<vmem>>, vector<8x32xf32>
    %cst_394 = arith.constant dense<0.000000e+00> : vector<8x32xf32>
    %795 = tpu.matmul %788, %453, %cst_394 {dimension_numbers = #tpu.dot_dimension_numbers<[1], [0], [0], [1], [0, 0, 1, 1], [], []>} : vector<8x32xf32>, vector<32x32xf32>, vector<8x32xf32> -> vector<8x32xf32>
    %796 = arith.addf %794, %795 : vector<8x32xf32>
    %797 = arith.index_cast %792 : i32 to index
    %c0_395 = arith.constant 0 : index
    %798 = vector.load %arg14[%797, %c0_395] : memref<64x32xf32, #tpu.memory_space<vmem>>, vector<8x32xf32>
    %cst_396 = arith.constant dense<0.000000e+00> : vector<8x32xf32>
    %799 = tpu.matmul %788, %455, %cst_396 {dimension_numbers = #tpu.dot_dimension_numbers<[1], [0], [0], [1], [0, 0, 1, 1], [], []>} : vector<8x32xf32>, vector<32x32xf32>, vector<8x32xf32> -> vector<8x32xf32>
    %800 = arith.addf %798, %799 : vector<8x32xf32>
    %801 = arith.index_cast %792 : i32 to index
    %c0_397 = arith.constant 0 : index
    %802 = vector.load %arg15[%801, %c0_397] : memref<64x32xf32, #tpu.memory_space<vmem>>, vector<8x32xf32>
    %cst_398 = arith.constant dense<0.000000e+00> : vector<8x32xf32>
    %803 = tpu.matmul %788, %457, %cst_398 {dimension_numbers = #tpu.dot_dimension_numbers<[1], [0], [0], [1], [0, 0, 1, 1], [], []>} : vector<8x32xf32>, vector<32x32xf32>, vector<8x32xf32> -> vector<8x32xf32>
    %804 = arith.addf %802, %803 : vector<8x32xf32>
    %805 = arith.index_cast %792 : i32 to index
    %c0_399 = arith.constant 0 : index
    %806 = vector.load %arg16[%805, %c0_399] : memref<64x32xf32, #tpu.memory_space<vmem>>, vector<8x32xf32>
    %cst_400 = arith.constant dense<0.000000e+00> : vector<8x32xf32>
    %807 = tpu.matmul %788, %459, %cst_400 {dimension_numbers = #tpu.dot_dimension_numbers<[1], [0], [0], [1], [0, 0, 1, 1], [], []>} : vector<8x32xf32>, vector<32x32xf32>, vector<8x32xf32> -> vector<8x32xf32>
    %808 = arith.addf %806, %807 : vector<8x32xf32>
    %cst_401 = arith.constant 5.000000e-01 : f32
    %809 = vector.broadcast %cst_401 : f32 to vector<8x32xf32>
    %810 = arith.mulf %809, %796 : vector<8x32xf32>
    %811 = math.tanh %810 : vector<8x32xf32>
    %cst_402 = arith.constant 5.000000e-01 : f32
    %812 = vector.broadcast %cst_402 : f32 to vector<8x32xf32>
    %813 = arith.mulf %812, %811 : vector<8x32xf32>
    %cst_403 = arith.constant 5.000000e-01 : f32
    %814 = vector.broadcast %cst_403 : f32 to vector<8x32xf32>
    %815 = arith.addf %813, %814 : vector<8x32xf32>
    %cst_404 = arith.constant 5.000000e-01 : f32
    %816 = vector.broadcast %cst_404 : f32 to vector<8x32xf32>
    %817 = arith.mulf %816, %800 : vector<8x32xf32>
    %818 = math.tanh %817 : vector<8x32xf32>
    %cst_405 = arith.constant 5.000000e-01 : f32
    %819 = vector.broadcast %cst_405 : f32 to vector<8x32xf32>
    %820 = arith.mulf %819, %818 : vector<8x32xf32>
    %cst_406 = arith.constant 5.000000e-01 : f32
    %821 = vector.broadcast %cst_406 : f32 to vector<8x32xf32>
    %822 = arith.addf %820, %821 : vector<8x32xf32>
    %823 = math.tanh %804 : vector<8x32xf32>
    %cst_407 = arith.constant 5.000000e-01 : f32
    %824 = vector.broadcast %cst_407 : f32 to vector<8x32xf32>
    %825 = arith.mulf %824, %808 : vector<8x32xf32>
    %826 = math.tanh %825 : vector<8x32xf32>
    %cst_408 = arith.constant 5.000000e-01 : f32
    %827 = vector.broadcast %cst_408 : f32 to vector<8x32xf32>
    %828 = arith.mulf %827, %826 : vector<8x32xf32>
    %cst_409 = arith.constant 5.000000e-01 : f32
    %829 = vector.broadcast %cst_409 : f32 to vector<8x32xf32>
    %830 = arith.addf %828, %829 : vector<8x32xf32>
    %831 = arith.mulf %822, %786 : vector<8x32xf32>
    %832 = arith.mulf %815, %823 : vector<8x32xf32>
    %833 = arith.addf %831, %832 : vector<8x32xf32>
    %834 = math.tanh %833 : vector<8x32xf32>
    %835 = arith.mulf %830, %834 : vector<8x32xf32>
    %836 = arith.index_cast %792 : i32 to index
    %c0_410 = arith.constant 0 : index
    %837 = vector.load %arg12[%836, %c0_410] : memref<64x32xf32, #tpu.memory_space<vmem>>, vector<8x32xf32>
    tpu.vector_store %arg12[%836, %c0_410], %835 {strides = array<i32>} : memref<64x32xf32, #tpu.memory_space<vmem>>, vector<8x32xf32>,
    %c8_i32_411 = arith.constant 8 : i32
    %c0_412 = arith.constant 0 : index
    %c0_413 = arith.constant 0 : index
    %838 = vector.load %arg12[%c0_412, %c0_413] : memref<64x32xf32, #tpu.memory_space<vmem>>, vector<64x32xf32>
    %cst_414 = arith.constant 0.000000e+00 : f32
    %839 = vector.broadcast %cst_414 : f32 to vector<64x32xf32>
    %840 = arith.maximumf %838, %839 : vector<64x32xf32>
    %c0_415 = arith.constant 0 : index
    %c0_416 = arith.constant 0 : index
    %841 = vector.load %arg7[%c0_415, %c0_416] : memref<32x16xf32, #tpu.memory_space<vmem>>, vector<32x16xf32>
    %cst_417 = arith.constant dense<0.000000e+00> : vector<64x16xf32>
    %842 = tpu.matmul %840, %841, %cst_417 {dimension_numbers = #tpu.dot_dimension_numbers<[1], [0], [0], [1], [0, 0, 1, 1], [], []>} : vector<64x32xf32>, vector<32x16xf32>, vector<64x16xf32> -> vector<64x16xf32>
    %c0_418 = arith.constant 0 : index
    %c0_419 = arith.constant 0 : index
    %843 = vector.load %arg8[%c0_418, %c0_419] : memref<1x16xf32, #tpu.memory_space<vmem>>, vector<1x16xf32>
    %844 = vector.broadcast %843 : vector<1x16xf32> to vector<64x16xf32>
    %845 = arith.addf %842, %844 : vector<64x16xf32>
    %cst_420 = arith.constant 0.000000e+00 : f32
    %846 = vector.broadcast %cst_420 : f32 to vector<64x16xf32>
    %847 = arith.maximumf %845, %846 : vector<64x16xf32>
    %c0_421 = arith.constant 0 : index
    %c0_422 = arith.constant 0 : index
    %848 = vector.load %arg9[%c0_421, %c0_422] : memref<1x16xf32, #tpu.memory_space<vmem>>, vector<1x16xf32>
    %cst_423 = arith.constant dense<0.000000e+00> : vector<1x64xf32>
    %849 = tpu.matmul %848, %847, %cst_423 {dimension_numbers = #tpu.dot_dimension_numbers<[1], [1], [0], [0], [0, 0, 1, 0], [], []>} : vector<1x16xf32>, vector<64x16xf32>, vector<1x64xf32> -> vector<1x64xf32>
    %c0_424 = arith.constant 0 : index
    %c0_425 = arith.constant 0 : index
    %850 = vector.load %arg10[%c0_424, %c0_425] : memref<1x1xf32, #tpu.memory_space<vmem>>, vector<1x1xf32>
    %851 = vector.broadcast %850 : vector<1x1xf32> to vector<1x64xf32>
    %852 = arith.addf %849, %851 : vector<1x64xf32>
    %c0_426 = arith.constant 0 : index
    %c0_427 = arith.constant 0 : index
    %853 = vector.load %arg11[%c0_426, %c0_427] : memref<1x64xf32, #tpu.memory_space<vmem>>, vector<1x64xf32>
    tpu.vector_store %arg11[%c0_426, %c0_427], %852 {strides = array<i32>} : memref<1x64xf32, #tpu.memory_space<vmem>>, vector<1x64xf32>,
    return
  }
}

</mosaic_0001>

<llo_original>
// kernel: tpu_custom_call.1
$region0: #{tpu_custom_call.1}
  #allocation0 [shape = 'u32[]', space=smem, size = 0x4, offset = 0x4, fixed_abs, tag = 'smem constant byte address 0x4 - core index']
  #allocation1 [shape = 'u32[72,128]{1,0:T(1,128)}', space=vmem, size = 0x9000, scoped, tag = 'internal scratch']
  #allocation2 [shape = 'f32[64,32]{1,0:T(8,128)}', space=vmem, size = 0x8000, scoped, tag = 'scratch operand']
  #allocation3 [shape = 'f32[64,32]{1,0:T(8,128)}', space=vmem, size = 0x8000, scoped, tag = 'scratch operand']
  #allocation4 [shape = 'f32[64,32]{1,0:T(8,128)}', space=vmem, size = 0x8000, scoped, tag = 'scratch operand']
  #allocation5 [shape = 'f32[64,32]{1,0:T(8,128)}', space=vmem, size = 0x8000, scoped, tag = 'scratch operand']
  #allocation6 [shape = 'f32[64,32]{1,0:T(8,128)}', space=vmem, size = 0x8000, scoped, tag = 'scratch operand']
  #allocation7 [shape = 'f32[1,1]{1,0:T(1,128)S(1)}', space=vmem, size = 0x200, scoped, tag = 'scoped memory for tpu_custom_call.1']
  %s0 = inlined_call_operand.vmem [shape: f32[64,16], index: 0, kind: input, shape index: {}]
  %s1 = inlined_call_operand.vmem [shape: f32[4,16,32], index: 1, kind: input, shape index: {}]
  %s2 = inlined_call_operand.hbm [shape: f32[4,32,32], index: 2, kind: input, shape index: {}]
  %s3 = inlined_call_operand.vmem [shape: f32[4,1,32], index: 3, kind: input, shape index: {}]
  %s4 = inlined_call_operand.hbm [shape: f32[4,32,32], index: 4, kind: input, shape index: {}]
  %s5 = inlined_call_operand.hbm [shape: f32[4,32,32], index: 5, kind: input, shape index: {}]
  %s6 = inlined_call_operand.vmem [shape: f32[4,1,32], index: 6, kind: input, shape index: {}]
  %s7 = inlined_call_operand.vmem [shape: f32[32,16], index: 7, kind: input, shape index: {}]
  %s8 = inlined_call_operand.vmem [shape: f32[1,16], index: 8, kind: input, shape index: {}]
  %s9 = inlined_call_operand.vmem [shape: f32[1,16], index: 9, kind: input, shape index: {}]
  %s10 = inlined_call_operand.<no memory space> [shape: f32[1,1], index: 10, kind: input, shape index: {}]
  %s11 = inlined_call_operand.hbm [shape: f32[1,64], index: 11, kind: output, shape index: {}]
  %s12 = sld [smem:[#allocation0]]
  $region66: #{tpu_custom_call.1} parent=0
    _
  %s14 = ssub.s32 1, %s12
  %s15 = scalar_select 0, %s14, %s12
  %v16 = vstv %s10
  %17 = vst [vmem:[#allocation7] sm:$0x1] %v16
  $region1: #{tpu_custom_call.1} parent=0
    #allocation8 [shape = 'u8[65536]{0}', space=vmem, size = 0x10000, scoped, tag = 'input window, operand 2, single buffered']
    #allocation9 [shape = 's32[1]{0}', space=sflag, size = 0x4, scoped, tag = 'scoped memory for tpu_custom_call.1']
    #allocation10 [shape = 's32[1]{0}', space=sflag, size = 0x4, scoped, tag = 'scoped memory for tpu_custom_call.1']
    #allocation11 [shape = 'u8[65536]{0}', space=vmem, size = 0x10000, scoped, tag = 'input window, operand 4, single buffered']
    #allocation12 [shape = 's32[1]{0}', space=sflag, size = 0x4, scoped, tag = 'scoped memory for tpu_custom_call.1']
    #allocation13 [shape = 'u8[65536]{0}', space=vmem, size = 0x10000, scoped, tag = 'input window, operand 5, single buffered']
    #allocation14 [shape = 'u8[512]{0}', space=vmem, size = 0x400, scoped, tag = 'output window, operand 0, single buffered']
    %18 = vsyncpa [#allocation9], 0
    %19 = vsyncpa [#allocation12], 0
    %20 = vsyncpa [#allocation10], 0
    // Predicated region
    $region2: #{tpu_custom_call.1} parent=1 // pred_check
      _
    $region3: #{tpu_custom_call.1} parent=1 // pred_check_branch
      %22 = sbr.rel (0) target = $region5
    $region4: #{tpu_custom_call.1} parent=1 // pred_region
      _
    $region5: #{tpu_custom_call.1} parent=1 // pred_fallthru
      _
    // Predicated region
    $region6: #{tpu_custom_call.1} parent=1 // pred_check
      _
    $region7: #{tpu_custom_call.1} parent=1 // pred_check_branch
      %24 = sbr.rel (0) target = $region9
    $region8: #{tpu_custom_call.1} parent=1 // pred_region
      _
    $region9: #{tpu_custom_call.1} parent=1 // pred_fallthru
      _
    // Predicated region
    $region10: #{tpu_custom_call.1} parent=1 // pred_check
      _
    $region11: #{tpu_custom_call.1} parent=1 // pred_check_branch
      %26 = sbr.rel (0) target = $region13
    $region12: #{tpu_custom_call.1} parent=1 // pred_region
      %28 = vsyncadd [#allocation9], 0
      %s29 = sshll.u32 %s2, 4
      %s30 = int_to_ptr.hbm [resolvable:$true] %s29
      %s31 = sshll.u32 [#allocation8], 4
      %s32 = int_to_ptr.vmem [resolvable:$true] %s31
      %37 = dma.hbm_to_vmem [thread:$0]  %s30, 2048, %s32, [#allocation9], 128, 128, 8
    $region13: #{tpu_custom_call.1} parent=1 // pred_fallthru
      _
    // Predicated region
    $region14: #{tpu_custom_call.1} parent=1 // pred_check
      _
    $region15: #{tpu_custom_call.1} parent=1 // pred_check_branch
      %39 = sbr.rel (0) target = $region17
    $region16: #{tpu_custom_call.1} parent=1 // pred_region
      _
    $region17: #{tpu_custom_call.1} parent=1 // pred_fallthru
      _
    // Predicated region
    $region18: #{tpu_custom_call.1} parent=1 // pred_check
      _
    $region19: #{tpu_custom_call.1} parent=1 // pred_check_branch
      %41 = sbr.rel (0) target = $region21
    $region20: #{tpu_custom_call.1} parent=1 // pred_region
      %43 = vsyncadd [#allocation12], 0
      %s44 = sshll.u32 %s4, 4
      %s45 = int_to_ptr.hbm [resolvable:$true] %s44
      %s46 = sshll.u32 [#allocation11], 4
      %s47 = int_to_ptr.vmem [resolvable:$true] %s46
      %52 = dma.hbm_to_vmem [thread:$0]  %s45, 2048, %s47, [#allocation12], 128, 128, 8
    $region21: #{tpu_custom_call.1} parent=1 // pred_fallthru
      _
    // Predicated region
    $region22: #{tpu_custom_call.1} parent=1 // pred_check
      _
    $region23: #{tpu_custom_call.1} parent=1 // pred_check_branch
      %54 = sbr.rel (0) target = $region25
    $region24: #{tpu_custom_call.1} parent=1 // pred_region
      %56 = vsyncadd [#allocation12], 0
      %s57 = sshll.u32 %s5, 4
      %s58 = int_to_ptr.hbm [resolvable:$true] %s57
      %s59 = sshll.u32 [#allocation13], 4
      %s60 = int_to_ptr.vmem [resolvable:$true] %s59
      %65 = dma.hbm_to_vmem [thread:$0]  %s58, 2048, %s60, [#allocation12], 128, 128, 8
    $region25: #{tpu_custom_call.1} parent=1 // pred_fallthru
      _
    // Predicated region
    $region26: #{tpu_custom_call.1} parent=1 // pred_check
      _
    $region27: #{tpu_custom_call.1} parent=1 // pred_check_branch
      %67 = sbr.rel (0) target = $region29
    $region28: #{tpu_custom_call.1} parent=1 // pred_region
      _
    $region29: #{tpu_custom_call.1} parent=1 // pred_fallthru
      _
    // Predicated region
    $region30: #{tpu_custom_call.1} parent=1 // pred_check
      _
    $region31: #{tpu_custom_call.1} parent=1 // pred_check_branch
      %69 = sbr.rel (0) target = $region33
    $region32: #{tpu_custom_call.1} parent=1 // pred_region
      _
    $region33: #{tpu_custom_call.1} parent=1 // pred_fallthru
      _
    // Predicated region
    $region34: #{tpu_custom_call.1} parent=1 // pred_check
      _
    $region35: #{tpu_custom_call.1} parent=1 // pred_check_branch
      %71 = sbr.rel (0) target = $region37
    $region36: #{tpu_custom_call.1} parent=1 // pred_region
      _
    $region37: #{tpu_custom_call.1} parent=1 // pred_fallthru
      _
    // Predicated region
    $region38: #{tpu_custom_call.1} parent=1 // pred_check
      _
    $region39: #{tpu_custom_call.1} parent=1 // pred_check_branch
      %73 = sbr.rel (0) target = $region41
    $region40: #{tpu_custom_call.1} parent=1 // pred_region
      _
    $region41: #{tpu_custom_call.1} parent=1 // pred_fallthru
      _
    // Predicated region
    $region42: #{tpu_custom_call.1} parent=1 // pred_check
      _
    $region43: #{tpu_custom_call.1} parent=1 // pred_check_branch
      %75 = sbr.rel (0) target = $region45
    $region44: #{tpu_custom_call.1} parent=1 // pred_region
      _
    $region45: #{tpu_custom_call.1} parent=1 // pred_fallthru
      _
    // Predicated region
    $region46: #{tpu_custom_call.1} parent=1 // pred_check
      _
    $region47: #{tpu_custom_call.1} parent=1 // pred_check_branch
      %77 = sbr.rel (0) target = $region49
    $region48: #{tpu_custom_call.1} parent=1 // pred_region
      %79 = dma.done [#allocation9], 2048
    $region49: #{tpu_custom_call.1} parent=1 // pred_fallthru
      _
    // Predicated region
    $region50: #{tpu_custom_call.1} parent=1 // pred_check
      _
    $region51: #{tpu_custom_call.1} parent=1 // pred_check_branch
      %81 = sbr.rel (0) target = $region53
    $region52: #{tpu_custom_call.1} parent=1 // pred_region
      %83 = dma.done [#allocation12], 2048
    $region53: #{tpu_custom_call.1} parent=1 // pred_fallthru
      _
    // Predicated region
    $region54: #{tpu_custom_call.1} parent=1 // pred_check
      _
    $region55: #{tpu_custom_call.1} parent=1 // pred_check_branch
      %85 = sbr.rel (0) target = $region57
    $region56: #{tpu_custom_call.1} parent=1 // pred_region
      %87 = dma.done [#allocation12], 2048
    $region57: #{tpu_custom_call.1} parent=1 // pred_fallthru
      _
    %v88 = vld [vmem:[%s0] sm:$0xff]
    %v89 = vld [vmem:[%s0 + $0x8] sm:$0xff]
    %v90 = vld [vmem:[%s0 + $0x10] sm:$0xff]
    %v91 = vld [vmem:[%s0 + $0x18] sm:$0xff]
    %v92 = vld [vmem:[%s0 + $0x20] sm:$0xff]
    %v93 = vld [vmem:[%s0 + $0x28] sm:$0xff]
    %v94 = vld [vmem:[%s0 + $0x30] sm:$0xff]
    %v95 = vld [vmem:[%s0 + $0x38] sm:$0xff]
    %v96 = vld [vmem:[%s1] sm:$0xff]
    %v97 = vld [vmem:[%s1 + $0x8] sm:$0xff]
    %v98 = vld [vmem:[%s3] sm:$0x1]
    %v100 = vperm.slane %v98, 0
    %vm102 = vcmask 130048
    %v104 = vsel %vm102, %v88, 0
    %v107 = vsel %vm102, %v89, 0
    %v110 = vsel %vm102, %v90, 0
    %v113 = vsel %vm102, %v91, 0
    %v116 = vsel %vm102, %v92, 0
    %v119 = vsel %vm102, %v93, 0
    %v122 = vsel %vm102, %v94, 0
    %v125 = vsel %vm102, %v95, 0
    %127 = vmatpush.msra.mxu0 0.0
    %128 = vmatpush.msra.mxu0 0.0
    %129 = vmatpush.msra.mxu0 0.0
    %130 = vmatpush.msra.mxu0 0.0
    %131 = vmatpush.msra.mxu0 0.0
    %132 = vmatpush.msra.mxu0 0.0
    %133 = vmatpush.msra.mxu0 0.0
    %134 = vmatpush.msra.mxu0 0.0
    %135 = vmatpush.msra.mxu0 0.0
    %136 = vmatpush.msra.mxu0 0.0
    %137 = vmatpush.msra.mxu0 0.0
    %138 = vmatpush.msra.mxu0 0.0
    %139 = vmatpush.msra.mxu0 0.0
    %140 = vmatpush.msra.mxu0 0.0
    %141 = vmatpush.msra.mxu0 %v97
    %142 = vmatpush.msra.mxu0 %v96
    %143 = vmatmul.f32.gmra.mxu0 %v104
    %v144 = vpop.f32.mrf.mxu0
    %v145 = vadd.f32 %v100, %v144
    %146 = vmatmul.f32.gmra.mxu0 %v107
    %v147 = vpop.f32.mrf.mxu0
    %v148 = vadd.f32 %v100, %v147
    %149 = vmatmul.f32.gmra.mxu0 %v110
    %v150 = vpop.f32.mrf.mxu0
    %v151 = vadd.f32 %v100, %v150
    %152 = vmatmul.f32.gmra.mxu0 %v113
    %v153 = vpop.f32.mrf.mxu0
    %v154 = vadd.f32 %v100, %v153
    %155 = vmatmul.f32.gmra.mxu0 %v116
    %v156 = vpop.f32.mrf.mxu0
    %v157 = vadd.f32 %v100, %v156
    %158 = vmatmul.f32.gmra.mxu0 %v119
    %v159 = vpop.f32.mrf.mxu0
    %v160 = vadd.f32 %v100, %v159
    %161 = vmatmul.f32.gmra.mxu0 %v122
    %v162 = vpop.f32.mrf.mxu0
    %v163 = vadd.f32 %v100, %v162
    %164 = vmatmul.f32.gmra.mxu0 %v125
    %v165 = vpop.f32.mrf.mxu0
    %v166 = vadd.f32 %v100, %v165
    %167 = vdwg.mxu0
    %vm168 = vcmask 261120
    %169 = vst.msk [vmem:[#allocation3] sm:$0xff] %vm168, %v145
    %170 = vst.msk [vmem:[#allocation3 + $0x8] sm:$0xff] %vm168, %v148
    %171 = vst.msk [vmem:[#allocation3 + $0x10] sm:$0xff] %vm168, %v151
    %172 = vst.msk [vmem:[#allocation3 + $0x18] sm:$0xff] %vm168, %v154
    %173 = vst.msk [vmem:[#allocation3 + $0x20] sm:$0xff] %vm168, %v157
    %174 = vst.msk [vmem:[#allocation3 + $0x28] sm:$0xff] %vm168, %v160
    %175 = vst.msk [vmem:[#allocation3 + $0x30] sm:$0xff] %vm168, %v163
    %176 = vst.msk [vmem:[#allocation3 + $0x38] sm:$0xff] %vm168, %v166
    %s177 = scalar_lea.vmem %s1, 16
    %v178 = vld [vmem:[%s177] sm:$0xff]
    %v179 = vld [vmem:[%s177 + $0x8] sm:$0xff]
    %s180 = scalar_lea.vmem %s3, 1
    %v181 = vld [vmem:[%s180] sm:$0x1]
    %v183 = vperm.slane %v181, 0
    %185 = vmatpush.msra.mxu0 0.0
    %186 = vmatpush.msra.mxu0 0.0
    %187 = vmatpush.msra.mxu0 0.0
    %188 = vmatpush.msra.mxu0 0.0
    %189 = vmatpush.msra.mxu0 0.0
    %190 = vmatpush.msra.mxu0 0.0
    %191 = vmatpush.msra.mxu0 0.0
    %192 = vmatpush.msra.mxu0 0.0
    %193 = vmatpush.msra.mxu0 0.0
    %194 = vmatpush.msra.mxu0 0.0
    %195 = vmatpush.msra.mxu0 0.0
    %196 = vmatpush.msra.mxu0 0.0
    %197 = vmatpush.msra.mxu0 0.0
    %198 = vmatpush.msra.mxu0 0.0
    %199 = vmatpush.msra.mxu0 %v179
    %200 = vmatpush.msra.mxu0 %v178
    %201 = vmatmul.f32.gmra.mxu0 %v104
    %v202 = vpop.f32.mrf.mxu0
    %v203 = vadd.f32 %v183, %v202
    %204 = vmatmul.f32.gmra.mxu0 %v107
    %v205 = vpop.f32.mrf.mxu0
    %v206 = vadd.f32 %v183, %v205
    %207 = vmatmul.f32.gmra.mxu0 %v110
    %v208 = vpop.f32.mrf.mxu0
    %v209 = vadd.f32 %v183, %v208
    %210 = vmatmul.f32.gmra.mxu0 %v113
    %v211 = vpop.f32.mrf.mxu0
    %v212 = vadd.f32 %v183, %v211
    %213 = vmatmul.f32.gmra.mxu0 %v116
    %v214 = vpop.f32.mrf.mxu0
    %v215 = vadd.f32 %v183, %v214
    %216 = vmatmul.f32.gmra.mxu0 %v119
    %v217 = vpop.f32.mrf.mxu0
    %v218 = vadd.f32 %v183, %v217
    %219 = vmatmul.f32.gmra.mxu0 %v122
    %v220 = vpop.f32.mrf.mxu0
    %v221 = vadd.f32 %v183, %v220
    %222 = vmatmul.f32.gmra.mxu0 %v125
    %v223 = vpop.f32.mrf.mxu0
    %v224 = vadd.f32 %v183, %v223
    %225 = vdwg.mxu0
    %226 = vst.msk [vmem:[#allocation4] sm:$0xff] %vm168, %v203
    %227 = vst.msk [vmem:[#allocation4 + $0x8] sm:$0xff] %vm168, %v206
    %228 = vst.msk [vmem:[#allocation4 + $0x10] sm:$0xff] %vm168, %v209
    %229 = vst.msk [vmem:[#allocation4 + $0x18] sm:$0xff] %vm168, %v212
    %230 = vst.msk [vmem:[#allocation4 + $0x20] sm:$0xff] %vm168, %v215
    %231 = vst.msk [vmem:[#allocation4 + $0x28] sm:$0xff] %vm168, %v218
    %232 = vst.msk [vmem:[#allocation4 + $0x30] sm:$0xff] %vm168, %v221
    %233 = vst.msk [vmem:[#allocation4 + $0x38] sm:$0xff] %vm168, %v224
    %s234 = scalar_lea.vmem %s1, 32
    %v235 = vld [vmem:[%s234] sm:$0xff]
    %v236 = vld [vmem:[%s234 + $0x8] sm:$0xff]
    %s237 = scalar_lea.vmem %s3, 2
    %v238 = vld [vmem:[%s237] sm:$0x1]
    %v240 = vperm.slane %v238, 0
    %242 = vmatpush.msra.mxu0 0.0
    %243 = vmatpush.msra.mxu0 0.0
    %244 = vmatpush.msra.mxu0 0.0
    %245 = vmatpush.msra.mxu0 0.0
    %246 = vmatpush.msra.mxu0 0.0
    %247 = vmatpush.msra.mxu0 0.0
    %248 = vmatpush.msra.mxu0 0.0
    %249 = vmatpush.msra.mxu0 0.0
    %250 = vmatpush.msra.mxu0 0.0
    %251 = vmatpush.msra.mxu0 0.0
    %252 = vmatpush.msra.mxu0 0.0
    %253 = vmatpush.msra.mxu0 0.0
    %254 = vmatpush.msra.mxu0 0.0
    %255 = vmatpush.msra.mxu0 0.0
    %256 = vmatpush.msra.mxu0 %v236
    %257 = vmatpush.msra.mxu0 %v235
    %258 = vmatmul.f32.gmra.mxu0 %v104
    %v259 = vpop.f32.mrf.mxu0
    %v260 = vadd.f32 %v240, %v259
    %261 = vmatmul.f32.gmra.mxu0 %v107
    %v262 = vpop.f32.mrf.mxu0
    %v263 = vadd.f32 %v240, %v262
    %264 = vmatmul.f32.gmra.mxu0 %v110
    %v265 = vpop.f32.mrf.mxu0
    %v266 = vadd.f32 %v240, %v265
    %267 = vmatmul.f32.gmra.mxu0 %v113
    %v268 = vpop.f32.mrf.mxu0
    %v269 = vadd.f32 %v240, %v268
    %270 = vmatmul.f32.gmra.mxu0 %v116
    %v271 = vpop.f32.mrf.mxu0
    %v272 = vadd.f32 %v240, %v271
    %273 = vmatmul.f32.gmra.mxu0 %v119
    %v274 = vpop.f32.mrf.mxu0
    %v275 = vadd.f32 %v240, %v274
    %276 = vmatmul.f32.gmra.mxu0 %v122
    %v277 = vpop.f32.mrf.mxu0
    %v278 = vadd.f32 %v240, %v277
    %279 = vmatmul.f32.gmra.mxu0 %v125
    %v280 = vpop.f32.mrf.mxu0
    %v281 = vadd.f32 %v240, %v280
    %282 = vdwg.mxu0
    %283 = vst.msk [vmem:[#allocation5] sm:$0xff] %vm168, %v260
    %284 = vst.msk [vmem:[#allocation5 + $0x8] sm:$0xff] %vm168, %v263
    %285 = vst.msk [vmem:[#allocation5 + $0x10] sm:$0xff] %vm168, %v266
    %286 = vst.msk [vmem:[#allocation5 + $0x18] sm:$0xff] %vm168, %v269
    %287 = vst.msk [vmem:[#allocation5 + $0x20] sm:$0xff] %vm168, %v272
    %288 = vst.msk [vmem:[#allocation5 + $0x28] sm:$0xff] %vm168, %v275
    %289 = vst.msk [vmem:[#allocation5 + $0x30] sm:$0xff] %vm168, %v278
    %290 = vst.msk [vmem:[#allocation5 + $0x38] sm:$0xff] %vm168, %v281
    %s291 = scalar_lea.vmem %s1, 48
    %v292 = vld [vmem:[%s291] sm:$0xff]
    %v293 = vld [vmem:[%s291 + $0x8] sm:$0xff]
    %s294 = scalar_lea.vmem %s3, 3
    %v295 = vld [vmem:[%s294] sm:$0x1]
    %v297 = vperm.slane %v295, 0
    %299 = vmatpush.msra.mxu0 0.0
    %300 = vmatpush.msra.mxu0 0.0
    %301 = vmatpush.msra.mxu0 0.0
    %302 = vmatpush.msra.mxu0 0.0
    %303 = vmatpush.msra.mxu0 0.0
    %304 = vmatpush.msra.mxu0 0.0
    %305 = vmatpush.msra.mxu0 0.0
    %306 = vmatpush.msra.mxu0 0.0
    %307 = vmatpush.msra.mxu0 0.0
    %308 = vmatpush.msra.mxu0 0.0
    %309 = vmatpush.msra.mxu0 0.0
    %310 = vmatpush.msra.mxu0 0.0
    %311 = vmatpush.msra.mxu0 0.0
    %312 = vmatpush.msra.mxu0 0.0
    %313 = vmatpush.msra.mxu0 %v293
    %314 = vmatpush.msra.mxu0 %v292
    %315 = vmatmul.f32.gmra.mxu0 %v104
    %v316 = vpop.f32.mrf.mxu0
    %v317 = vadd.f32 %v297, %v316
    %318 = vmatmul.f32.gmra.mxu0 %v107
    %v319 = vpop.f32.mrf.mxu0
    %v320 = vadd.f32 %v297, %v319
    %321 = vmatmul.f32.gmra.mxu0 %v110
    %v322 = vpop.f32.mrf.mxu0
    %v323 = vadd.f32 %v297, %v322
    %324 = vmatmul.f32.gmra.mxu0 %v113
    %v325 = vpop.f32.mrf.mxu0
    %v326 = vadd.f32 %v297, %v325
    %327 = vmatmul.f32.gmra.mxu0 %v116
    %v328 = vpop.f32.mrf.mxu0
    %v329 = vadd.f32 %v297, %v328
    %330 = vmatmul.f32.gmra.mxu0 %v119
    %v331 = vpop.f32.mrf.mxu0
    %v332 = vadd.f32 %v297, %v331
    %333 = vmatmul.f32.gmra.mxu0 %v122
    %v334 = vpop.f32.mrf.mxu0
    %v335 = vadd.f32 %v297, %v334
    %336 = vmatmul.f32.gmra.mxu0 %v125
    %v337 = vpop.f32.mrf.mxu0
    %v338 = vadd.f32 %v297, %v337
    %339 = vdwg.mxu0
    %340 = vst.msk [vmem:[#allocation6] sm:$0xff] %vm168, %v317
    %341 = vst.msk [vmem:[#allocation6 + $0x8] sm:$0xff] %vm168, %v320
    %342 = vst.msk [vmem:[#allocation6 + $0x10] sm:$0xff] %vm168, %v323
    %343 = vst.msk [vmem:[#allocation6 + $0x18] sm:$0xff] %vm168, %v326
    %344 = vst.msk [vmem:[#allocation6 + $0x20] sm:$0xff] %vm168, %v329
    %345 = vst.msk [vmem:[#allocation6 + $0x28] sm:$0xff] %vm168, %v332
    %346 = vst.msk [vmem:[#allocation6 + $0x30] sm:$0xff] %vm168, %v335
    %347 = vst.msk [vmem:[#allocation6 + $0x38] sm:$0xff] %vm168, %v338
    %v348 = vld [vmem:[#allocation8] sm:$0xff]
    %v349 = vld [vmem:[#allocation8 + $0x8] sm:$0xff]
    %v350 = vld [vmem:[#allocation8 + $0x10] sm:$0xff]
    %v351 = vld [vmem:[#allocation8 + $0x18] sm:$0xff]
    %s352 = scalar_lea.vmem [#allocation8], 32
    %v353 = vld [vmem:[%s352] sm:$0xff]
    %v354 = vld [vmem:[%s352 + $0x8] sm:$0xff]
    %v355 = vld [vmem:[%s352 + $0x10] sm:$0xff]
    %v356 = vld [vmem:[%s352 + $0x18] sm:$0xff]
    %s357 = scalar_lea.vmem [#allocation8], 64
    %v358 = vld [vmem:[%s357] sm:$0xff]
    %v359 = vld [vmem:[%s357 + $0x8] sm:$0xff]
    %v360 = vld [vmem:[%s357 + $0x10] sm:$0xff]
    %v361 = vld [vmem:[%s357 + $0x18] sm:$0xff]
    %s362 = scalar_lea.vmem [#allocation8], 96
    %v363 = vld [vmem:[%s362] sm:$0xff]
    %v364 = vld [vmem:[%s362 + $0x8] sm:$0xff]
    %v365 = vld [vmem:[%s362 + $0x10] sm:$0xff]
    %v366 = vld [vmem:[%s362 + $0x18] sm:$0xff]
    %v367 = vld [vmem:[#allocation3] sm:$0xff]
    %v369 = vsel %vm168, 0.0, 0
    %371 = vmatpush.msra.mxu0 0.0
    %372 = vmatpush.msra.mxu0 0.0
    %373 = vmatpush.msra.mxu0 0.0
    %374 = vmatpush.msra.mxu0 0.0
    %375 = vmatpush.msra.mxu0 0.0
    %376 = vmatpush.msra.mxu0 0.0
    %377 = vmatpush.msra.mxu0 0.0
    %378 = vmatpush.msra.mxu0 0.0
    %379 = vmatpush.msra.mxu0 0.0
    %380 = vmatpush.msra.mxu0 0.0
    %381 = vmatpush.msra.mxu0 0.0
    %382 = vmatpush.msra.mxu0 0.0
    %383 = vmatpush.msra.mxu0 %v351
    %384 = vmatpush.msra.mxu0 %v350
    %385 = vmatpush.msra.mxu0 %v349
    %386 = vmatpush.msra.mxu0 %v348
    %387 = vmatmul.f32.gmra.mxu0 %v369
    %v388 = vpop.f32.mrf.mxu0
    %v389 = vadd.f32 0.0, %v388
    %390 = vdwg.mxu0
    %v391 = vadd.f32 %v367, %v389
    %v392 = vld [vmem:[#allocation4] sm:$0xff]
    %393 = vmatpush.msra.mxu0 0.0
    %394 = vmatpush.msra.mxu0 0.0
    %395 = vmatpush.msra.mxu0 0.0
    %396 = vmatpush.msra.mxu0 0.0
    %397 = vmatpush.msra.mxu0 0.0
    %398 = vmatpush.msra.mxu0 0.0
    %399 = vmatpush.msra.mxu0 0.0
    %400 = vmatpush.msra.mxu0 0.0
    %401 = vmatpush.msra.mxu0 0.0
    %402 = vmatpush.msra.mxu0 0.0
    %403 = vmatpush.msra.mxu0 0.0
    %404 = vmatpush.msra.mxu0 0.0
    %405 = vmatpush.msra.mxu0 %v356
    %406 = vmatpush.msra.mxu0 %v355
    %407 = vmatpush.msra.mxu0 %v354
    %408 = vmatpush.msra.mxu0 %v353
    %409 = vmatmul.f32.gmra.mxu0 %v369
    %v410 = vpop.f32.mrf.mxu0
    %v411 = vadd.f32 0.0, %v410
    %412 = vdwg.mxu0
    %v413 = vadd.f32 %v392, %v411
    %v414 = vld [vmem:[#allocation5] sm:$0xff]
    %415 = vmatpush.msra.mxu0 0.0
    %416 = vmatpush.msra.mxu0 0.0
    %417 = vmatpush.msra.mxu0 0.0
    %418 = vmatpush.msra.mxu0 0.0
    %419 = vmatpush.msra.mxu0 0.0
    %420 = vmatpush.msra.mxu0 0.0
    %421 = vmatpush.msra.mxu0 0.0
    %422 = vmatpush.msra.mxu0 0.0
    %423 = vmatpush.msra.mxu0 0.0
    %424 = vmatpush.msra.mxu0 0.0
    %425 = vmatpush.msra.mxu0 0.0
    %426 = vmatpush.msra.mxu0 0.0
    %427 = vmatpush.msra.mxu0 %v361
    %428 = vmatpush.msra.mxu0 %v360
    %429 = vmatpush.msra.mxu0 %v359
    %430 = vmatpush.msra.mxu0 %v358
    %431 = vmatmul.f32.gmra.mxu0 %v369
    %v432 = vpop.f32.mrf.mxu0
    %v433 = vadd.f32 0.0, %v432
    %434 = vdwg.mxu0
    %v435 = vadd.f32 %v414, %v433
    %v436 = vld [vmem:[#allocation6] sm:$0xff]
    %437 = vmatpush.msra.mxu0 0.0
    %438 = vmatpush.msra.mxu0 0.0
    %439 = vmatpush.msra.mxu0 0.0
    %440 = vmatpush.msra.mxu0 0.0
    %441 = vmatpush.msra.mxu0 0.0
    %442 = vmatpush.msra.mxu0 0.0
    %443 = vmatpush.msra.mxu0 0.0
    %444 = vmatpush.msra.mxu0 0.0
    %445 = vmatpush.msra.mxu0 0.0
    %446 = vmatpush.msra.mxu0 0.0
    %447 = vmatpush.msra.mxu0 0.0
    %448 = vmatpush.msra.mxu0 0.0
    %449 = vmatpush.msra.mxu0 %v366
    %450 = vmatpush.msra.mxu0 %v365
    %451 = vmatpush.msra.mxu0 %v364
    %452 = vmatpush.msra.mxu0 %v363
    %453 = vmatmul.f32.gmra.mxu0 %v369
    %v454 = vpop.f32.mrf.mxu0
    %v455 = vadd.f32 0.0, %v454
    %456 = vdwg.mxu0
    %v457 = vadd.f32 %v436, %v455
    %v458 = vmul.f32 %v391, 0.5
    %v459 = vtanh.pop %v458
    %v460 = vmul.f32 %v459, 0.5
    %v461 = vadd.f32 %v460, 0.5
    %v462 = vmul.f32 %v413, 0.5
    %v463 = vtanh.pop %v462
    %v464 = vmul.f32 %v463, 0.5
    %v465 = vadd.f32 %v464, 0.5
    %v466 = vtanh.pop %v435
    %v467 = vmul.f32 %v457, 0.5
    %v468 = vtanh.pop %v467
    %v469 = vmul.f32 %v468, 0.5
    %v470 = vadd.f32 %v469, 0.5
    %v471 = vmul.f32 %v465, 0.0
    %v472 = vmul.f32 %v461, %v466
    %v473 = vadd.f32 %v471, %v472
    %v474 = vtanh.pop %v473
    %v475 = vmul.f32 %v470, %v474
    %476 = vst.msk [vmem:[#allocation2] sm:$0xff] %vm168, %v475
    %s477 = scalar_lea.vmem [#allocation3], 8
    %v478 = vld [vmem:[%s477] sm:$0xff]
    %v480 = vsel %vm168, %v475, 0
    %482 = vmatpush.msra.mxu0 0.0
    %483 = vmatpush.msra.mxu0 0.0
    %484 = vmatpush.msra.mxu0 0.0
    %485 = vmatpush.msra.mxu0 0.0
    %486 = vmatpush.msra.mxu0 0.0
    %487 = vmatpush.msra.mxu0 0.0
    %488 = vmatpush.msra.mxu0 0.0
    %489 = vmatpush.msra.mxu0 0.0
    %490 = vmatpush.msra.mxu0 0.0
    %491 = vmatpush.msra.mxu0 0.0
    %492 = vmatpush.msra.mxu0 0.0
    %493 = vmatpush.msra.mxu0 0.0
    %494 = vmatpush.msra.mxu0 %v351
    %495 = vmatpush.msra.mxu0 %v350
    %496 = vmatpush.msra.mxu0 %v349
    %497 = vmatpush.msra.mxu0 %v348
    %498 = vmatmul.f32.gmra.mxu0 %v480
    %v499 = vpop.f32.mrf.mxu0
    %v500 = vadd.f32 0.0, %v499
    %501 = vdwg.mxu0
    %v502 = vadd.f32 %v478, %v500
    %s503 = scalar_lea.vmem [#allocation4], 8
    %v504 = vld [vmem:[%s503] sm:$0xff]
    %505 = vmatpush.msra.mxu0 0.0
    %506 = vmatpush.msra.mxu0 0.0
    %507 = vmatpush.msra.mxu0 0.0
    %508 = vmatpush.msra.mxu0 0.0
    %509 = vmatpush.msra.mxu0 0.0
    %510 = vmatpush.msra.mxu0 0.0
    %511 = vmatpush.msra.mxu0 0.0
    %512 = vmatpush.msra.mxu0 0.0
    %513 = vmatpush.msra.mxu0 0.0
    %514 = vmatpush.msra.mxu0 0.0
    %515 = vmatpush.msra.mxu0 0.0
    %516 = vmatpush.msra.mxu0 0.0
    %517 = vmatpush.msra.mxu0 %v356
    %518 = vmatpush.msra.mxu0 %v355
    %519 = vmatpush.msra.mxu0 %v354
    %520 = vmatpush.msra.mxu0 %v353
    %521 = vmatmul.f32.gmra.mxu0 %v480
    %v522 = vpop.f32.mrf.mxu0
    %v523 = vadd.f32 0.0, %v522
    %524 = vdwg.mxu0
    %v525 = vadd.f32 %v504, %v523
    %s526 = scalar_lea.vmem [#allocation5], 8
    %v527 = vld [vmem:[%s526] sm:$0xff]
    %528 = vmatpush.msra.mxu0 0.0
    %529 = vmatpush.msra.mxu0 0.0
    %530 = vmatpush.msra.mxu0 0.0
    %531 = vmatpush.msra.mxu0 0.0
    %532 = vmatpush.msra.mxu0 0.0
    %533 = vmatpush.msra.mxu0 0.0
    %534 = vmatpush.msra.mxu0 0.0
    %535 = vmatpush.msra.mxu0 0.0
    %536 = vmatpush.msra.mxu0 0.0
    %537 = vmatpush.msra.mxu0 0.0
    %538 = vmatpush.msra.mxu0 0.0
    %539 = vmatpush.msra.mxu0 0.0
    %540 = vmatpush.msra.mxu0 %v361
    %541 = vmatpush.msra.mxu0 %v360
    %542 = vmatpush.msra.mxu0 %v359
    %543 = vmatpush.msra.mxu0 %v358
    %544 = vmatmul.f32.gmra.mxu0 %v480
    %v545 = vpop.f32.mrf.mxu0
    %v546 = vadd.f32 0.0, %v545
    %547 = vdwg.mxu0
    %v548 = vadd.f32 %v527, %v546
    %s549 = scalar_lea.vmem [#allocation6], 8
    %v550 = vld [vmem:[%s549] sm:$0xff]
    %551 = vmatpush.msra.mxu0 0.0
    %552 = vmatpush.msra.mxu0 0.0
    %553 = vmatpush.msra.mxu0 0.0
    %554 = vmatpush.msra.mxu0 0.0
    %555 = vmatpush.msra.mxu0 0.0
    %556 = vmatpush.msra.mxu0 0.0
    %557 = vmatpush.msra.mxu0 0.0
    %558 = vmatpush.msra.mxu0 0.0
    %559 = vmatpush.msra.mxu0 0.0
    %560 = vmatpush.msra.mxu0 0.0
    %561 = vmatpush.msra.mxu0 0.0
    %562 = vmatpush.msra.mxu0 0.0
    %563 = vmatpush.msra.mxu0 %v366
    %564 = vmatpush.msra.mxu0 %v365
    %565 = vmatpush.msra.mxu0 %v364
    %566 = vmatpush.msra.mxu0 %v363
    %567 = vmatmul.f32.gmra.mxu0 %v480
    %v568 = vpop.f32.mrf.mxu0
    %v569 = vadd.f32 0.0, %v568
    %570 = vdwg.mxu0
    %v571 = vadd.f32 %v550, %v569
    %v572 = vmul.f32 %v502, 0.5
    %v573 = vtanh.pop %v572
    %v574 = vmul.f32 %v573, 0.5
    %v575 = vadd.f32 %v574, 0.5
    %v576 = vmul.f32 %v525, 0.5
    %v577 = vtanh.pop %v576
    %v578 = vmul.f32 %v577, 0.5
    %v579 = vadd.f32 %v578, 0.5
    %v580 = vtanh.pop %v548
    %v581 = vmul.f32 %v571, 0.5
    %v582 = vtanh.pop %v581
    %v583 = vmul.f32 %v582, 0.5
    %v584 = vadd.f32 %v583, 0.5
    %v585 = vmul.f32 %v579, %v473
    %v586 = vmul.f32 %v575, %v580
    %v587 = vadd.f32 %v585, %v586
    %v588 = vtanh.pop %v587
    %v589 = vmul.f32 %v584, %v588
    %s590 = scalar_lea.vmem [#allocation2], 8
    %591 = vst.msk [vmem:[%s590] sm:$0xff] %vm168, %v589
    %s592 = scalar_lea.vmem [#allocation3], 16
    %v593 = vld [vmem:[%s592] sm:$0xff]
    %v595 = vsel %vm168, %v589, 0
    %597 = vmatpush.msra.mxu0 0.0
    %598 = vmatpush.msra.mxu0 0.0
    %599 = vmatpush.msra.mxu0 0.0
    %600 = vmatpush.msra.mxu0 0.0
    %601 = vmatpush.msra.mxu0 0.0
    %602 = vmatpush.msra.mxu0 0.0
    %603 = vmatpush.msra.mxu0 0.0
    %604 = vmatpush.msra.mxu0 0.0
    %605 = vmatpush.msra.mxu0 0.0
    %606 = vmatpush.msra.mxu0 0.0
    %607 = vmatpush.msra.mxu0 0.0
    %608 = vmatpush.msra.mxu0 0.0
    %609 = vmatpush.msra.mxu0 %v351
    %610 = vmatpush.msra.mxu0 %v350
    %611 = vmatpush.msra.mxu0 %v349
    %612 = vmatpush.msra.mxu0 %v348
    %613 = vmatmul.f32.gmra.mxu0 %v595
    %v614 = vpop.f32.mrf.mxu0
    %v615 = vadd.f32 0.0, %v614
    %616 = vdwg.mxu0
    %v617 = vadd.f32 %v593, %v615
    %s618 = scalar_lea.vmem [#allocation4], 16
    %v619 = vld [vmem:[%s618] sm:$0xff]
    %620 = vmatpush.msra.mxu0 0.0
    %621 = vmatpush.msra.mxu0 0.0
    %622 = vmatpush.msra.mxu0 0.0
    %623 = vmatpush.msra.mxu0 0.0
    %624 = vmatpush.msra.mxu0 0.0
    %625 = vmatpush.msra.mxu0 0.0
    %626 = vmatpush.msra.mxu0 0.0
    %627 = vmatpush.msra.mxu0 0.0
    %628 = vmatpush.msra.mxu0 0.0
    %629 = vmatpush.msra.mxu0 0.0
    %630 = vmatpush.msra.mxu0 0.0
    %631 = vmatpush.msra.mxu0 0.0
    %632 = vmatpush.msra.mxu0 %v356
    %633 = vmatpush.msra.mxu0 %v355
    %634 = vmatpush.msra.mxu0 %v354
    %635 = vmatpush.msra.mxu0 %v353
    %636 = vmatmul.f32.gmra.mxu0 %v595
    %v637 = vpop.f32.mrf.mxu0
    %v638 = vadd.f32 0.0, %v637
    %639 = vdwg.mxu0
    %v640 = vadd.f32 %v619, %v638
    %s641 = scalar_lea.vmem [#allocation5], 16
    %v642 = vld [vmem:[%s641] sm:$0xff]
    %643 = vmatpush.msra.mxu0 0.0
    %644 = vmatpush.msra.mxu0 0.0
    %645 = vmatpush.msra.mxu0 0.0
    %646 = vmatpush.msra.mxu0 0.0
    %647 = vmatpush.msra.mxu0 0.0
    %648 = vmatpush.msra.mxu0 0.0
    %649 = vmatpush.msra.mxu0 0.0
    %650 = vmatpush.msra.mxu0 0.0
    %651 = vmatpush.msra.mxu0 0.0
    %652 = vmatpush.msra.mxu0 0.0
    %653 = vmatpush.msra.mxu0 0.0
    %654 = vmatpush.msra.mxu0 0.0
    %655 = vmatpush.msra.mxu0 %v361
    %656 = vmatpush.msra.mxu0 %v360
    %657 = vmatpush.msra.mxu0 %v359
    %658 = vmatpush.msra.mxu0 %v358
    %659 = vmatmul.f32.gmra.mxu0 %v595
    %v660 = vpop.f32.mrf.mxu0
    %v661 = vadd.f32 0.0, %v660
    %662 = vdwg.mxu0
    %v663 = vadd.f32 %v642, %v661
    %s664 = scalar_lea.vmem [#allocation6], 16
    %v665 = vld [vmem:[%s664] sm:$0xff]
    %666 = vmatpush.msra.mxu0 0.0
    %667 = vmatpush.msra.mxu0 0.0
    %668 = vmatpush.msra.mxu0 0.0
    %669 = vmatpush.msra.mxu0 0.0
    %670 = vmatpush.msra.mxu0 0.0
    %671 = vmatpush.msra.mxu0 0.0
    %672 = vmatpush.msra.mxu0 0.0
    %673 = vmatpush.msra.mxu0 0.0
    %674 = vmatpush.msra.mxu0 0.0
    %675 = vmatpush.msra.mxu0 0.0
    %676 = vmatpush.msra.mxu0 0.0
    %677 = vmatpush.msra.mxu0 0.0
    %678 = vmatpush.msra.mxu0 %v366
    %679 = vmatpush.msra.mxu0 %v365
    %680 = vmatpush.msra.mxu0 %v364
    %681 = vmatpush.msra.mxu0 %v363
    %682 = vmatmul.f32.gmra.mxu0 %v595
    %v683 = vpop.f32.mrf.mxu0
    %v684 = vadd.f32 0.0, %v683
    %685 = vdwg.mxu0
    %v686 = vadd.f32 %v665, %v684
    %v687 = vmul.f32 %v617, 0.5
    %v688 = vtanh.pop %v687
    %v689 = vmul.f32 %v688, 0.5
    %v690 = vadd.f32 %v689, 0.5
    %v691 = vmul.f32 %v640, 0.5
    %v692 = vtanh.pop %v691
    %v693 = vmul.f32 %v692, 0.5
    %v694 = vadd.f32 %v693, 0.5
    %v695 = vtanh.pop %v663
    %v696 = vmul.f32 %v686, 0.5
    %v697 = vtanh.pop %v696
    %v698 = vmul.f32 %v697, 0.5
    %v699 = vadd.f32 %v698, 0.5
    %v700 = vmul.f32 %v694, %v587
    %v701 = vmul.f32 %v690, %v695
    %v702 = vadd.f32 %v700, %v701
    %v703 = vtanh.pop %v702
    %v704 = vmul.f32 %v699, %v703
    %s705 = scalar_lea.vmem [#allocation2], 16
    %706 = vst.msk [vmem:[%s705] sm:$0xff] %vm168, %v704
    %s707 = scalar_lea.vmem [#allocation3], 24
    %v708 = vld [vmem:[%s707] sm:$0xff]
    %v710 = vsel %vm168, %v704, 0
    %712 = vmatpush.msra.mxu0 0.0
    %713 = vmatpush.msra.mxu0 0.0
    %714 = vmatpush.msra.mxu0 0.0
    %715 = vmatpush.msra.mxu0 0.0
    %716 = vmatpush.msra.mxu0 0.0
    %717 = vmatpush.msra.mxu0 0.0
    %718 = vmatpush.msra.mxu0 0.0
    %719 = vmatpush.msra.mxu0 0.0
    %720 = vmatpush.msra.mxu0 0.0
    %721 = vmatpush.msra.mxu0 0.0
    %722 = vmatpush.msra.mxu0 0.0
    %723 = vmatpush.msra.mxu0 0.0
    %724 = vmatpush.msra.mxu0 %v351
    %725 = vmatpush.msra.mxu0 %v350
    %726 = vmatpush.msra.mxu0 %v349
    %727 = vmatpush.msra.mxu0 %v348
    %728 = vmatmul.f32.gmra.mxu0 %v710
    %v729 = vpop.f32.mrf.mxu0
    %v730 = vadd.f32 0.0, %v729
    %731 = vdwg.mxu0
    %v732 = vadd.f32 %v708, %v730
    %s733 = scalar_lea.vmem [#allocation4], 24
    %v734 = vld [vmem:[%s733] sm:$0xff]
    %735 = vmatpush.msra.mxu0 0.0
    %736 = vmatpush.msra.mxu0 0.0
    %737 = vmatpush.msra.mxu0 0.0
    %738 = vmatpush.msra.mxu0 0.0
    %739 = vmatpush.msra.mxu0 0.0
    %740 = vmatpush.msra.mxu0 0.0
    %741 = vmatpush.msra.mxu0 0.0
    %742 = vmatpush.msra.mxu0 0.0
    %743 = vmatpush.msra.mxu0 0.0
    %744 = vmatpush.msra.mxu0 0.0
    %745 = vmatpush.msra.mxu0 0.0
    %746 = vmatpush.msra.mxu0 0.0
    %747 = vmatpush.msra.mxu0 %v356
    %748 = vmatpush.msra.mxu0 %v355
    %749 = vmatpush.msra.mxu0 %v354
    %750 = vmatpush.msra.mxu0 %v353
    %751 = vmatmul.f32.gmra.mxu0 %v710
    %v752 = vpop.f32.mrf.mxu0
    %v753 = vadd.f32 0.0, %v752
    %754 = vdwg.mxu0
    %v755 = vadd.f32 %v734, %v753
    %s756 = scalar_lea.vmem [#allocation5], 24
    %v757 = vld [vmem:[%s756] sm:$0xff]
    %758 = vmatpush.msra.mxu0 0.0
    %759 = vmatpush.msra.mxu0 0.0
    %760 = vmatpush.msra.mxu0 0.0
    %761 = vmatpush.msra.mxu0 0.0
    %762 = vmatpush.msra.mxu0 0.0
    %763 = vmatpush.msra.mxu0 0.0
    %764 = vmatpush.msra.mxu0 0.0
    %765 = vmatpush.msra.mxu0 0.0
    %766 = vmatpush.msra.mxu0 0.0
    %767 = vmatpush.msra.mxu0 0.0
    %768 = vmatpush.msra.mxu0 0.0
    %769 = vmatpush.msra.mxu0 0.0
    %770 = vmatpush.msra.mxu0 %v361
    %771 = vmatpush.msra.mxu0 %v360
    %772 = vmatpush.msra.mxu0 %v359
    %773 = vmatpush.msra.mxu0 %v358
    %774 = vmatmul.f32.gmra.mxu0 %v710
    %v775 = vpop.f32.mrf.mxu0
    %v776 = vadd.f32 0.0, %v775
    %777 = vdwg.mxu0
    %v778 = vadd.f32 %v757, %v776
    %s779 = scalar_lea.vmem [#allocation6], 24
    %v780 = vld [vmem:[%s779] sm:$0xff]
    %781 = vmatpush.msra.mxu0 0.0
    %782 = vmatpush.msra.mxu0 0.0
    %783 = vmatpush.msra.mxu0 0.0
    %784 = vmatpush.msra.mxu0 0.0
    %785 = vmatpush.msra.mxu0 0.0
    %786 = vmatpush.msra.mxu0 0.0
    %787 = vmatpush.msra.mxu0 0.0
    %788 = vmatpush.msra.mxu0 0.0
    %789 = vmatpush.msra.mxu0 0.0
    %790 = vmatpush.msra.mxu0 0.0
    %791 = vmatpush.msra.mxu0 0.0
    %792 = vmatpush.msra.mxu0 0.0
    %793 = vmatpush.msra.mxu0 %v366
    %794 = vmatpush.msra.mxu0 %v365
    %795 = vmatpush.msra.mxu0 %v364
    %796 = vmatpush.msra.mxu0 %v363
    %797 = vmatmul.f32.gmra.mxu0 %v710
    %v798 = vpop.f32.mrf.mxu0
    %v799 = vadd.f32 0.0, %v798
    %800 = vdwg.mxu0
    %v801 = vadd.f32 %v780, %v799
    %v802 = vmul.f32 %v732, 0.5
    %v803 = vtanh.pop %v802
    %v804 = vmul.f32 %v803, 0.5
    %v805 = vadd.f32 %v804, 0.5
    %v806 = vmul.f32 %v755, 0.5
    %v807 = vtanh.pop %v806
    %v808 = vmul.f32 %v807, 0.5
    %v809 = vadd.f32 %v808, 0.5
    %v810 = vtanh.pop %v778
    %v811 = vmul.f32 %v801, 0.5
    %v812 = vtanh.pop %v811
    %v813 = vmul.f32 %v812, 0.5
    %v814 = vadd.f32 %v813, 0.5
    %v815 = vmul.f32 %v809, %v702
    %v816 = vmul.f32 %v805, %v810
    %v817 = vadd.f32 %v815, %v816
    %v818 = vtanh.pop %v817
    %v819 = vmul.f32 %v814, %v818
    %s820 = scalar_lea.vmem [#allocation2], 24
    %821 = vst.msk [vmem:[%s820] sm:$0xff] %vm168, %v819
    %s822 = scalar_lea.vmem [#allocation3], 32
    %v823 = vld [vmem:[%s822] sm:$0xff]
    %v825 = vsel %vm168, %v819, 0
    %827 = vmatpush.msra.mxu0 0.0
    %828 = vmatpush.msra.mxu0 0.0
    %829 = vmatpush.msra.mxu0 0.0
    %830 = vmatpush.msra.mxu0 0.0
    %831 = vmatpush.msra.mxu0 0.0
    %832 = vmatpush.msra.mxu0 0.0
    %833 = vmatpush.msra.mxu0 0.0
    %834 = vmatpush.msra.mxu0 0.0
    %835 = vmatpush.msra.mxu0 0.0
    %836 = vmatpush.msra.mxu0 0.0
    %837 = vmatpush.msra.mxu0 0.0
    %838 = vmatpush.msra.mxu0 0.0
    %839 = vmatpush.msra.mxu0 %v351
    %840 = vmatpush.msra.mxu0 %v350
    %841 = vmatpush.msra.mxu0 %v349
    %842 = vmatpush.msra.mxu0 %v348
    %843 = vmatmul.f32.gmra.mxu0 %v825
    %v844 = vpop.f32.mrf.mxu0
    %v845 = vadd.f32 0.0, %v844
    %846 = vdwg.mxu0
    %v847 = vadd.f32 %v823, %v845
    %s848 = scalar_lea.vmem [#allocation4], 32
    %v849 = vld [vmem:[%s848] sm:$0xff]
    %850 = vmatpush.msra.mxu0 0.0
    %851 = vmatpush.msra.mxu0 0.0
    %852 = vmatpush.msra.mxu0 0.0
    %853 = vmatpush.msra.mxu0 0.0
    %854 = vmatpush.msra.mxu0 0.0
    %855 = vmatpush.msra.mxu0 0.0
    %856 = vmatpush.msra.mxu0 0.0
    %857 = vmatpush.msra.mxu0 0.0
    %858 = vmatpush.msra.mxu0 0.0
    %859 = vmatpush.msra.mxu0 0.0
    %860 = vmatpush.msra.mxu0 0.0
    %861 = vmatpush.msra.mxu0 0.0
    %862 = vmatpush.msra.mxu0 %v356
    %863 = vmatpush.msra.mxu0 %v355
    %864 = vmatpush.msra.mxu0 %v354
    %865 = vmatpush.msra.mxu0 %v353
    %866 = vmatmul.f32.gmra.mxu0 %v825
    %v867 = vpop.f32.mrf.mxu0
    %v868 = vadd.f32 0.0, %v867
    %869 = vdwg.mxu0
    %v870 = vadd.f32 %v849, %v868
    %s871 = scalar_lea.vmem [#allocation5], 32
    %v872 = vld [vmem:[%s871] sm:$0xff]
    %873 = vmatpush.msra.mxu0 0.0
    %874 = vmatpush.msra.mxu0 0.0
    %875 = vmatpush.msra.mxu0 0.0
    %876 = vmatpush.msra.mxu0 0.0
    %877 = vmatpush.msra.mxu0 0.0
    %878 = vmatpush.msra.mxu0 0.0
    %879 = vmatpush.msra.mxu0 0.0
    %880 = vmatpush.msra.mxu0 0.0
    %881 = vmatpush.msra.mxu0 0.0
    %882 = vmatpush.msra.mxu0 0.0
    %883 = vmatpush.msra.mxu0 0.0
    %884 = vmatpush.msra.mxu0 0.0
    %885 = vmatpush.msra.mxu0 %v361
    %886 = vmatpush.msra.mxu0 %v360
    %887 = vmatpush.msra.mxu0 %v359
    %888 = vmatpush.msra.mxu0 %v358
    %889 = vmatmul.f32.gmra.mxu0 %v825
    %v890 = vpop.f32.mrf.mxu0
    %v891 = vadd.f32 0.0, %v890
    %892 = vdwg.mxu0
    %v893 = vadd.f32 %v872, %v891
    %s894 = scalar_lea.vmem [#allocation6], 32
    %v895 = vld [vmem:[%s894] sm:$0xff]
    %896 = vmatpush.msra.mxu0 0.0
    %897 = vmatpush.msra.mxu0 0.0
    %898 = vmatpush.msra.mxu0 0.0
    %899 = vmatpush.msra.mxu0 0.0
    %900 = vmatpush.msra.mxu0 0.0
    %901 = vmatpush.msra.mxu0 0.0
    %902 = vmatpush.msra.mxu0 0.0
    %903 = vmatpush.msra.mxu0 0.0
    %904 = vmatpush.msra.mxu0 0.0
    %905 = vmatpush.msra.mxu0 0.0
    %906 = vmatpush.msra.mxu0 0.0
    %907 = vmatpush.msra.mxu0 0.0
    %908 = vmatpush.msra.mxu0 %v366
    %909 = vmatpush.msra.mxu0 %v365
    %910 = vmatpush.msra.mxu0 %v364
    %911 = vmatpush.msra.mxu0 %v363
    %912 = vmatmul.f32.gmra.mxu0 %v825
    %v913 = vpop.f32.mrf.mxu0
    %v914 = vadd.f32 0.0, %v913
    %915 = vdwg.mxu0
    %v916 = vadd.f32 %v895, %v914
    %v917 = vmul.f32 %v847, 0.5
    %v918 = vtanh.pop %v917
    %v919 = vmul.f32 %v918, 0.5
    %v920 = vadd.f32 %v919, 0.5
    %v921 = vmul.f32 %v870, 0.5
    %v922 = vtanh.pop %v921
    %v923 = vmul.f32 %v922, 0.5
    %v924 = vadd.f32 %v923, 0.5
    %v925 = vtanh.pop %v893
    %v926 = vmul.f32 %v916, 0.5
    %v927 = vtanh.pop %v926
    %v928 = vmul.f32 %v927, 0.5
    %v929 = vadd.f32 %v928, 0.5
    %v930 = vmul.f32 %v924, %v817
    %v931 = vmul.f32 %v920, %v925
    %v932 = vadd.f32 %v930, %v931
    %v933 = vtanh.pop %v932
    %v934 = vmul.f32 %v929, %v933
    %s935 = scalar_lea.vmem [#allocation2], 32
    %936 = vst.msk [vmem:[%s935] sm:$0xff] %vm168, %v934
    %s937 = scalar_lea.vmem [#allocation3], 40
    %v938 = vld [vmem:[%s937] sm:$0xff]
    %v940 = vsel %vm168, %v934, 0
    %942 = vmatpush.msra.mxu0 0.0
    %943 = vmatpush.msra.mxu0 0.0
    %944 = vmatpush.msra.mxu0 0.0
    %945 = vmatpush.msra.mxu0 0.0
    %946 = vmatpush.msra.mxu0 0.0
    %947 = vmatpush.msra.mxu0 0.0
    %948 = vmatpush.msra.mxu0 0.0
    %949 = vmatpush.msra.mxu0 0.0
    %950 = vmatpush.msra.mxu0 0.0
    %951 = vmatpush.msra.mxu0 0.0
    %952 = vmatpush.msra.mxu0 0.0
    %953 = vmatpush.msra.mxu0 0.0
    %954 = vmatpush.msra.mxu0 %v351
    %955 = vmatpush.msra.mxu0 %v350
    %956 = vmatpush.msra.mxu0 %v349
    %957 = vmatpush.msra.mxu0 %v348
    %958 = vmatmul.f32.gmra.mxu0 %v940
    %v959 = vpop.f32.mrf.mxu0
    %v960 = vadd.f32 0.0, %v959
    %961 = vdwg.mxu0
    %v962 = vadd.f32 %v938, %v960
    %s963 = scalar_lea.vmem [#allocation4], 40
    %v964 = vld [vmem:[%s963] sm:$0xff]
    %965 = vmatpush.msra.mxu0 0.0
    %966 = vmatpush.msra.mxu0 0.0
    %967 = vmatpush.msra.mxu0 0.0
    %968 = vmatpush.msra.mxu0 0.0
    %969 = vmatpush.msra.mxu0 0.0
    %970 = vmatpush.msra.mxu0 0.0
    %971 = vmatpush.msra.mxu0 0.0
    %972 = vmatpush.msra.mxu0 0.0
    %973 = vmatpush.msra.mxu0 0.0
    %974 = vmatpush.msra.mxu0 0.0
    %975 = vmatpush.msra.mxu0 0.0
    %976 = vmatpush.msra.mxu0 0.0
    %977 = vmatpush.msra.mxu0 %v356
    %978 = vmatpush.msra.mxu0 %v355
    %979 = vmatpush.msra.mxu0 %v354
    %980 = vmatpush.msra.mxu0 %v353
    %981 = vmatmul.f32.gmra.mxu0 %v940
    %v982 = vpop.f32.mrf.mxu0
    %v983 = vadd.f32 0.0, %v982
    %984 = vdwg.mxu0
    %v985 = vadd.f32 %v964, %v983
    %s986 = scalar_lea.vmem [#allocation5], 40
    %v987 = vld [vmem:[%s986] sm:$0xff]
    %988 = vmatpush.msra.mxu0 0.0
    %989 = vmatpush.msra.mxu0 0.0
    %990 = vmatpush.msra.mxu0 0.0
    %991 = vmatpush.msra.mxu0 0.0
    %992 = vmatpush.msra.mxu0 0.0
    %993 = vmatpush.msra.mxu0 0.0
    %994 = vmatpush.msra.mxu0 0.0
    %995 = vmatpush.msra.mxu0 0.0
    %996 = vmatpush.msra.mxu0 0.0
    %997 = vmatpush.msra.mxu0 0.0
    %998 = vmatpush.msra.mxu0 0.0
    %999 = vmatpush.msra.mxu0 0.0
    %1000 = vmatpush.msra.mxu0 %v361
    %1001 = vmatpush.msra.mxu0 %v360
    %1002 = vmatpush.msra.mxu0 %v359
    %1003 = vmatpush.msra.mxu0 %v358
    %1004 = vmatmul.f32.gmra.mxu0 %v940
    %v1005 = vpop.f32.mrf.mxu0
    %v1006 = vadd.f32 0.0, %v1005
    %1007 = vdwg.mxu0
    %v1008 = vadd.f32 %v987, %v1006
    %s1009 = scalar_lea.vmem [#allocation6], 40
    %v1010 = vld [vmem:[%s1009] sm:$0xff]
    %1011 = vmatpush.msra.mxu0 0.0
    %1012 = vmatpush.msra.mxu0 0.0
    %1013 = vmatpush.msra.mxu0 0.0
    %1014 = vmatpush.msra.mxu0 0.0
    %1015 = vmatpush.msra.mxu0 0.0
    %1016 = vmatpush.msra.mxu0 0.0
    %1017 = vmatpush.msra.mxu0 0.0
    %1018 = vmatpush.msra.mxu0 0.0
    %1019 = vmatpush.msra.mxu0 0.0
    %1020 = vmatpush.msra.mxu0 0.0
    %1021 = vmatpush.msra.mxu0 0.0
    %1022 = vmatpush.msra.mxu0 0.0
    %1023 = vmatpush.msra.mxu0 %v366
    %1024 = vmatpush.msra.mxu0 %v365
    %1025 = vmatpush.msra.mxu0 %v364
    %1026 = vmatpush.msra.mxu0 %v363
    %1027 = vmatmul.f32.gmra.mxu0 %v940
    %v1028 = vpop.f32.mrf.mxu0
    %v1029 = vadd.f32 0.0, %v1028
    %1030 = vdwg.mxu0
    %v1031 = vadd.f32 %v1010, %v1029
    %v1032 = vmul.f32 %v962, 0.5
    %v1033 = vtanh.pop %v1032
    %v1034 = vmul.f32 %v1033, 0.5
    %v1035 = vadd.f32 %v1034, 0.5
    %v1036 = vmul.f32 %v985, 0.5
    %v1037 = vtanh.pop %v1036
    %v1038 = vmul.f32 %v1037, 0.5
    %v1039 = vadd.f32 %v1038, 0.5
    %v1040 = vtanh.pop %v1008
    %v1041 = vmul.f32 %v1031, 0.5
    %v1042 = vtanh.pop %v1041
    %v1043 = vmul.f32 %v1042, 0.5
    %v1044 = vadd.f32 %v1043, 0.5
    %v1045 = vmul.f32 %v1039, %v932
    %v1046 = vmul.f32 %v1035, %v1040
    %v1047 = vadd.f32 %v1045, %v1046
    %v1048 = vtanh.pop %v1047
    %v1049 = vmul.f32 %v1044, %v1048
    %s1050 = scalar_lea.vmem [#allocation2], 40
    %1051 = vst.msk [vmem:[%s1050] sm:$0xff] %vm168, %v1049
    %s1052 = scalar_lea.vmem [#allocation3], 48
    %v1053 = vld [vmem:[%s1052] sm:$0xff]
    %v1055 = vsel %vm168, %v1049, 0
    %1057 = vmatpush.msra.mxu0 0.0
    %1058 = vmatpush.msra.mxu0 0.0
    %1059 = vmatpush.msra.mxu0 0.0
    %1060 = vmatpush.msra.mxu0 0.0
    %1061 = vmatpush.msra.mxu0 0.0
    %1062 = vmatpush.msra.mxu0 0.0
    %1063 = vmatpush.msra.mxu0 0.0
    %1064 = vmatpush.msra.mxu0 0.0
    %1065 = vmatpush.msra.mxu0 0.0
    %1066 = vmatpush.msra.mxu0 0.0
    %1067 = vmatpush.msra.mxu0 0.0
    %1068 = vmatpush.msra.mxu0 0.0
    %1069 = vmatpush.msra.mxu0 %v351
    %1070 = vmatpush.msra.mxu0 %v350
    %1071 = vmatpush.msra.mxu0 %v349
    %1072 = vmatpush.msra.mxu0 %v348
    %1073 = vmatmul.f32.gmra.mxu0 %v1055
    %v1074 = vpop.f32.mrf.mxu0
    %v1075 = vadd.f32 0.0, %v1074
    %1076 = vdwg.mxu0
    %v1077 = vadd.f32 %v1053, %v1075
    %s1078 = scalar_lea.vmem [#allocation4], 48
    %v1079 = vld [vmem:[%s1078] sm:$0xff]
    %1080 = vmatpush.msra.mxu0 0.0
    %1081 = vmatpush.msra.mxu0 0.0
    %1082 = vmatpush.msra.mxu0 0.0
    %1083 = vmatpush.msra.mxu0 0.0
    %1084 = vmatpush.msra.mxu0 0.0
    %1085 = vmatpush.msra.mxu0 0.0
    %1086 = vmatpush.msra.mxu0 0.0
    %1087 = vmatpush.msra.mxu0 0.0
    %1088 = vmatpush.msra.mxu0 0.0
    %1089 = vmatpush.msra.mxu0 0.0
    %1090 = vmatpush.msra.mxu0 0.0
    %1091 = vmatpush.msra.mxu0 0.0
    %1092 = vmatpush.msra.mxu0 %v356
    %1093 = vmatpush.msra.mxu0 %v355
    %1094 = vmatpush.msra.mxu0 %v354
    %1095 = vmatpush.msra.mxu0 %v353
    %1096 = vmatmul.f32.gmra.mxu0 %v1055
    %v1097 = vpop.f32.mrf.mxu0
    %v1098 = vadd.f32 0.0, %v1097
    %1099 = vdwg.mxu0
    %v1100 = vadd.f32 %v1079, %v1098
    %s1101 = scalar_lea.vmem [#allocation5], 48
    %v1102 = vld [vmem:[%s1101] sm:$0xff]
    %1103 = vmatpush.msra.mxu0 0.0
    %1104 = vmatpush.msra.mxu0 0.0
    %1105 = vmatpush.msra.mxu0 0.0
    %1106 = vmatpush.msra.mxu0 0.0
    %1107 = vmatpush.msra.mxu0 0.0
    %1108 = vmatpush.msra.mxu0 0.0
    %1109 = vmatpush.msra.mxu0 0.0
    %1110 = vmatpush.msra.mxu0 0.0
    %1111 = vmatpush.msra.mxu0 0.0
    %1112 = vmatpush.msra.mxu0 0.0
    %1113 = vmatpush.msra.mxu0 0.0
    %1114 = vmatpush.msra.mxu0 0.0
    %1115 = vmatpush.msra.mxu0 %v361
    %1116 = vmatpush.msra.mxu0 %v360
    %1117 = vmatpush.msra.mxu0 %v359
    %1118 = vmatpush.msra.mxu0 %v358
    %1119 = vmatmul.f32.gmra.mxu0 %v1055
    %v1120 = vpop.f32.mrf.mxu0
    %v1121 = vadd.f32 0.0, %v1120
    %1122 = vdwg.mxu0
    %v1123 = vadd.f32 %v1102, %v1121
    %s1124 = scalar_lea.vmem [#allocation6], 48
    %v1125 = vld [vmem:[%s1124] sm:$0xff]
    %1126 = vmatpush.msra.mxu0 0.0
    %1127 = vmatpush.msra.mxu0 0.0
    %1128 = vmatpush.msra.mxu0 0.0
    %1129 = vmatpush.msra.mxu0 0.0
    %1130 = vmatpush.msra.mxu0 0.0
    %1131 = vmatpush.msra.mxu0 0.0
    %1132 = vmatpush.msra.mxu0 0.0
    %1133 = vmatpush.msra.mxu0 0.0
    %1134 = vmatpush.msra.mxu0 0.0
    %1135 = vmatpush.msra.mxu0 0.0
    %1136 = vmatpush.msra.mxu0 0.0
    %1137 = vmatpush.msra.mxu0 0.0
    %1138 = vmatpush.msra.mxu0 %v366
    %1139 = vmatpush.msra.mxu0 %v365
    %1140 = vmatpush.msra.mxu0 %v364
    %1141 = vmatpush.msra.mxu0 %v363
    %1142 = vmatmul.f32.gmra.mxu0 %v1055
    %v1143 = vpop.f32.mrf.mxu0
    %v1144 = vadd.f32 0.0, %v1143
    %1145 = vdwg.mxu0
    %v1146 = vadd.f32 %v1125, %v1144
    %v1147 = vmul.f32 %v1077, 0.5
    %v1148 = vtanh.pop %v1147
    %v1149 = vmul.f32 %v1148, 0.5
    %v1150 = vadd.f32 %v1149, 0.5
    %v1151 = vmul.f32 %v1100, 0.5
    %v1152 = vtanh.pop %v1151
    %v1153 = vmul.f32 %v1152, 0.5
    %v1154 = vadd.f32 %v1153, 0.5
    %v1155 = vtanh.pop %v1123
    %v1156 = vmul.f32 %v1146, 0.5
    %v1157 = vtanh.pop %v1156
    %v1158 = vmul.f32 %v1157, 0.5
    %v1159 = vadd.f32 %v1158, 0.5
    %v1160 = vmul.f32 %v1154, %v1047
    %v1161 = vmul.f32 %v1150, %v1155
    %v1162 = vadd.f32 %v1160, %v1161
    %v1163 = vtanh.pop %v1162
    %v1164 = vmul.f32 %v1159, %v1163
    %s1165 = scalar_lea.vmem [#allocation2], 48
    %1166 = vst.msk [vmem:[%s1165] sm:$0xff] %vm168, %v1164
    %s1167 = scalar_lea.vmem [#allocation3], 56
    %v1168 = vld [vmem:[%s1167] sm:$0xff]
    %v1170 = vsel %vm168, %v1164, 0
    %1172 = vmatpush.msra.mxu0 0.0
    %1173 = vmatpush.msra.mxu0 0.0
    %1174 = vmatpush.msra.mxu0 0.0
    %1175 = vmatpush.msra.mxu0 0.0
    %1176 = vmatpush.msra.mxu0 0.0
    %1177 = vmatpush.msra.mxu0 0.0
    %1178 = vmatpush.msra.mxu0 0.0
    %1179 = vmatpush.msra.mxu0 0.0
    %1180 = vmatpush.msra.mxu0 0.0
    %1181 = vmatpush.msra.mxu0 0.0
    %1182 = vmatpush.msra.mxu0 0.0
    %1183 = vmatpush.msra.mxu0 0.0
    %1184 = vmatpush.msra.mxu0 %v351
    %1185 = vmatpush.msra.mxu0 %v350
    %1186 = vmatpush.msra.mxu0 %v349
    %1187 = vmatpush.msra.mxu0 %v348
    %1188 = vmatmul.f32.gmra.mxu0 %v1170
    %v1189 = vpop.f32.mrf.mxu0
    %v1190 = vadd.f32 0.0, %v1189
    %1191 = vdwg.mxu0
    %v1192 = vadd.f32 %v1168, %v1190
    %s1193 = scalar_lea.vmem [#allocation4], 56
    %v1194 = vld [vmem:[%s1193] sm:$0xff]
    %1195 = vmatpush.msra.mxu0 0.0
    %1196 = vmatpush.msra.mxu0 0.0
    %1197 = vmatpush.msra.mxu0 0.0
    %1198 = vmatpush.msra.mxu0 0.0
    %1199 = vmatpush.msra.mxu0 0.0
    %1200 = vmatpush.msra.mxu0 0.0
    %1201 = vmatpush.msra.mxu0 0.0
    %1202 = vmatpush.msra.mxu0 0.0
    %1203 = vmatpush.msra.mxu0 0.0
    %1204 = vmatpush.msra.mxu0 0.0
    %1205 = vmatpush.msra.mxu0 0.0
    %1206 = vmatpush.msra.mxu0 0.0
    %1207 = vmatpush.msra.mxu0 %v356
    %1208 = vmatpush.msra.mxu0 %v355
    %1209 = vmatpush.msra.mxu0 %v354
    %1210 = vmatpush.msra.mxu0 %v353
    %1211 = vmatmul.f32.gmra.mxu0 %v1170
    %v1212 = vpop.f32.mrf.mxu0
    %v1213 = vadd.f32 0.0, %v1212
    %1214 = vdwg.mxu0
    %v1215 = vadd.f32 %v1194, %v1213
    %s1216 = scalar_lea.vmem [#allocation5], 56
    %v1217 = vld [vmem:[%s1216] sm:$0xff]
    %1218 = vmatpush.msra.mxu0 0.0
    %1219 = vmatpush.msra.mxu0 0.0
    %1220 = vmatpush.msra.mxu0 0.0
    %1221 = vmatpush.msra.mxu0 0.0
    %1222 = vmatpush.msra.mxu0 0.0
    %1223 = vmatpush.msra.mxu0 0.0
    %1224 = vmatpush.msra.mxu0 0.0
    %1225 = vmatpush.msra.mxu0 0.0
    %1226 = vmatpush.msra.mxu0 0.0
    %1227 = vmatpush.msra.mxu0 0.0
    %1228 = vmatpush.msra.mxu0 0.0
    %1229 = vmatpush.msra.mxu0 0.0
    %1230 = vmatpush.msra.mxu0 %v361
    %1231 = vmatpush.msra.mxu0 %v360
    %1232 = vmatpush.msra.mxu0 %v359
    %1233 = vmatpush.msra.mxu0 %v358
    %1234 = vmatmul.f32.gmra.mxu0 %v1170
    %v1235 = vpop.f32.mrf.mxu0
    %v1236 = vadd.f32 0.0, %v1235
    %1237 = vdwg.mxu0
    %v1238 = vadd.f32 %v1217, %v1236
    %s1239 = scalar_lea.vmem [#allocation6], 56
    %v1240 = vld [vmem:[%s1239] sm:$0xff]
    %1241 = vmatpush.msra.mxu0 0.0
    %1242 = vmatpush.msra.mxu0 0.0
    %1243 = vmatpush.msra.mxu0 0.0
    %1244 = vmatpush.msra.mxu0 0.0
    %1245 = vmatpush.msra.mxu0 0.0
    %1246 = vmatpush.msra.mxu0 0.0
    %1247 = vmatpush.msra.mxu0 0.0
    %1248 = vmatpush.msra.mxu0 0.0
    %1249 = vmatpush.msra.mxu0 0.0
    %1250 = vmatpush.msra.mxu0 0.0
    %1251 = vmatpush.msra.mxu0 0.0
    %1252 = vmatpush.msra.mxu0 0.0
    %1253 = vmatpush.msra.mxu0 %v366
    %1254 = vmatpush.msra.mxu0 %v365
    %1255 = vmatpush.msra.mxu0 %v364
    %1256 = vmatpush.msra.mxu0 %v363
    %1257 = vmatmul.f32.gmra.mxu0 %v1170
    %v1258 = vpop.f32.mrf.mxu0
    %v1259 = vadd.f32 0.0, %v1258
    %1260 = vdwg.mxu0
    %v1261 = vadd.f32 %v1240, %v1259
    %v1262 = vmul.f32 %v1192, 0.5
    %v1263 = vtanh.pop %v1262
    %v1264 = vmul.f32 %v1263, 0.5
    %v1265 = vadd.f32 %v1264, 0.5
    %v1266 = vmul.f32 %v1215, 0.5
    %v1267 = vtanh.pop %v1266
    %v1268 = vmul.f32 %v1267, 0.5
    %v1269 = vadd.f32 %v1268, 0.5
    %v1270 = vtanh.pop %v1238
    %v1271 = vmul.f32 %v1261, 0.5
    %v1272 = vtanh.pop %v1271
    %v1273 = vmul.f32 %v1272, 0.5
    %v1274 = vadd.f32 %v1273, 0.5
    %v1275 = vmul.f32 %v1269, %v1162
    %v1276 = vmul.f32 %v1265, %v1270
    %v1277 = vadd.f32 %v1275, %v1276
    %v1278 = vtanh.pop %v1277
    %v1279 = vmul.f32 %v1274, %v1278
    %s1280 = scalar_lea.vmem [#allocation2], 56
    %1281 = vst.msk [vmem:[%s1280] sm:$0xff] %vm168, %v1279
    %v1282 = vld [vmem:[#allocation2] sm:$0xff]
    %v1283 = vld [vmem:[#allocation2 + $0x8] sm:$0xff]
    %v1284 = vld [vmem:[#allocation2 + $0x10] sm:$0xff]
    %v1285 = vld [vmem:[#allocation2 + $0x18] sm:$0xff]
    %v1286 = vld [vmem:[#allocation2 + $0x20] sm:$0xff]
    %v1287 = vld [vmem:[#allocation2 + $0x28] sm:$0xff]
    %v1288 = vld [vmem:[#allocation2 + $0x30] sm:$0xff]
    %v1289 = vld [vmem:[#allocation2 + $0x38] sm:$0xff]
    %v1290 = vld [vmem:[#allocation11] sm:$0xff]
    %v1291 = vld [vmem:[#allocation11 + $0x8] sm:$0xff]
    %v1292 = vld [vmem:[#allocation11 + $0x10] sm:$0xff]
    %v1293 = vld [vmem:[#allocation11 + $0x18] sm:$0xff]
    %v1294 = vld [vmem:[%s6] sm:$0x1]
    %v1296 = vperm.slane %v1294, 0
    %v1299 = vsel %vm168, %v1282, 0
    %v1302 = vsel %vm168, %v1283, 0
    %v1305 = vsel %vm168, %v1284, 0
    %v1308 = vsel %vm168, %v1285, 0
    %v1311 = vsel %vm168, %v1286, 0
    %v1314 = vsel %vm168, %v1287, 0
    %v1317 = vsel %vm168, %v1288, 0
    %v1320 = vsel %vm168, %v1289, 0
    %1322 = vmatpush.msra.mxu0 0.0
    %1323 = vmatpush.msra.mxu0 0.0
    %1324 = vmatpush.msra.mxu0 0.0
    %1325 = vmatpush.msra.mxu0 0.0
    %1326 = vmatpush.msra.mxu0 0.0
    %1327 = vmatpush.msra.mxu0 0.0
    %1328 = vmatpush.msra.mxu0 0.0
    %1329 = vmatpush.msra.mxu0 0.0
    %1330 = vmatpush.msra.mxu0 0.0
    %1331 = vmatpush.msra.mxu0 0.0
    %1332 = vmatpush.msra.mxu0 0.0
    %1333 = vmatpush.msra.mxu0 0.0
    %1334 = vmatpush.msra.mxu0 %v1293
    %1335 = vmatpush.msra.mxu0 %v1292
    %1336 = vmatpush.msra.mxu0 %v1291
    %1337 = vmatpush.msra.mxu0 %v1290
    %1338 = vmatmul.f32.gmra.mxu0 %v1299
    %v1339 = vpop.f32.mrf.mxu0
    %v1340 = vadd.f32 %v1296, %v1339
    %1341 = vmatmul.f32.gmra.mxu0 %v1302
    %v1342 = vpop.f32.mrf.mxu0
    %v1343 = vadd.f32 %v1296, %v1342
    %1344 = vmatmul.f32.gmra.mxu0 %v1305
    %v1345 = vpop.f32.mrf.mxu0
    %v1346 = vadd.f32 %v1296, %v1345
    %1347 = vmatmul.f32.gmra.mxu0 %v1308
    %v1348 = vpop.f32.mrf.mxu0
    %v1349 = vadd.f32 %v1296, %v1348
    %1350 = vmatmul.f32.gmra.mxu0 %v1311
    %v1351 = vpop.f32.mrf.mxu0
    %v1352 = vadd.f32 %v1296, %v1351
    %1353 = vmatmul.f32.gmra.mxu0 %v1314
    %v1354 = vpop.f32.mrf.mxu0
    %v1355 = vadd.f32 %v1296, %v1354
    %1356 = vmatmul.f32.gmra.mxu0 %v1317
    %v1357 = vpop.f32.mrf.mxu0
    %v1358 = vadd.f32 %v1296, %v1357
    %1359 = vmatmul.f32.gmra.mxu0 %v1320
    %v1360 = vpop.f32.mrf.mxu0
    %v1361 = vadd.f32 %v1296, %v1360
    %1362 = vdwg.mxu0
    %1363 = vst.msk [vmem:[#allocation3] sm:$0xff] %vm168, %v1340
    %1364 = vst.msk [vmem:[#allocation3 + $0x8] sm:$0xff] %vm168, %v1343
    %1365 = vst.msk [vmem:[#allocation3 + $0x10] sm:$0xff] %vm168, %v1346
    %1366 = vst.msk [vmem:[#allocation3 + $0x18] sm:$0xff] %vm168, %v1349
    %1367 = vst.msk [vmem:[#allocation3 + $0x20] sm:$0xff] %vm168, %v1352
    %1368 = vst.msk [vmem:[#allocation3 + $0x28] sm:$0xff] %vm168, %v1355
    %1369 = vst.msk [vmem:[#allocation3 + $0x30] sm:$0xff] %vm168, %v1358
    %1370 = vst.msk [vmem:[#allocation3 + $0x38] sm:$0xff] %vm168, %v1361
    %s1371 = scalar_lea.vmem [#allocation11], 32
    %v1372 = vld [vmem:[%s1371] sm:$0xff]
    %v1373 = vld [vmem:[%s1371 + $0x8] sm:$0xff]
    %v1374 = vld [vmem:[%s1371 + $0x10] sm:$0xff]
    %v1375 = vld [vmem:[%s1371 + $0x18] sm:$0xff]
    %s1376 = scalar_lea.vmem %s6, 1
    %v1377 = vld [vmem:[%s1376] sm:$0x1]
    %v1379 = vperm.slane %v1377, 0
    %1381 = vmatpush.msra.mxu0 0.0
    %1382 = vmatpush.msra.mxu0 0.0
    %1383 = vmatpush.msra.mxu0 0.0
    %1384 = vmatpush.msra.mxu0 0.0
    %1385 = vmatpush.msra.mxu0 0.0
    %1386 = vmatpush.msra.mxu0 0.0
    %1387 = vmatpush.msra.mxu0 0.0
    %1388 = vmatpush.msra.mxu0 0.0
    %1389 = vmatpush.msra.mxu0 0.0
    %1390 = vmatpush.msra.mxu0 0.0
    %1391 = vmatpush.msra.mxu0 0.0
    %1392 = vmatpush.msra.mxu0 0.0
    %1393 = vmatpush.msra.mxu0 %v1375
    %1394 = vmatpush.msra.mxu0 %v1374
    %1395 = vmatpush.msra.mxu0 %v1373
    %1396 = vmatpush.msra.mxu0 %v1372
    %1397 = vmatmul.f32.gmra.mxu0 %v1299
    %v1398 = vpop.f32.mrf.mxu0
    %v1399 = vadd.f32 %v1379, %v1398
    %1400 = vmatmul.f32.gmra.mxu0 %v1302
    %v1401 = vpop.f32.mrf.mxu0
    %v1402 = vadd.f32 %v1379, %v1401
    %1403 = vmatmul.f32.gmra.mxu0 %v1305
    %v1404 = vpop.f32.mrf.mxu0
    %v1405 = vadd.f32 %v1379, %v1404
    %1406 = vmatmul.f32.gmra.mxu0 %v1308
    %v1407 = vpop.f32.mrf.mxu0
    %v1408 = vadd.f32 %v1379, %v1407
    %1409 = vmatmul.f32.gmra.mxu0 %v1311
    %v1410 = vpop.f32.mrf.mxu0
    %v1411 = vadd.f32 %v1379, %v1410
    %1412 = vmatmul.f32.gmra.mxu0 %v1314
    %v1413 = vpop.f32.mrf.mxu0
    %v1414 = vadd.f32 %v1379, %v1413
    %1415 = vmatmul.f32.gmra.mxu0 %v1317
    %v1416 = vpop.f32.mrf.mxu0
    %v1417 = vadd.f32 %v1379, %v1416
    %1418 = vmatmul.f32.gmra.mxu0 %v1320
    %v1419 = vpop.f32.mrf.mxu0
    %v1420 = vadd.f32 %v1379, %v1419
    %1421 = vdwg.mxu0
    %1422 = vst.msk [vmem:[#allocation4] sm:$0xff] %vm168, %v1399
    %1423 = vst.msk [vmem:[#allocation4 + $0x8] sm:$0xff] %vm168, %v1402
    %1424 = vst.msk [vmem:[#allocation4 + $0x10] sm:$0xff] %vm168, %v1405
    %1425 = vst.msk [vmem:[#allocation4 + $0x18] sm:$0xff] %vm168, %v1408
    %1426 = vst.msk [vmem:[#allocation4 + $0x20] sm:$0xff] %vm168, %v1411
    %1427 = vst.msk [vmem:[#allocation4 + $0x28] sm:$0xff] %vm168, %v1414
    %1428 = vst.msk [vmem:[#allocation4 + $0x30] sm:$0xff] %vm168, %v1417
    %1429 = vst.msk [vmem:[#allocation4 + $0x38] sm:$0xff] %vm168, %v1420
    %s1430 = scalar_lea.vmem [#allocation11], 64
    %v1431 = vld [vmem:[%s1430] sm:$0xff]
    %v1432 = vld [vmem:[%s1430 + $0x8] sm:$0xff]
    %v1433 = vld [vmem:[%s1430 + $0x10] sm:$0xff]
    %v1434 = vld [vmem:[%s1430 + $0x18] sm:$0xff]
    %s1435 = scalar_lea.vmem %s6, 2
    %v1436 = vld [vmem:[%s1435] sm:$0x1]
    %v1438 = vperm.slane %v1436, 0
    %1440 = vmatpush.msra.mxu0 0.0
    %1441 = vmatpush.msra.mxu0 0.0
    %1442 = vmatpush.msra.mxu0 0.0
    %1443 = vmatpush.msra.mxu0 0.0
    %1444 = vmatpush.msra.mxu0 0.0
    %1445 = vmatpush.msra.mxu0 0.0
    %1446 = vmatpush.msra.mxu0 0.0
    %1447 = vmatpush.msra.mxu0 0.0
    %1448 = vmatpush.msra.mxu0 0.0
    %1449 = vmatpush.msra.mxu0 0.0
    %1450 = vmatpush.msra.mxu0 0.0
    %1451 = vmatpush.msra.mxu0 0.0
    %1452 = vmatpush.msra.mxu0 %v1434
    %1453 = vmatpush.msra.mxu0 %v1433
    %1454 = vmatpush.msra.mxu0 %v1432
    %1455 = vmatpush.msra.mxu0 %v1431
    %1456 = vmatmul.f32.gmra.mxu0 %v1299
    %v1457 = vpop.f32.mrf.mxu0
    %v1458 = vadd.f32 %v1438, %v1457
    %1459 = vmatmul.f32.gmra.mxu0 %v1302
    %v1460 = vpop.f32.mrf.mxu0
    %v1461 = vadd.f32 %v1438, %v1460
    %1462 = vmatmul.f32.gmra.mxu0 %v1305
    %v1463 = vpop.f32.mrf.mxu0
    %v1464 = vadd.f32 %v1438, %v1463
    %1465 = vmatmul.f32.gmra.mxu0 %v1308
    %v1466 = vpop.f32.mrf.mxu0
    %v1467 = vadd.f32 %v1438, %v1466
    %1468 = vmatmul.f32.gmra.mxu0 %v1311
    %v1469 = vpop.f32.mrf.mxu0
    %v1470 = vadd.f32 %v1438, %v1469
    %1471 = vmatmul.f32.gmra.mxu0 %v1314
    %v1472 = vpop.f32.mrf.mxu0
    %v1473 = vadd.f32 %v1438, %v1472
    %1474 = vmatmul.f32.gmra.mxu0 %v1317
    %v1475 = vpop.f32.mrf.mxu0
    %v1476 = vadd.f32 %v1438, %v1475
    %1477 = vmatmul.f32.gmra.mxu0 %v1320
    %v1478 = vpop.f32.mrf.mxu0
    %v1479 = vadd.f32 %v1438, %v1478
    %1480 = vdwg.mxu0
    %1481 = vst.msk [vmem:[#allocation5] sm:$0xff] %vm168, %v1458
    %1482 = vst.msk [vmem:[#allocation5 + $0x8] sm:$0xff] %vm168, %v1461
    %1483 = vst.msk [vmem:[#allocation5 + $0x10] sm:$0xff] %vm168, %v1464
    %1484 = vst.msk [vmem:[#allocation5 + $0x18] sm:$0xff] %vm168, %v1467
    %1485 = vst.msk [vmem:[#allocation5 + $0x20] sm:$0xff] %vm168, %v1470
    %1486 = vst.msk [vmem:[#allocation5 + $0x28] sm:$0xff] %vm168, %v1473
    %1487 = vst.msk [vmem:[#allocation5 + $0x30] sm:$0xff] %vm168, %v1476
    %1488 = vst.msk [vmem:[#allocation5 + $0x38] sm:$0xff] %vm168, %v1479
    %s1489 = scalar_lea.vmem [#allocation11], 96
    %v1490 = vld [vmem:[%s1489] sm:$0xff]
    %v1491 = vld [vmem:[%s1489 + $0x8] sm:$0xff]
    %v1492 = vld [vmem:[%s1489 + $0x10] sm:$0xff]
    %v1493 = vld [vmem:[%s1489 + $0x18] sm:$0xff]
    %s1494 = scalar_lea.vmem %s6, 3
    %v1495 = vld [vmem:[%s1494] sm:$0x1]
    %v1497 = vperm.slane %v1495, 0
    %1499 = vmatpush.msra.mxu0 0.0
    %1500 = vmatpush.msra.mxu0 0.0
    %1501 = vmatpush.msra.mxu0 0.0
    %1502 = vmatpush.msra.mxu0 0.0
    %1503 = vmatpush.msra.mxu0 0.0
    %1504 = vmatpush.msra.mxu0 0.0
    %1505 = vmatpush.msra.mxu0 0.0
    %1506 = vmatpush.msra.mxu0 0.0
    %1507 = vmatpush.msra.mxu0 0.0
    %1508 = vmatpush.msra.mxu0 0.0
    %1509 = vmatpush.msra.mxu0 0.0
    %1510 = vmatpush.msra.mxu0 0.0
    %1511 = vmatpush.msra.mxu0 %v1493
    %1512 = vmatpush.msra.mxu0 %v1492
    %1513 = vmatpush.msra.mxu0 %v1491
    %1514 = vmatpush.msra.mxu0 %v1490
    %1515 = vmatmul.f32.gmra.mxu0 %v1299
    %v1516 = vpop.f32.mrf.mxu0
    %v1517 = vadd.f32 %v1497, %v1516
    %1518 = vmatmul.f32.gmra.mxu0 %v1302
    %v1519 = vpop.f32.mrf.mxu0
    %v1520 = vadd.f32 %v1497, %v1519
    %1521 = vmatmul.f32.gmra.mxu0 %v1305
    %v1522 = vpop.f32.mrf.mxu0
    %v1523 = vadd.f32 %v1497, %v1522
    %1524 = vmatmul.f32.gmra.mxu0 %v1308
    %v1525 = vpop.f32.mrf.mxu0
    %v1526 = vadd.f32 %v1497, %v1525
    %1527 = vmatmul.f32.gmra.mxu0 %v1311
    %v1528 = vpop.f32.mrf.mxu0
    %v1529 = vadd.f32 %v1497, %v1528
    %1530 = vmatmul.f32.gmra.mxu0 %v1314
    %v1531 = vpop.f32.mrf.mxu0
    %v1532 = vadd.f32 %v1497, %v1531
    %1533 = vmatmul.f32.gmra.mxu0 %v1317
    %v1534 = vpop.f32.mrf.mxu0
    %v1535 = vadd.f32 %v1497, %v1534
    %1536 = vmatmul.f32.gmra.mxu0 %v1320
    %v1537 = vpop.f32.mrf.mxu0
    %v1538 = vadd.f32 %v1497, %v1537
    %1539 = vdwg.mxu0
    %1540 = vst.msk [vmem:[#allocation6] sm:$0xff] %vm168, %v1517
    %1541 = vst.msk [vmem:[#allocation6 + $0x8] sm:$0xff] %vm168, %v1520
    %1542 = vst.msk [vmem:[#allocation6 + $0x10] sm:$0xff] %vm168, %v1523
    %1543 = vst.msk [vmem:[#allocation6 + $0x18] sm:$0xff] %vm168, %v1526
    %1544 = vst.msk [vmem:[#allocation6 + $0x20] sm:$0xff] %vm168, %v1529
    %1545 = vst.msk [vmem:[#allocation6 + $0x28] sm:$0xff] %vm168, %v1532
    %1546 = vst.msk [vmem:[#allocation6 + $0x30] sm:$0xff] %vm168, %v1535
    %1547 = vst.msk [vmem:[#allocation6 + $0x38] sm:$0xff] %vm168, %v1538
    %v1548 = vld [vmem:[#allocation13] sm:$0xff]
    %v1549 = vld [vmem:[#allocation13 + $0x8] sm:$0xff]
    %v1550 = vld [vmem:[#allocation13 + $0x10] sm:$0xff]
    %v1551 = vld [vmem:[#allocation13 + $0x18] sm:$0xff]
    %s1552 = scalar_lea.vmem [#allocation13], 32
    %v1553 = vld [vmem:[%s1552] sm:$0xff]
    %v1554 = vld [vmem:[%s1552 + $0x8] sm:$0xff]
    %v1555 = vld [vmem:[%s1552 + $0x10] sm:$0xff]
    %v1556 = vld [vmem:[%s1552 + $0x18] sm:$0xff]
    %s1557 = scalar_lea.vmem [#allocation13], 64
    %v1558 = vld [vmem:[%s1557] sm:$0xff]
    %v1559 = vld [vmem:[%s1557 + $0x8] sm:$0xff]
    %v1560 = vld [vmem:[%s1557 + $0x10] sm:$0xff]
    %v1561 = vld [vmem:[%s1557 + $0x18] sm:$0xff]
    %s1562 = scalar_lea.vmem [#allocation13], 96
    %v1563 = vld [vmem:[%s1562] sm:$0xff]
    %v1564 = vld [vmem:[%s1562 + $0x8] sm:$0xff]
    %v1565 = vld [vmem:[%s1562 + $0x10] sm:$0xff]
    %v1566 = vld [vmem:[%s1562 + $0x18] sm:$0xff]
    %v1567 = vld [vmem:[#allocation3] sm:$0xff]
    %1568 = vmatpush.msra.mxu0 0.0
    %1569 = vmatpush.msra.mxu0 0.0
    %1570 = vmatpush.msra.mxu0 0.0
    %1571 = vmatpush.msra.mxu0 0.0
    %1572 = vmatpush.msra.mxu0 0.0
    %1573 = vmatpush.msra.mxu0 0.0
    %1574 = vmatpush.msra.mxu0 0.0
    %1575 = vmatpush.msra.mxu0 0.0
    %1576 = vmatpush.msra.mxu0 0.0
    %1577 = vmatpush.msra.mxu0 0.0
    %1578 = vmatpush.msra.mxu0 0.0
    %1579 = vmatpush.msra.mxu0 0.0
    %1580 = vmatpush.msra.mxu0 %v1551
    %1581 = vmatpush.msra.mxu0 %v1550
    %1582 = vmatpush.msra.mxu0 %v1549
    %1583 = vmatpush.msra.mxu0 %v1548
    %1584 = vmatmul.f32.gmra.mxu0 %v369
    %v1585 = vpop.f32.mrf.mxu0
    %v1586 = vadd.f32 0.0, %v1585
    %1587 = vdwg.mxu0
    %v1588 = vadd.f32 %v1567, %v1586
    %v1589 = vld [vmem:[#allocation4] sm:$0xff]
    %1590 = vmatpush.msra.mxu0 0.0
    %1591 = vmatpush.msra.mxu0 0.0
    %1592 = vmatpush.msra.mxu0 0.0
    %1593 = vmatpush.msra.mxu0 0.0
    %1594 = vmatpush.msra.mxu0 0.0
    %1595 = vmatpush.msra.mxu0 0.0
    %1596 = vmatpush.msra.mxu0 0.0
    %1597 = vmatpush.msra.mxu0 0.0
    %1598 = vmatpush.msra.mxu0 0.0
    %1599 = vmatpush.msra.mxu0 0.0
    %1600 = vmatpush.msra.mxu0 0.0
    %1601 = vmatpush.msra.mxu0 0.0
    %1602 = vmatpush.msra.mxu0 %v1556
    %1603 = vmatpush.msra.mxu0 %v1555
    %1604 = vmatpush.msra.mxu0 %v1554
    %1605 = vmatpush.msra.mxu0 %v1553
    %1606 = vmatmul.f32.gmra.mxu0 %v369
    %v1607 = vpop.f32.mrf.mxu0
    %v1608 = vadd.f32 0.0, %v1607
    %1609 = vdwg.mxu0
    %v1610 = vadd.f32 %v1589, %v1608
    %v1611 = vld [vmem:[#allocation5] sm:$0xff]
    %1612 = vmatpush.msra.mxu0 0.0
    %1613 = vmatpush.msra.mxu0 0.0
    %1614 = vmatpush.msra.mxu0 0.0
    %1615 = vmatpush.msra.mxu0 0.0
    %1616 = vmatpush.msra.mxu0 0.0
    %1617 = vmatpush.msra.mxu0 0.0
    %1618 = vmatpush.msra.mxu0 0.0
    %1619 = vmatpush.msra.mxu0 0.0
    %1620 = vmatpush.msra.mxu0 0.0
    %1621 = vmatpush.msra.mxu0 0.0
    %1622 = vmatpush.msra.mxu0 0.0
    %1623 = vmatpush.msra.mxu0 0.0
    %1624 = vmatpush.msra.mxu0 %v1561
    %1625 = vmatpush.msra.mxu0 %v1560
    %1626 = vmatpush.msra.mxu0 %v1559
    %1627 = vmatpush.msra.mxu0 %v1558
    %1628 = vmatmul.f32.gmra.mxu0 %v369
    %v1629 = vpop.f32.mrf.mxu0
    %v1630 = vadd.f32 0.0, %v1629
    %1631 = vdwg.mxu0
    %v1632 = vadd.f32 %v1611, %v1630
    %v1633 = vld [vmem:[#allocation6] sm:$0xff]
    %1634 = vmatpush.msra.mxu0 0.0
    %1635 = vmatpush.msra.mxu0 0.0
    %1636 = vmatpush.msra.mxu0 0.0
    %1637 = vmatpush.msra.mxu0 0.0
    %1638 = vmatpush.msra.mxu0 0.0
    %1639 = vmatpush.msra.mxu0 0.0
    %1640 = vmatpush.msra.mxu0 0.0
    %1641 = vmatpush.msra.mxu0 0.0
    %1642 = vmatpush.msra.mxu0 0.0
    %1643 = vmatpush.msra.mxu0 0.0
    %1644 = vmatpush.msra.mxu0 0.0
    %1645 = vmatpush.msra.mxu0 0.0
    %1646 = vmatpush.msra.mxu0 %v1566
    %1647 = vmatpush.msra.mxu0 %v1565
    %1648 = vmatpush.msra.mxu0 %v1564
    %1649 = vmatpush.msra.mxu0 %v1563
    %1650 = vmatmul.f32.gmra.mxu0 %v369
    %v1651 = vpop.f32.mrf.mxu0
    %v1652 = vadd.f32 0.0, %v1651
    %1653 = vdwg.mxu0
    %v1654 = vadd.f32 %v1633, %v1652
    %v1655 = vmul.f32 %v1588, 0.5
    %v1656 = vtanh.pop %v1655
    %v1657 = vmul.f32 %v1656, 0.5
    %v1658 = vadd.f32 %v1657, 0.5
    %v1659 = vmul.f32 %v1610, 0.5
    %v1660 = vtanh.pop %v1659
    %v1661 = vmul.f32 %v1660, 0.5
    %v1662 = vadd.f32 %v1661, 0.5
    %v1663 = vtanh.pop %v1632
    %v1664 = vmul.f32 %v1654, 0.5
    %v1665 = vtanh.pop %v1664
    %v1666 = vmul.f32 %v1665, 0.5
    %v1667 = vadd.f32 %v1666, 0.5
    %v1668 = vmul.f32 %v1662, 0.0
    %v1669 = vmul.f32 %v1658, %v1663
    %v1670 = vadd.f32 %v1668, %v1669
    %v1671 = vtanh.pop %v1670
    %v1672 = vmul.f32 %v1667, %v1671
    %1673 = vst.msk [vmem:[#allocation2] sm:$0xff] %vm168, %v1672
    %v1674 = vld [vmem:[%s477] sm:$0xff]
    %v1676 = vsel %vm168, %v1672, 0
    %1678 = vmatpush.msra.mxu0 0.0
    %1679 = vmatpush.msra.mxu0 0.0
    %1680 = vmatpush.msra.mxu0 0.0
    %1681 = vmatpush.msra.mxu0 0.0
    %1682 = vmatpush.msra.mxu0 0.0
    %1683 = vmatpush.msra.mxu0 0.0
    %1684 = vmatpush.msra.mxu0 0.0
    %1685 = vmatpush.msra.mxu0 0.0
    %1686 = vmatpush.msra.mxu0 0.0
    %1687 = vmatpush.msra.mxu0 0.0
    %1688 = vmatpush.msra.mxu0 0.0
    %1689 = vmatpush.msra.mxu0 0.0
    %1690 = vmatpush.msra.mxu0 %v1551
    %1691 = vmatpush.msra.mxu0 %v1550
    %1692 = vmatpush.msra.mxu0 %v1549
    %1693 = vmatpush.msra.mxu0 %v1548
    %1694 = vmatmul.f32.gmra.mxu0 %v1676
    %v1695 = vpop.f32.mrf.mxu0
    %v1696 = vadd.f32 0.0, %v1695
    %1697 = vdwg.mxu0
    %v1698 = vadd.f32 %v1674, %v1696
    %v1699 = vld [vmem:[%s503] sm:$0xff]
    %1700 = vmatpush.msra.mxu0 0.0
    %1701 = vmatpush.msra.mxu0 0.0
    %1702 = vmatpush.msra.mxu0 0.0
    %1703 = vmatpush.msra.mxu0 0.0
    %1704 = vmatpush.msra.mxu0 0.0
    %1705 = vmatpush.msra.mxu0 0.0
    %1706 = vmatpush.msra.mxu0 0.0
    %1707 = vmatpush.msra.mxu0 0.0
    %1708 = vmatpush.msra.mxu0 0.0
    %1709 = vmatpush.msra.mxu0 0.0
    %1710 = vmatpush.msra.mxu0 0.0
    %1711 = vmatpush.msra.mxu0 0.0
    %1712 = vmatpush.msra.mxu0 %v1556
    %1713 = vmatpush.msra.mxu0 %v1555
    %1714 = vmatpush.msra.mxu0 %v1554
    %1715 = vmatpush.msra.mxu0 %v1553
    %1716 = vmatmul.f32.gmra.mxu0 %v1676
    %v1717 = vpop.f32.mrf.mxu0
    %v1718 = vadd.f32 0.0, %v1717
    %1719 = vdwg.mxu0
    %v1720 = vadd.f32 %v1699, %v1718
    %v1721 = vld [vmem:[%s526] sm:$0xff]
    %1722 = vmatpush.msra.mxu0 0.0
    %1723 = vmatpush.msra.mxu0 0.0
    %1724 = vmatpush.msra.mxu0 0.0
    %1725 = vmatpush.msra.mxu0 0.0
    %1726 = vmatpush.msra.mxu0 0.0
    %1727 = vmatpush.msra.mxu0 0.0
    %1728 = vmatpush.msra.mxu0 0.0
    %1729 = vmatpush.msra.mxu0 0.0
    %1730 = vmatpush.msra.mxu0 0.0
    %1731 = vmatpush.msra.mxu0 0.0
    %1732 = vmatpush.msra.mxu0 0.0
    %1733 = vmatpush.msra.mxu0 0.0
    %1734 = vmatpush.msra.mxu0 %v1561
    %1735 = vmatpush.msra.mxu0 %v1560
    %1736 = vmatpush.msra.mxu0 %v1559
    %1737 = vmatpush.msra.mxu0 %v1558
    %1738 = vmatmul.f32.gmra.mxu0 %v1676
    %v1739 = vpop.f32.mrf.mxu0
    %v1740 = vadd.f32 0.0, %v1739
    %1741 = vdwg.mxu0
    %v1742 = vadd.f32 %v1721, %v1740
    %v1743 = vld [vmem:[%s549] sm:$0xff]
    %1744 = vmatpush.msra.mxu0 0.0
    %1745 = vmatpush.msra.mxu0 0.0
    %1746 = vmatpush.msra.mxu0 0.0
    %1747 = vmatpush.msra.mxu0 0.0
    %1748 = vmatpush.msra.mxu0 0.0
    %1749 = vmatpush.msra.mxu0 0.0
    %1750 = vmatpush.msra.mxu0 0.0
    %1751 = vmatpush.msra.mxu0 0.0
    %1752 = vmatpush.msra.mxu0 0.0
    %1753 = vmatpush.msra.mxu0 0.0
    %1754 = vmatpush.msra.mxu0 0.0
    %1755 = vmatpush.msra.mxu0 0.0
    %1756 = vmatpush.msra.mxu0 %v1566
    %1757 = vmatpush.msra.mxu0 %v1565
    %1758 = vmatpush.msra.mxu0 %v1564
    %1759 = vmatpush.msra.mxu0 %v1563
    %1760 = vmatmul.f32.gmra.mxu0 %v1676
    %v1761 = vpop.f32.mrf.mxu0
    %v1762 = vadd.f32 0.0, %v1761
    %1763 = vdwg.mxu0
    %v1764 = vadd.f32 %v1743, %v1762
    %v1765 = vmul.f32 %v1698, 0.5
    %v1766 = vtanh.pop %v1765
    %v1767 = vmul.f32 %v1766, 0.5
    %v1768 = vadd.f32 %v1767, 0.5
    %v1769 = vmul.f32 %v1720, 0.5
    %v1770 = vtanh.pop %v1769
    %v1771 = vmul.f32 %v1770, 0.5
    %v1772 = vadd.f32 %v1771, 0.5
    %v1773 = vtanh.pop %v1742
    %v1774 = vmul.f32 %v1764, 0.5
    %v1775 = vtanh.pop %v1774
    %v1776 = vmul.f32 %v1775, 0.5
    %v1777 = vadd.f32 %v1776, 0.5
    %v1778 = vmul.f32 %v1772, %v1670
    %v1779 = vmul.f32 %v1768, %v1773
    %v1780 = vadd.f32 %v1778, %v1779
    %v1781 = vtanh.pop %v1780
    %v1782 = vmul.f32 %v1777, %v1781
    %1783 = vst.msk [vmem:[%s590] sm:$0xff] %vm168, %v1782
    %v1784 = vld [vmem:[%s592] sm:$0xff]
    %v1786 = vsel %vm168, %v1782, 0
    %1788 = vmatpush.msra.mxu0 0.0
    %1789 = vmatpush.msra.mxu0 0.0
    %1790 = vmatpush.msra.mxu0 0.0
    %1791 = vmatpush.msra.mxu0 0.0
    %1792 = vmatpush.msra.mxu0 0.0
    %1793 = vmatpush.msra.mxu0 0.0
    %1794 = vmatpush.msra.mxu0 0.0
    %1795 = vmatpush.msra.mxu0 0.0
    %1796 = vmatpush.msra.mxu0 0.0
    %1797 = vmatpush.msra.mxu0 0.0
    %1798 = vmatpush.msra.mxu0 0.0
    %1799 = vmatpush.msra.mxu0 0.0
    %1800 = vmatpush.msra.mxu0 %v1551
    %1801 = vmatpush.msra.mxu0 %v1550
    %1802 = vmatpush.msra.mxu0 %v1549
    %1803 = vmatpush.msra.mxu0 %v1548
    %1804 = vmatmul.f32.gmra.mxu0 %v1786
    %v1805 = vpop.f32.mrf.mxu0
    %v1806 = vadd.f32 0.0, %v1805
    %1807 = vdwg.mxu0
    %v1808 = vadd.f32 %v1784, %v1806
    %v1809 = vld [vmem:[%s618] sm:$0xff]
    %1810 = vmatpush.msra.mxu0 0.0
    %1811 = vmatpush.msra.mxu0 0.0
    %1812 = vmatpush.msra.mxu0 0.0
    %1813 = vmatpush.msra.mxu0 0.0
    %1814 = vmatpush.msra.mxu0 0.0
    %1815 = vmatpush.msra.mxu0 0.0
    %1816 = vmatpush.msra.mxu0 0.0
    %1817 = vmatpush.msra.mxu0 0.0
    %1818 = vmatpush.msra.mxu0 0.0
    %1819 = vmatpush.msra.mxu0 0.0
    %1820 = vmatpush.msra.mxu0 0.0
    %1821 = vmatpush.msra.mxu0 0.0
    %1822 = vmatpush.msra.mxu0 %v1556
    %1823 = vmatpush.msra.mxu0 %v1555
    %1824 = vmatpush.msra.mxu0 %v1554
    %1825 = vmatpush.msra.mxu0 %v1553
    %1826 = vmatmul.f32.gmra.mxu0 %v1786
    %v1827 = vpop.f32.mrf.mxu0
    %v1828 = vadd.f32 0.0, %v1827
    %1829 = vdwg.mxu0
    %v1830 = vadd.f32 %v1809, %v1828
    %v1831 = vld [vmem:[%s641] sm:$0xff]
    %1832 = vmatpush.msra.mxu0 0.0
    %1833 = vmatpush.msra.mxu0 0.0
    %1834 = vmatpush.msra.mxu0 0.0
    %1835 = vmatpush.msra.mxu0 0.0
    %1836 = vmatpush.msra.mxu0 0.0
    %1837 = vmatpush.msra.mxu0 0.0
    %1838 = vmatpush.msra.mxu0 0.0
    %1839 = vmatpush.msra.mxu0 0.0
    %1840 = vmatpush.msra.mxu0 0.0
    %1841 = vmatpush.msra.mxu0 0.0
    %1842 = vmatpush.msra.mxu0 0.0
    %1843 = vmatpush.msra.mxu0 0.0
    %1844 = vmatpush.msra.mxu0 %v1561
    %1845 = vmatpush.msra.mxu0 %v1560
    %1846 = vmatpush.msra.mxu0 %v1559
    %1847 = vmatpush.msra.mxu0 %v1558
    %1848 = vmatmul.f32.gmra.mxu0 %v1786
    %v1849 = vpop.f32.mrf.mxu0
    %v1850 = vadd.f32 0.0, %v1849
    %1851 = vdwg.mxu0
    %v1852 = vadd.f32 %v1831, %v1850
    %v1853 = vld [vmem:[%s664] sm:$0xff]
    %1854 = vmatpush.msra.mxu0 0.0
    %1855 = vmatpush.msra.mxu0 0.0
    %1856 = vmatpush.msra.mxu0 0.0
    %1857 = vmatpush.msra.mxu0 0.0
    %1858 = vmatpush.msra.mxu0 0.0
    %1859 = vmatpush.msra.mxu0 0.0
    %1860 = vmatpush.msra.mxu0 0.0
    %1861 = vmatpush.msra.mxu0 0.0
    %1862 = vmatpush.msra.mxu0 0.0
    %1863 = vmatpush.msra.mxu0 0.0
    %1864 = vmatpush.msra.mxu0 0.0
    %1865 = vmatpush.msra.mxu0 0.0
    %1866 = vmatpush.msra.mxu0 %v1566
    %1867 = vmatpush.msra.mxu0 %v1565
    %1868 = vmatpush.msra.mxu0 %v1564
    %1869 = vmatpush.msra.mxu0 %v1563
    %1870 = vmatmul.f32.gmra.mxu0 %v1786
    %v1871 = vpop.f32.mrf.mxu0
    %v1872 = vadd.f32 0.0, %v1871
    %1873 = vdwg.mxu0
    %v1874 = vadd.f32 %v1853, %v1872
    %v1875 = vmul.f32 %v1808, 0.5
    %v1876 = vtanh.pop %v1875
    %v1877 = vmul.f32 %v1876, 0.5
    %v1878 = vadd.f32 %v1877, 0.5
    %v1879 = vmul.f32 %v1830, 0.5
    %v1880 = vtanh.pop %v1879
    %v1881 = vmul.f32 %v1880, 0.5
    %v1882 = vadd.f32 %v1881, 0.5
    %v1883 = vtanh.pop %v1852
    %v1884 = vmul.f32 %v1874, 0.5
    %v1885 = vtanh.pop %v1884
    %v1886 = vmul.f32 %v1885, 0.5
    %v1887 = vadd.f32 %v1886, 0.5
    %v1888 = vmul.f32 %v1882, %v1780
    %v1889 = vmul.f32 %v1878, %v1883
    %v1890 = vadd.f32 %v1888, %v1889
    %v1891 = vtanh.pop %v1890
    %v1892 = vmul.f32 %v1887, %v1891
    %1893 = vst.msk [vmem:[%s705] sm:$0xff] %vm168, %v1892
    %v1894 = vld [vmem:[%s707] sm:$0xff]
    %v1896 = vsel %vm168, %v1892, 0
    %1898 = vmatpush.msra.mxu0 0.0
    %1899 = vmatpush.msra.mxu0 0.0
    %1900 = vmatpush.msra.mxu0 0.0
    %1901 = vmatpush.msra.mxu0 0.0
    %1902 = vmatpush.msra.mxu0 0.0
    %1903 = vmatpush.msra.mxu0 0.0
    %1904 = vmatpush.msra.mxu0 0.0
    %1905 = vmatpush.msra.mxu0 0.0
    %1906 = vmatpush.msra.mxu0 0.0
    %1907 = vmatpush.msra.mxu0 0.0
    %1908 = vmatpush.msra.mxu0 0.0
    %1909 = vmatpush.msra.mxu0 0.0
    %1910 = vmatpush.msra.mxu0 %v1551
    %1911 = vmatpush.msra.mxu0 %v1550
    %1912 = vmatpush.msra.mxu0 %v1549
    %1913 = vmatpush.msra.mxu0 %v1548
    %1914 = vmatmul.f32.gmra.mxu0 %v1896
    %v1915 = vpop.f32.mrf.mxu0
    %v1916 = vadd.f32 0.0, %v1915
    %1917 = vdwg.mxu0
    %v1918 = vadd.f32 %v1894, %v1916
    %v1919 = vld [vmem:[%s733] sm:$0xff]
    %1920 = vmatpush.msra.mxu0 0.0
    %1921 = vmatpush.msra.mxu0 0.0
    %1922 = vmatpush.msra.mxu0 0.0
    %1923 = vmatpush.msra.mxu0 0.0
    %1924 = vmatpush.msra.mxu0 0.0
    %1925 = vmatpush.msra.mxu0 0.0
    %1926 = vmatpush.msra.mxu0 0.0
    %1927 = vmatpush.msra.mxu0 0.0
    %1928 = vmatpush.msra.mxu0 0.0
    %1929 = vmatpush.msra.mxu0 0.0
    %1930 = vmatpush.msra.mxu0 0.0
    %1931 = vmatpush.msra.mxu0 0.0
    %1932 = vmatpush.msra.mxu0 %v1556
    %1933 = vmatpush.msra.mxu0 %v1555
    %1934 = vmatpush.msra.mxu0 %v1554
    %1935 = vmatpush.msra.mxu0 %v1553
    %1936 = vmatmul.f32.gmra.mxu0 %v1896
    %v1937 = vpop.f32.mrf.mxu0
    %v1938 = vadd.f32 0.0, %v1937
    %1939 = vdwg.mxu0
    %v1940 = vadd.f32 %v1919, %v1938
    %v1941 = vld [vmem:[%s756] sm:$0xff]
    %1942 = vmatpush.msra.mxu0 0.0
    %1943 = vmatpush.msra.mxu0 0.0
    %1944 = vmatpush.msra.mxu0 0.0
    %1945 = vmatpush.msra.mxu0 0.0
    %1946 = vmatpush.msra.mxu0 0.0
    %1947 = vmatpush.msra.mxu0 0.0
    %1948 = vmatpush.msra.mxu0 0.0
    %1949 = vmatpush.msra.mxu0 0.0
    %1950 = vmatpush.msra.mxu0 0.0
    %1951 = vmatpush.msra.mxu0 0.0
    %1952 = vmatpush.msra.mxu0 0.0
    %1953 = vmatpush.msra.mxu0 0.0
    %1954 = vmatpush.msra.mxu0 %v1561
    %1955 = vmatpush.msra.mxu0 %v1560
    %1956 = vmatpush.msra.mxu0 %v1559
    %1957 = vmatpush.msra.mxu0 %v1558
    %1958 = vmatmul.f32.gmra.mxu0 %v1896
    %v1959 = vpop.f32.mrf.mxu0
    %v1960 = vadd.f32 0.0, %v1959
    %1961 = vdwg.mxu0
    %v1962 = vadd.f32 %v1941, %v1960
    %v1963 = vld [vmem:[%s779] sm:$0xff]
    %1964 = vmatpush.msra.mxu0 0.0
    %1965 = vmatpush.msra.mxu0 0.0
    %1966 = vmatpush.msra.mxu0 0.0
    %1967 = vmatpush.msra.mxu0 0.0
    %1968 = vmatpush.msra.mxu0 0.0
    %1969 = vmatpush.msra.mxu0 0.0
    %1970 = vmatpush.msra.mxu0 0.0
    %1971 = vmatpush.msra.mxu0 0.0
    %1972 = vmatpush.msra.mxu0 0.0
    %1973 = vmatpush.msra.mxu0 0.0
    %1974 = vmatpush.msra.mxu0 0.0
    %1975 = vmatpush.msra.mxu0 0.0
    %1976 = vmatpush.msra.mxu0 %v1566
    %1977 = vmatpush.msra.mxu0 %v1565
    %1978 = vmatpush.msra.mxu0 %v1564
    %1979 = vmatpush.msra.mxu0 %v1563
    %1980 = vmatmul.f32.gmra.mxu0 %v1896
    %v1981 = vpop.f32.mrf.mxu0
    %v1982 = vadd.f32 0.0, %v1981
    %1983 = vdwg.mxu0
    %v1984 = vadd.f32 %v1963, %v1982
    %v1985 = vmul.f32 %v1918, 0.5
    %v1986 = vtanh.pop %v1985
    %v1987 = vmul.f32 %v1986, 0.5
    %v1988 = vadd.f32 %v1987, 0.5
    %v1989 = vmul.f32 %v1940, 0.5
    %v1990 = vtanh.pop %v1989
    %v1991 = vmul.f32 %v1990, 0.5
    %v1992 = vadd.f32 %v1991, 0.5
    %v1993 = vtanh.pop %v1962
    %v1994 = vmul.f32 %v1984, 0.5
    %v1995 = vtanh.pop %v1994
    %v1996 = vmul.f32 %v1995, 0.5
    %v1997 = vadd.f32 %v1996, 0.5
    %v1998 = vmul.f32 %v1992, %v1890
    %v1999 = vmul.f32 %v1988, %v1993
    %v2000 = vadd.f32 %v1998, %v1999
    %v2001 = vtanh.pop %v2000
    %v2002 = vmul.f32 %v1997, %v2001
    %2003 = vst.msk [vmem:[%s820] sm:$0xff] %vm168, %v2002
    %v2004 = vld [vmem:[%s822] sm:$0xff]
    %v2006 = vsel %vm168, %v2002, 0
    %2008 = vmatpush.msra.mxu0 0.0
    %2009 = vmatpush.msra.mxu0 0.0
    %2010 = vmatpush.msra.mxu0 0.0
    %2011 = vmatpush.msra.mxu0 0.0
    %2012 = vmatpush.msra.mxu0 0.0
    %2013 = vmatpush.msra.mxu0 0.0
    %2014 = vmatpush.msra.mxu0 0.0
    %2015 = vmatpush.msra.mxu0 0.0
    %2016 = vmatpush.msra.mxu0 0.0
    %2017 = vmatpush.msra.mxu0 0.0
    %2018 = vmatpush.msra.mxu0 0.0
    %2019 = vmatpush.msra.mxu0 0.0
    %2020 = vmatpush.msra.mxu0 %v1551
    %2021 = vmatpush.msra.mxu0 %v1550
    %2022 = vmatpush.msra.mxu0 %v1549
    %2023 = vmatpush.msra.mxu0 %v1548
    %2024 = vmatmul.f32.gmra.mxu0 %v2006
    %v2025 = vpop.f32.mrf.mxu0
    %v2026 = vadd.f32 0.0, %v2025
    %2027 = vdwg.mxu0
    %v2028 = vadd.f32 %v2004, %v2026
    %v2029 = vld [vmem:[%s848] sm:$0xff]
    %2030 = vmatpush.msra.mxu0 0.0
    %2031 = vmatpush.msra.mxu0 0.0
    %2032 = vmatpush.msra.mxu0 0.0
    %2033 = vmatpush.msra.mxu0 0.0
    %2034 = vmatpush.msra.mxu0 0.0
    %2035 = vmatpush.msra.mxu0 0.0
    %2036 = vmatpush.msra.mxu0 0.0
    %2037 = vmatpush.msra.mxu0 0.0
    %2038 = vmatpush.msra.mxu0 0.0
    %2039 = vmatpush.msra.mxu0 0.0
    %2040 = vmatpush.msra.mxu0 0.0
    %2041 = vmatpush.msra.mxu0 0.0
    %2042 = vmatpush.msra.mxu0 %v1556
    %2043 = vmatpush.msra.mxu0 %v1555
    %2044 = vmatpush.msra.mxu0 %v1554
    %2045 = vmatpush.msra.mxu0 %v1553
    %2046 = vmatmul.f32.gmra.mxu0 %v2006
    %v2047 = vpop.f32.mrf.mxu0
    %v2048 = vadd.f32 0.0, %v2047
    %2049 = vdwg.mxu0
    %v2050 = vadd.f32 %v2029, %v2048
    %v2051 = vld [vmem:[%s871] sm:$0xff]
    %2052 = vmatpush.msra.mxu0 0.0
    %2053 = vmatpush.msra.mxu0 0.0
    %2054 = vmatpush.msra.mxu0 0.0
    %2055 = vmatpush.msra.mxu0 0.0
    %2056 = vmatpush.msra.mxu0 0.0
    %2057 = vmatpush.msra.mxu0 0.0
    %2058 = vmatpush.msra.mxu0 0.0
    %2059 = vmatpush.msra.mxu0 0.0
    %2060 = vmatpush.msra.mxu0 0.0
    %2061 = vmatpush.msra.mxu0 0.0
    %2062 = vmatpush.msra.mxu0 0.0
    %2063 = vmatpush.msra.mxu0 0.0
    %2064 = vmatpush.msra.mxu0 %v1561
    %2065 = vmatpush.msra.mxu0 %v1560
    %2066 = vmatpush.msra.mxu0 %v1559
    %2067 = vmatpush.msra.mxu0 %v1558
    %2068 = vmatmul.f32.gmra.mxu0 %v2006
    %v2069 = vpop.f32.mrf.mxu0
    %v2070 = vadd.f32 0.0, %v2069
    %2071 = vdwg.mxu0
    %v2072 = vadd.f32 %v2051, %v2070
    %v2073 = vld [vmem:[%s894] sm:$0xff]
    %2074 = vmatpush.msra.mxu0 0.0
    %2075 = vmatpush.msra.mxu0 0.0
    %2076 = vmatpush.msra.mxu0 0.0
    %2077 = vmatpush.msra.mxu0 0.0
    %2078 = vmatpush.msra.mxu0 0.0
    %2079 = vmatpush.msra.mxu0 0.0
    %2080 = vmatpush.msra.mxu0 0.0
    %2081 = vmatpush.msra.mxu0 0.0
    %2082 = vmatpush.msra.mxu0 0.0
    %2083 = vmatpush.msra.mxu0 0.0
    %2084 = vmatpush.msra.mxu0 0.0
    %2085 = vmatpush.msra.mxu0 0.0
    %2086 = vmatpush.msra.mxu0 %v1566
    %2087 = vmatpush.msra.mxu0 %v1565
    %2088 = vmatpush.msra.mxu0 %v1564
    %2089 = vmatpush.msra.mxu0 %v1563
    %2090 = vmatmul.f32.gmra.mxu0 %v2006
    %v2091 = vpop.f32.mrf.mxu0
    %v2092 = vadd.f32 0.0, %v2091
    %2093 = vdwg.mxu0
    %v2094 = vadd.f32 %v2073, %v2092
    %v2095 = vmul.f32 %v2028, 0.5
    %v2096 = vtanh.pop %v2095
    %v2097 = vmul.f32 %v2096, 0.5
    %v2098 = vadd.f32 %v2097, 0.5
    %v2099 = vmul.f32 %v2050, 0.5
    %v2100 = vtanh.pop %v2099
    %v2101 = vmul.f32 %v2100, 0.5
    %v2102 = vadd.f32 %v2101, 0.5
    %v2103 = vtanh.pop %v2072
    %v2104 = vmul.f32 %v2094, 0.5
    %v2105 = vtanh.pop %v2104
    %v2106 = vmul.f32 %v2105, 0.5
    %v2107 = vadd.f32 %v2106, 0.5
    %v2108 = vmul.f32 %v2102, %v2000
    %v2109 = vmul.f32 %v2098, %v2103
    %v2110 = vadd.f32 %v2108, %v2109
    %v2111 = vtanh.pop %v2110
    %v2112 = vmul.f32 %v2107, %v2111
    %2113 = vst.msk [vmem:[%s935] sm:$0xff] %vm168, %v2112
    %v2114 = vld [vmem:[%s937] sm:$0xff]
    %v2116 = vsel %vm168, %v2112, 0
    %2118 = vmatpush.msra.mxu0 0.0
    %2119 = vmatpush.msra.mxu0 0.0
    %2120 = vmatpush.msra.mxu0 0.0
    %2121 = vmatpush.msra.mxu0 0.0
    %2122 = vmatpush.msra.mxu0 0.0
    %2123 = vmatpush.msra.mxu0 0.0
    %2124 = vmatpush.msra.mxu0 0.0
    %2125 = vmatpush.msra.mxu0 0.0
    %2126 = vmatpush.msra.mxu0 0.0
    %2127 = vmatpush.msra.mxu0 0.0
    %2128 = vmatpush.msra.mxu0 0.0
    %2129 = vmatpush.msra.mxu0 0.0
    %2130 = vmatpush.msra.mxu0 %v1551
    %2131 = vmatpush.msra.mxu0 %v1550
    %2132 = vmatpush.msra.mxu0 %v1549
    %2133 = vmatpush.msra.mxu0 %v1548
    %2134 = vmatmul.f32.gmra.mxu0 %v2116
    %v2135 = vpop.f32.mrf.mxu0
    %v2136 = vadd.f32 0.0, %v2135
    %2137 = vdwg.mxu0
    %v2138 = vadd.f32 %v2114, %v2136
    %v2139 = vld [vmem:[%s963] sm:$0xff]
    %2140 = vmatpush.msra.mxu0 0.0
    %2141 = vmatpush.msra.mxu0 0.0
    %2142 = vmatpush.msra.mxu0 0.0
    %2143 = vmatpush.msra.mxu0 0.0
    %2144 = vmatpush.msra.mxu0 0.0
    %2145 = vmatpush.msra.mxu0 0.0
    %2146 = vmatpush.msra.mxu0 0.0
    %2147 = vmatpush.msra.mxu0 0.0
    %2148 = vmatpush.msra.mxu0 0.0
    %2149 = vmatpush.msra.mxu0 0.0
    %2150 = vmatpush.msra.mxu0 0.0
    %2151 = vmatpush.msra.mxu0 0.0
    %2152 = vmatpush.msra.mxu0 %v1556
    %2153 = vmatpush.msra.mxu0 %v1555
    %2154 = vmatpush.msra.mxu0 %v1554
    %2155 = vmatpush.msra.mxu0 %v1553
    %2156 = vmatmul.f32.gmra.mxu0 %v2116
    %v2157 = vpop.f32.mrf.mxu0
    %v2158 = vadd.f32 0.0, %v2157
    %2159 = vdwg.mxu0
    %v2160 = vadd.f32 %v2139, %v2158
    %v2161 = vld [vmem:[%s986] sm:$0xff]
    %2162 = vmatpush.msra.mxu0 0.0
    %2163 = vmatpush.msra.mxu0 0.0
    %2164 = vmatpush.msra.mxu0 0.0
    %2165 = vmatpush.msra.mxu0 0.0
    %2166 = vmatpush.msra.mxu0 0.0
    %2167 = vmatpush.msra.mxu0 0.0
    %2168 = vmatpush.msra.mxu0 0.0
    %2169 = vmatpush.msra.mxu0 0.0
    %2170 = vmatpush.msra.mxu0 0.0
    %2171 = vmatpush.msra.mxu0 0.0
    %2172 = vmatpush.msra.mxu0 0.0
    %2173 = vmatpush.msra.mxu0 0.0
    %2174 = vmatpush.msra.mxu0 %v1561
    %2175 = vmatpush.msra.mxu0 %v1560
    %2176 = vmatpush.msra.mxu0 %v1559
    %2177 = vmatpush.msra.mxu0 %v1558
    %2178 = vmatmul.f32.gmra.mxu0 %v2116
    %v2179 = vpop.f32.mrf.mxu0
    %v2180 = vadd.f32 0.0, %v2179
    %2181 = vdwg.mxu0
    %v2182 = vadd.f32 %v2161, %v2180
    %v2183 = vld [vmem:[%s1009] sm:$0xff]
    %2184 = vmatpush.msra.mxu0 0.0
    %2185 = vmatpush.msra.mxu0 0.0
    %2186 = vmatpush.msra.mxu0 0.0
    %2187 = vmatpush.msra.mxu0 0.0
    %2188 = vmatpush.msra.mxu0 0.0
    %2189 = vmatpush.msra.mxu0 0.0
    %2190 = vmatpush.msra.mxu0 0.0
    %2191 = vmatpush.msra.mxu0 0.0
    %2192 = vmatpush.msra.mxu0 0.0
    %2193 = vmatpush.msra.mxu0 0.0
    %2194 = vmatpush.msra.mxu0 0.0
    %2195 = vmatpush.msra.mxu0 0.0
    %2196 = vmatpush.msra.mxu0 %v1566
    %2197 = vmatpush.msra.mxu0 %v1565
    %2198 = vmatpush.msra.mxu0 %v1564
    %2199 = vmatpush.msra.mxu0 %v1563
    %2200 = vmatmul.f32.gmra.mxu0 %v2116
    %v2201 = vpop.f32.mrf.mxu0
    %v2202 = vadd.f32 0.0, %v2201
    %2203 = vdwg.mxu0
    %v2204 = vadd.f32 %v2183, %v2202
    %v2205 = vmul.f32 %v2138, 0.5
    %v2206 = vtanh.pop %v2205
    %v2207 = vmul.f32 %v2206, 0.5
    %v2208 = vadd.f32 %v2207, 0.5
    %v2209 = vmul.f32 %v2160, 0.5
    %v2210 = vtanh.pop %v2209
    %v2211 = vmul.f32 %v2210, 0.5
    %v2212 = vadd.f32 %v2211, 0.5
    %v2213 = vtanh.pop %v2182
    %v2214 = vmul.f32 %v2204, 0.5
    %v2215 = vtanh.pop %v2214
    %v2216 = vmul.f32 %v2215, 0.5
    %v2217 = vadd.f32 %v2216, 0.5
    %v2218 = vmul.f32 %v2212, %v2110
    %v2219 = vmul.f32 %v2208, %v2213
    %v2220 = vadd.f32 %v2218, %v2219
    %v2221 = vtanh.pop %v2220
    %v2222 = vmul.f32 %v2217, %v2221
    %2223 = vst.msk [vmem:[%s1050] sm:$0xff] %vm168, %v2222
    %v2224 = vld [vmem:[%s1052] sm:$0xff]
    %v2226 = vsel %vm168, %v2222, 0
    %2228 = vmatpush.msra.mxu0 0.0
    %2229 = vmatpush.msra.mxu0 0.0
    %2230 = vmatpush.msra.mxu0 0.0
    %2231 = vmatpush.msra.mxu0 0.0
    %2232 = vmatpush.msra.mxu0 0.0
    %2233 = vmatpush.msra.mxu0 0.0
    %2234 = vmatpush.msra.mxu0 0.0
    %2235 = vmatpush.msra.mxu0 0.0
    %2236 = vmatpush.msra.mxu0 0.0
    %2237 = vmatpush.msra.mxu0 0.0
    %2238 = vmatpush.msra.mxu0 0.0
    %2239 = vmatpush.msra.mxu0 0.0
    %2240 = vmatpush.msra.mxu0 %v1551
    %2241 = vmatpush.msra.mxu0 %v1550
    %2242 = vmatpush.msra.mxu0 %v1549
    %2243 = vmatpush.msra.mxu0 %v1548
    %2244 = vmatmul.f32.gmra.mxu0 %v2226
    %v2245 = vpop.f32.mrf.mxu0
    %v2246 = vadd.f32 0.0, %v2245
    %2247 = vdwg.mxu0
    %v2248 = vadd.f32 %v2224, %v2246
    %v2249 = vld [vmem:[%s1078] sm:$0xff]
    %2250 = vmatpush.msra.mxu0 0.0
    %2251 = vmatpush.msra.mxu0 0.0
    %2252 = vmatpush.msra.mxu0 0.0
    %2253 = vmatpush.msra.mxu0 0.0
    %2254 = vmatpush.msra.mxu0 0.0
    %2255 = vmatpush.msra.mxu0 0.0
    %2256 = vmatpush.msra.mxu0 0.0
    %2257 = vmatpush.msra.mxu0 0.0
    %2258 = vmatpush.msra.mxu0 0.0
    %2259 = vmatpush.msra.mxu0 0.0
    %2260 = vmatpush.msra.mxu0 0.0
    %2261 = vmatpush.msra.mxu0 0.0
    %2262 = vmatpush.msra.mxu0 %v1556
    %2263 = vmatpush.msra.mxu0 %v1555
    %2264 = vmatpush.msra.mxu0 %v1554
    %2265 = vmatpush.msra.mxu0 %v1553
    %2266 = vmatmul.f32.gmra.mxu0 %v2226
    %v2267 = vpop.f32.mrf.mxu0
    %v2268 = vadd.f32 0.0, %v2267
    %2269 = vdwg.mxu0
    %v2270 = vadd.f32 %v2249, %v2268
    %v2271 = vld [vmem:[%s1101] sm:$0xff]
    %2272 = vmatpush.msra.mxu0 0.0
    %2273 = vmatpush.msra.mxu0 0.0
    %2274 = vmatpush.msra.mxu0 0.0
    %2275 = vmatpush.msra.mxu0 0.0
    %2276 = vmatpush.msra.mxu0 0.0
    %2277 = vmatpush.msra.mxu0 0.0
    %2278 = vmatpush.msra.mxu0 0.0
    %2279 = vmatpush.msra.mxu0 0.0
    %2280 = vmatpush.msra.mxu0 0.0
    %2281 = vmatpush.msra.mxu0 0.0
    %2282 = vmatpush.msra.mxu0 0.0
    %2283 = vmatpush.msra.mxu0 0.0
    %2284 = vmatpush.msra.mxu0 %v1561
    %2285 = vmatpush.msra.mxu0 %v1560
    %2286 = vmatpush.msra.mxu0 %v1559
    %2287 = vmatpush.msra.mxu0 %v1558
    %2288 = vmatmul.f32.gmra.mxu0 %v2226
    %v2289 = vpop.f32.mrf.mxu0
    %v2290 = vadd.f32 0.0, %v2289
    %2291 = vdwg.mxu0
    %v2292 = vadd.f32 %v2271, %v2290
    %v2293 = vld [vmem:[%s1124] sm:$0xff]
    %2294 = vmatpush.msra.mxu0 0.0
    %2295 = vmatpush.msra.mxu0 0.0
    %2296 = vmatpush.msra.mxu0 0.0
    %2297 = vmatpush.msra.mxu0 0.0
    %2298 = vmatpush.msra.mxu0 0.0
    %2299 = vmatpush.msra.mxu0 0.0
    %2300 = vmatpush.msra.mxu0 0.0
    %2301 = vmatpush.msra.mxu0 0.0
    %2302 = vmatpush.msra.mxu0 0.0
    %2303 = vmatpush.msra.mxu0 0.0
    %2304 = vmatpush.msra.mxu0 0.0
    %2305 = vmatpush.msra.mxu0 0.0
    %2306 = vmatpush.msra.mxu0 %v1566
    %2307 = vmatpush.msra.mxu0 %v1565
    %2308 = vmatpush.msra.mxu0 %v1564
    %2309 = vmatpush.msra.mxu0 %v1563
    %2310 = vmatmul.f32.gmra.mxu0 %v2226
    %v2311 = vpop.f32.mrf.mxu0
    %v2312 = vadd.f32 0.0, %v2311
    %2313 = vdwg.mxu0
    %v2314 = vadd.f32 %v2293, %v2312
    %v2315 = vmul.f32 %v2248, 0.5
    %v2316 = vtanh.pop %v2315
    %v2317 = vmul.f32 %v2316, 0.5
    %v2318 = vadd.f32 %v2317, 0.5
    %v2319 = vmul.f32 %v2270, 0.5
    %v2320 = vtanh.pop %v2319
    %v2321 = vmul.f32 %v2320, 0.5
    %v2322 = vadd.f32 %v2321, 0.5
    %v2323 = vtanh.pop %v2292
    %v2324 = vmul.f32 %v2314, 0.5
    %v2325 = vtanh.pop %v2324
    %v2326 = vmul.f32 %v2325, 0.5
    %v2327 = vadd.f32 %v2326, 0.5
    %v2328 = vmul.f32 %v2322, %v2220
    %v2329 = vmul.f32 %v2318, %v2323
    %v2330 = vadd.f32 %v2328, %v2329
    %v2331 = vtanh.pop %v2330
    %v2332 = vmul.f32 %v2327, %v2331
    %2333 = vst.msk [vmem:[%s1165] sm:$0xff] %vm168, %v2332
    %v2334 = vld [vmem:[%s1167] sm:$0xff]
    %v2336 = vsel %vm168, %v2332, 0
    %2338 = vmatpush.msra.mxu0 0.0
    %2339 = vmatpush.msra.mxu0 0.0
    %2340 = vmatpush.msra.mxu0 0.0
    %2341 = vmatpush.msra.mxu0 0.0
    %2342 = vmatpush.msra.mxu0 0.0
    %2343 = vmatpush.msra.mxu0 0.0
    %2344 = vmatpush.msra.mxu0 0.0
    %2345 = vmatpush.msra.mxu0 0.0
    %2346 = vmatpush.msra.mxu0 0.0
    %2347 = vmatpush.msra.mxu0 0.0
    %2348 = vmatpush.msra.mxu0 0.0
    %2349 = vmatpush.msra.mxu0 0.0
    %2350 = vmatpush.msra.mxu0 %v1551
    %2351 = vmatpush.msra.mxu0 %v1550
    %2352 = vmatpush.msra.mxu0 %v1549
    %2353 = vmatpush.msra.mxu0 %v1548
    %2354 = vmatmul.f32.gmra.mxu0 %v2336
    %v2355 = vpop.f32.mrf.mxu0
    %v2356 = vadd.f32 0.0, %v2355
    %2357 = vdwg.mxu0
    %v2358 = vadd.f32 %v2334, %v2356
    %v2359 = vld [vmem:[%s1193] sm:$0xff]
    %2360 = vmatpush.msra.mxu0 0.0
    %2361 = vmatpush.msra.mxu0 0.0
    %2362 = vmatpush.msra.mxu0 0.0
    %2363 = vmatpush.msra.mxu0 0.0
    %2364 = vmatpush.msra.mxu0 0.0
    %2365 = vmatpush.msra.mxu0 0.0
    %2366 = vmatpush.msra.mxu0 0.0
    %2367 = vmatpush.msra.mxu0 0.0
    %2368 = vmatpush.msra.mxu0 0.0
    %2369 = vmatpush.msra.mxu0 0.0
    %2370 = vmatpush.msra.mxu0 0.0
    %2371 = vmatpush.msra.mxu0 0.0
    %2372 = vmatpush.msra.mxu0 %v1556
    %2373 = vmatpush.msra.mxu0 %v1555
    %2374 = vmatpush.msra.mxu0 %v1554
    %2375 = vmatpush.msra.mxu0 %v1553
    %2376 = vmatmul.f32.gmra.mxu0 %v2336
    %v2377 = vpop.f32.mrf.mxu0
    %v2378 = vadd.f32 0.0, %v2377
    %2379 = vdwg.mxu0
    %v2380 = vadd.f32 %v2359, %v2378
    %v2381 = vld [vmem:[%s1216] sm:$0xff]
    %2382 = vmatpush.msra.mxu0 0.0
    %2383 = vmatpush.msra.mxu0 0.0
    %2384 = vmatpush.msra.mxu0 0.0
    %2385 = vmatpush.msra.mxu0 0.0
    %2386 = vmatpush.msra.mxu0 0.0
    %2387 = vmatpush.msra.mxu0 0.0
    %2388 = vmatpush.msra.mxu0 0.0
    %2389 = vmatpush.msra.mxu0 0.0
    %2390 = vmatpush.msra.mxu0 0.0
    %2391 = vmatpush.msra.mxu0 0.0
    %2392 = vmatpush.msra.mxu0 0.0
    %2393 = vmatpush.msra.mxu0 0.0
    %2394 = vmatpush.msra.mxu0 %v1561
    %2395 = vmatpush.msra.mxu0 %v1560
    %2396 = vmatpush.msra.mxu0 %v1559
    %2397 = vmatpush.msra.mxu0 %v1558
    %2398 = vmatmul.f32.gmra.mxu0 %v2336
    %v2399 = vpop.f32.mrf.mxu0
    %v2400 = vadd.f32 0.0, %v2399
    %2401 = vdwg.mxu0
    %v2402 = vadd.f32 %v2381, %v2400
    %v2403 = vld [vmem:[%s1239] sm:$0xff]
    %2404 = vmatpush.msra.mxu0 0.0
    %2405 = vmatpush.msra.mxu0 0.0
    %2406 = vmatpush.msra.mxu0 0.0
    %2407 = vmatpush.msra.mxu0 0.0
    %2408 = vmatpush.msra.mxu0 0.0
    %2409 = vmatpush.msra.mxu0 0.0
    %2410 = vmatpush.msra.mxu0 0.0
    %2411 = vmatpush.msra.mxu0 0.0
    %2412 = vmatpush.msra.mxu0 0.0
    %2413 = vmatpush.msra.mxu0 0.0
    %2414 = vmatpush.msra.mxu0 0.0
    %2415 = vmatpush.msra.mxu0 0.0
    %2416 = vmatpush.msra.mxu0 %v1566
    %2417 = vmatpush.msra.mxu0 %v1565
    %2418 = vmatpush.msra.mxu0 %v1564
    %2419 = vmatpush.msra.mxu0 %v1563
    %2420 = vmatmul.f32.gmra.mxu0 %v2336
    %v2421 = vpop.f32.mrf.mxu0
    %v2422 = vadd.f32 0.0, %v2421
    %2423 = vdwg.mxu0
    %v2424 = vadd.f32 %v2403, %v2422
    %v2425 = vmul.f32 %v2358, 0.5
    %v2426 = vtanh.pop %v2425
    %v2427 = vmul.f32 %v2426, 0.5
    %v2428 = vadd.f32 %v2427, 0.5
    %v2429 = vmul.f32 %v2380, 0.5
    %v2430 = vtanh.pop %v2429
    %v2431 = vmul.f32 %v2430, 0.5
    %v2432 = vadd.f32 %v2431, 0.5
    %v2433 = vtanh.pop %v2402
    %v2434 = vmul.f32 %v2424, 0.5
    %v2435 = vtanh.pop %v2434
    %v2436 = vmul.f32 %v2435, 0.5
    %v2437 = vadd.f32 %v2436, 0.5
    %v2438 = vmul.f32 %v2432, %v2330
    %v2439 = vmul.f32 %v2428, %v2433
    %v2440 = vadd.f32 %v2438, %v2439
    %v2441 = vtanh.pop %v2440
    %v2442 = vmul.f32 %v2437, %v2441
    %2443 = vst.msk [vmem:[%s1280] sm:$0xff] %vm168, %v2442
    %v2444 = vld [vmem:[#allocation2] sm:$0xff]
    %v2445 = vld [vmem:[#allocation2 + $0x8] sm:$0xff]
    %v2446 = vld [vmem:[#allocation2 + $0x10] sm:$0xff]
    %v2447 = vld [vmem:[#allocation2 + $0x18] sm:$0xff]
    %v2448 = vld [vmem:[#allocation2 + $0x20] sm:$0xff]
    %v2449 = vld [vmem:[#allocation2 + $0x28] sm:$0xff]
    %v2450 = vld [vmem:[#allocation2 + $0x30] sm:$0xff]
    %v2451 = vld [vmem:[#allocation2 + $0x38] sm:$0xff]
    %v2452 = vmax.f32 %v2444, 0.0
    %v2453 = vmax.f32 %v2445, 0.0
    %v2454 = vmax.f32 %v2446, 0.0
    %v2455 = vmax.f32 %v2447, 0.0
    %v2456 = vmax.f32 %v2448, 0.0
    %v2457 = vmax.f32 %v2449, 0.0
    %v2458 = vmax.f32 %v2450, 0.0
    %v2459 = vmax.f32 %v2451, 0.0
    %v2460 = vld [vmem:[%s7] sm:$0xff]
    %v2461 = vld [vmem:[%s7 + $0x8] sm:$0xff]
    %v2462 = vld [vmem:[%s7 + $0x10] sm:$0xff]
    %v2463 = vld [vmem:[%s7 + $0x18] sm:$0xff]
    %v2464 = vld [vmem:[%s8] sm:$0x1]
    %v2466 = vperm.slane %v2464, 0
    %v2469 = vsel %vm168, %v2452, 0
    %v2472 = vsel %vm168, %v2453, 0
    %v2475 = vsel %vm168, %v2454, 0
    %v2478 = vsel %vm168, %v2455, 0
    %v2481 = vsel %vm168, %v2456, 0
    %v2484 = vsel %vm168, %v2457, 0
    %v2487 = vsel %vm168, %v2458, 0
    %v2490 = vsel %vm168, %v2459, 0
    %2492 = vmatpush.msra.mxu0 0.0
    %2493 = vmatpush.msra.mxu0 0.0
    %2494 = vmatpush.msra.mxu0 0.0
    %2495 = vmatpush.msra.mxu0 0.0
    %2496 = vmatpush.msra.mxu0 0.0
    %2497 = vmatpush.msra.mxu0 0.0
    %2498 = vmatpush.msra.mxu0 0.0
    %2499 = vmatpush.msra.mxu0 0.0
    %2500 = vmatpush.msra.mxu0 0.0
    %2501 = vmatpush.msra.mxu0 0.0
    %2502 = vmatpush.msra.mxu0 0.0
    %2503 = vmatpush.msra.mxu0 0.0
    %2504 = vmatpush.msra.mxu0 %v2463
    %2505 = vmatpush.msra.mxu0 %v2462
    %2506 = vmatpush.msra.mxu0 %v2461
    %2507 = vmatpush.msra.mxu0 %v2460
    %2508 = vmatmul.f32.gmra.mxu0 %v2469
    %v2509 = vpop.f32.mrf.mxu0
    %v2510 = vadd.f32 %v2466, %v2509
    %2511 = vmatmul.f32.gmra.mxu0 %v2472
    %v2512 = vpop.f32.mrf.mxu0
    %v2513 = vadd.f32 %v2466, %v2512
    %2514 = vmatmul.f32.gmra.mxu0 %v2475
    %v2515 = vpop.f32.mrf.mxu0
    %v2516 = vadd.f32 %v2466, %v2515
    %2517 = vmatmul.f32.gmra.mxu0 %v2478
    %v2518 = vpop.f32.mrf.mxu0
    %v2519 = vadd.f32 %v2466, %v2518
    %2520 = vmatmul.f32.gmra.mxu0 %v2481
    %v2521 = vpop.f32.mrf.mxu0
    %v2522 = vadd.f32 %v2466, %v2521
    %2523 = vmatmul.f32.gmra.mxu0 %v2484
    %v2524 = vpop.f32.mrf.mxu0
    %v2525 = vadd.f32 %v2466, %v2524
    %2526 = vmatmul.f32.gmra.mxu0 %v2487
    %v2527 = vpop.f32.mrf.mxu0
    %v2528 = vadd.f32 %v2466, %v2527
    %2529 = vmatmul.f32.gmra.mxu0 %v2490
    %v2530 = vpop.f32.mrf.mxu0
    %v2531 = vadd.f32 %v2466, %v2530
    %2532 = vdwg.mxu0
    %v2533 = vmax.f32 %v2510, 0.0
    %v2534 = vmax.f32 %v2513, 0.0
    %v2535 = vmax.f32 %v2516, 0.0
    %v2536 = vmax.f32 %v2519, 0.0
    %v2537 = vmax.f32 %v2522, 0.0
    %v2538 = vmax.f32 %v2525, 0.0
    %v2539 = vmax.f32 %v2528, 0.0
    %v2540 = vmax.f32 %v2531, 0.0
    %v2541 = vld [vmem:[%s9] sm:$0x1]
    %v2542 = vld [vmem:[#allocation7] sm:$0x1]
    %2544 = vset.pattern.permute.xlu0 0
    %2545 = vperm.xlu0 %2544, %v2542
    %v2546 = vpop.permute.xlu0 %2545
    %v2548 = vperm.slane %v2546, 0
    %v2550 = vsel %vm102, %v2541, 0
    %v2553 = vsel %vm102, %v2533, 0
    %v2556 = vsel %vm102, %v2534, 0
    %v2559 = vsel %vm102, %v2535, 0
    %v2562 = vsel %vm102, %v2536, 0
    %v2565 = vsel %vm102, %v2537, 0
    %v2568 = vsel %vm102, %v2538, 0
    %v2571 = vsel %vm102, %v2539, 0
    %v2574 = vsel %vm102, %v2540, 0
    %2576 = vmatpush.xpose.msra.mxu0 0.0
    %2577 = vmatpush.xpose.msra.mxu0 0.0
    %2578 = vmatpush.xpose.msra.mxu0 0.0
    %2579 = vmatpush.xpose.msra.mxu0 0.0
    %2580 = vmatpush.xpose.msra.mxu0 0.0
    %2581 = vmatpush.xpose.msra.mxu0 0.0
    %2582 = vmatpush.xpose.msra.mxu0 0.0
    %2583 = vmatpush.xpose.msra.mxu0 0.0
    %2584 = vmatpush.xpose.msra.mxu0 %v2574
    %2585 = vmatpush.xpose.msra.mxu0 %v2571
    %2586 = vmatpush.xpose.msra.mxu0 %v2568
    %2587 = vmatpush.xpose.msra.mxu0 %v2565
    %2588 = vmatpush.xpose.msra.mxu0 %v2562
    %2589 = vmatpush.xpose.msra.mxu0 %v2559
    %2590 = vmatpush.xpose.msra.mxu0 %v2556
    %2591 = vmatpush.xpose.msra.mxu0 %v2553
    %2592 = vmatmul.f32.gmra.mxu0 %v2550
    %v2593 = vpop.f32.mrf.mxu0
    %v2594 = vadd.f32 %v2548, %v2593
    %2595 = vdwg.mxu0
    %vm2596 = vcmask 516096
    %2597 = vst.msk [vmem:[#allocation14] sm:$0x1] %vm2596, %v2594
    // Predicated region
    $region58: #{tpu_custom_call.1} parent=1 // pred_check
      _
    $region59: #{tpu_custom_call.1} parent=1 // pred_check_branch
      %2599 = sbr.rel (0) target = $region61
    $region60: #{tpu_custom_call.1} parent=1 // pred_region
      %2601 = vsyncadd [#allocation10], 0
      %s2603 = sshll.u32 [#allocation14], 4
      %s2604 = int_to_ptr.vmem [resolvable:$true] %s2603
      %s2605 = sshll.u32 %s11, 4
      %s2606 = int_to_ptr.hbm [resolvable:$true] %s2605
      %2608 = dma.vmem_to_hbm [thread:$0]  %s2604, 16, %s2606, [#allocation10]
    $region61: #{tpu_custom_call.1} parent=1 // pred_fallthru
      _
    // Predicated region
    $region62: #{tpu_custom_call.1} parent=1 // pred_check
      _
    $region63: #{tpu_custom_call.1} parent=1 // pred_check_branch
      %2610 = sbr.rel (0) target = $region65
    $region64: #{tpu_custom_call.1} parent=1 // pred_region
      %2612 = dma.done [#allocation10], 16
    $region65: #{tpu_custom_call.1} parent=1 // pred_fallthru
      _
    %2613 = vsyncpa [#allocation9], 1
    %2614 = vsyncpa [#allocation12], 1
    %2615 = vsyncpa [#allocation10], 1

</llo_original>
